<compile_context>
chip_gen: v7x
topology: tpu7x:2x2x1
jax: 0.10.0
libtpu: 0.0.40
codegen_flags: <defaults>
</compile_context>

<pallas_src>
import functools
import math

import jax
import jax.numpy as jnp
from jax.experimental import pallas as pl
from jax.experimental.pallas import tpu as pltpu

# ----------------------------- model config (scaled-down ViT) ----------------
BATCH = 2
IN_CHANS = 3
IMG_SIZE = 32
PATCH = 16
EMBED_DIM = 32
DEPTH = 2
NUM_HEADS = 4
HEAD_DIM = EMBED_DIM // NUM_HEADS
MLP_HIDDEN = 4 * EMBED_DIM
LN_EPS = 1e-6  # timm ViT uses LayerNorm(eps=1e-6)

NUM_PATCHES = (IMG_SIZE // PATCH) * (IMG_SIZE // PATCH)
SEQ = NUM_PATCHES + 1                       # +1 class token
SEQ_PAD = ((SEQ + 7) // 8) * 8              # pad rows to a full sublane tile
CPP = IN_CHANS * PATCH * PATCH              # flattened patch size


# ----------------------------- in-kernel helpers ------------------------------
def _mm(x, w):
    """MXU matmul: bf16 operands, f32 accumulation."""
    return jnp.dot(x.astype(jnp.bfloat16), w.astype(jnp.bfloat16),
                   preferred_element_type=jnp.float32)


def _layernorm(x, g, b, eps=LN_EPS):
    """Row-wise LayerNorm in f32 (biased variance, matches PyTorch)."""
    mean = jnp.mean(x, axis=-1, keepdims=True)
    xc = x - mean
    var = jnp.mean(xc * xc, axis=-1, keepdims=True)
    return xc * jax.lax.rsqrt(var + eps) * g + b


def _gelu(y):
    # TODO(synk): PyTorch nn.GELU is exact (erf); tanh approximation used since
    # erf lowering is not guaranteed in Mosaic (difference ~1e-3).
    c = jnp.float32(math.sqrt(2.0 / math.pi))
    return 0.5 * y * (1.0 + jnp.tanh(c * (y + 0.044715 * y * y * y)))


def _split_heads(qkv, base, imgs):
    """[imgs*SEQ_PAD, 3D] -> [imgs*NUM_HEADS, SEQ_PAD, HEAD_DIM] (bf16), aligned slices."""
    blocks = []
    for i in range(imgs):
        rows = qkv[i * SEQ_PAD:(i + 1) * SEQ_PAD, :]          # 8-sublane-aligned
        for n in range(NUM_HEADS):
            lo = base + n * HEAD_DIM
            blocks.append(rows[:, lo:lo + HEAD_DIM].astype(jnp.bfloat16))
    return jnp.stack(blocks)


def _merge_heads(o, imgs):
    """[imgs*NUM_HEADS, SEQ_PAD, HEAD_DIM] -> [imgs*SEQ_PAD, EMBED_DIM]."""
    per_img = [jnp.concatenate([o[i * NUM_HEADS + n] for n in range(NUM_HEADS)], axis=1)
               for i in range(imgs)]
    return jnp.concatenate(per_img, axis=0)


# ----------------------------- the fused kernel -------------------------------
def _vit_forward_kernel(imgs, patches_ref, patch_w_ref, pos_ref, ln_ref,
                        qkv_w_ref, proj_w_ref, fc1_w_ref, fc2_w_ref,
                        qkv_b_ref, proj_b_ref, fc1_b_ref, fc2_b_ref, out_ref):
    """One grid program == the full ViT forward for `imgs` images (all in VMEM)."""
    D = EMBED_DIM

    # --- patch embedding + cls token + pos embed, born as one aligned slab ----
    # cls row and pad rows are zero in `patches`, so the matmul + pos slab gives
    # exactly cat([cls, patch_tokens, 0-pad]) + pos with no concatenates.
    x = _mm(patches_ref[0], patch_w_ref[...]) + pos_ref[...]   # [imgs*SEQ_PAD, D] f32

    # Additive key mask: padded key columns get -1e9 (padded query rows are never read).
    kcol = jax.lax.broadcasted_iota(jnp.int32, (1, 1, SEQ_PAD), 2)
    key_mask = jnp.where(kcol < SEQ, 0.0, -1e9).astype(jnp.float32)

    for d in range(DEPTH):                                      # DEPTH=2 -> static unroll
        # --- multi-head self-attention (pre-LN); Q scale folded into weights ---
        h = _layernorm(x, ln_ref[4 * d:4 * d + 1, :], ln_ref[4 * d + 1:4 * d + 2, :])
        qkv = _mm(h, qkv_w_ref[d]) + qkv_b_ref[d]               # [imgs*SEQ_PAD, 3D]
        q = _split_heads(qkv, 0, imgs)                          # [imgs*H, S, HD] bf16
        k = _split_heads(qkv, D, imgs)
        v = _split_heads(qkv, 2 * D, imgs)
        s = jnp.einsum("hqd,hkd->hqk", q, k,
                       preferred_element_type=jnp.float32) + key_mask
        p = jnp.exp(s - jnp.max(s, axis=-1, keepdims=True))
        p = p * pl.reciprocal(jnp.sum(p, axis=-1, keepdims=True), approx=True)
        o = jnp.einsum("hqk,hkd->hqd", p.astype(jnp.bfloat16), v,
                       preferred_element_type=jnp.float32)      # [imgs*H, S, HD]
        attn = _merge_heads(o, imgs)                            # [imgs*SEQ_PAD, D]
        x = x + _mm(attn, proj_w_ref[d]) + proj_b_ref[d]        # fused residual add

        # --- MLP (pre-LN) -----------------------------------------------------
        h = _layernorm(x, ln_ref[4 * d + 2:4 * d + 3, :], ln_ref[4 * d + 3:4 * d + 4, :])
        h = _gelu(_mm(h, fc1_w_ref[d]) + fc1_b_ref[d])
        x = x + _mm(h, fc2_w_ref[d]) + fc2_b_ref[d]             # fused residual add

    # --- final LN on the class-token rows only (num_classes=0 -> head=Identity)
    cls = jnp.concatenate([x[i * SEQ_PAD:i * SEQ_PAD + 1, :] for i in range(imgs)], axis=0)
    out_ref[0] = _layernorm(cls, ln_ref[4 * DEPTH:4 * DEPTH + 1, :],
                            ln_ref[4 * DEPTH + 1:4 * DEPTH + 2, :])


# ----------------------------- parameter init ---------------------------------
def init_params(key):
    def normal(k, shape, std=0.02):
        return (std * jax.random.normal(k, shape)).astype(jnp.float32)

    keys = iter(jax.random.split(key, 3 + 4 * DEPTH))

    patch_w = normal(next(keys), (CPP, EMBED_DIM))
    patch_b = jnp.zeros((EMBED_DIM,), jnp.float32)
    cls_token = normal(next(keys), (1, EMBED_DIM))
    pos_embed = normal(next(keys), (SEQ, EMBED_DIM))

    # pos_full[SEQ_PAD, D]: row 0 = cls + pos[0]; rows 1..NP = pos[1:] + patch bias; rest 0.
    pos_full = jnp.zeros((SEQ_PAD, EMBED_DIM), jnp.float32)
    pos_full = pos_full.at[0].set(cls_token[0] + pos_embed[0])
    pos_full = pos_full.at[1:SEQ].set(pos_embed[1:] + patch_b[None, :])

    scale = 1.0 / math.sqrt(HEAD_DIM)
    qkv_w, proj_w, fc1_w, fc2_w = [], [], [], []
    qkv_b, proj_b, fc1_b, fc2_b = [], [], [], []
    ln_rows = []
    for _ in range(DEPTH):
        w_qkv = normal(next(keys), (EMBED_DIM, 3 * EMBED_DIM))
        w_qkv = w_qkv.at[:, :EMBED_DIM].multiply(scale)          # fold 1/sqrt(HD) into Q
        b_qkv = jnp.zeros((3 * EMBED_DIM,), jnp.float32).at[:EMBED_DIM].multiply(scale)
        qkv_w.append(w_qkv)
        qkv_b.append(b_qkv[None, :])
        proj_w.append(normal(next(keys), (EMBED_DIM, EMBED_DIM)))
        proj_b.append(jnp.zeros((1, EMBED_DIM), jnp.float32))
        fc1_w.append(normal(next(keys), (EMBED_DIM, MLP_HIDDEN)))
        fc1_b.append(jnp.zeros((1, MLP_HIDDEN), jnp.float32))
        fc2_w.append(normal(next(keys), (MLP_HIDDEN, EMBED_DIM)))
        fc2_b.append(jnp.zeros((1, EMBED_DIM), jnp.float32))
        ln_rows += [jnp.ones((EMBED_DIM,), jnp.float32),   # ln1 gamma
                    jnp.zeros((EMBED_DIM,), jnp.float32),  # ln1 beta
                    jnp.ones((EMBED_DIM,), jnp.float32),   # ln2 gamma
                    jnp.zeros((EMBED_DIM,), jnp.float32)]  # ln2 beta
    ln_rows += [jnp.ones((EMBED_DIM,), jnp.float32),       # final LN gamma
                jnp.zeros((EMBED_DIM,), jnp.float32)]      # final LN beta

    return {
        # weights stored bf16 (MXU-native, halves weight DMA bytes)
        "patch_w": patch_w.astype(jnp.bfloat16),
        "qkv_w": jnp.stack(qkv_w).astype(jnp.bfloat16),     # [DEPTH, D, 3D]
        "proj_w": jnp.stack(proj_w).astype(jnp.bfloat16),   # [DEPTH, D, D]
        "fc1_w": jnp.stack(fc1_w).astype(jnp.bfloat16),     # [DEPTH, D, MLP]
        "fc2_w": jnp.stack(fc2_w).astype(jnp.bfloat16),     # [DEPTH, MLP, D]
        # small f32 slabs
        "pos_full": pos_full,                                # [SEQ_PAD, D]
        "ln_all": jnp.stack(ln_rows),                        # [4*DEPTH+2, D]
        "qkv_b": jnp.stack(qkv_b),                           # [DEPTH, 1, 3D]
        "proj_b": jnp.stack(proj_b),                         # [DEPTH, 1, D]
        "fc1_b": jnp.stack(fc1_b),                           # [DEPTH, 1, MLP]
        "fc2_b": jnp.stack(fc2_b),                           # [DEPTH, 1, D]
    }


# ----------------------------- forward pass ------------------------------------
def _tensorcores_per_chip():
    """Best-effort TensorCore count per device (v7x: 2, v5e/v6e: 1)."""
    try:
        return max(1, int(getattr(jax.devices()[0], "num_cores", 1) or 1))
    except Exception:
        return 1


def _default_imgs_per_step(batch):
    cores = max(1, min(_tensorcores_per_chip(), batch))
    steps = cores if batch % cores == 0 else 1
    return batch // steps


def cached_vision_model_forward(x, params, imgs_per_step=None):
    """ViT forward (num_classes=0): returns class-token features [B, EMBED_DIM]."""
    B, C, H, W = x.shape
    nh, nw = H // PATCH, W // PATCH
    if imgs_per_step is None:
        imgs_per_step = _default_imgs_per_step(B)
    steps = B // imgs_per_step
    rows = imgs_per_step * SEQ_PAD

    # Patch extraction == Conv2d(kernel=stride=PATCH) unrolled to a matmul input.
    # Row 0 (cls slot) and rows SEQ..SEQ_PAD-1 are zero, so cls/pad fold into the matmul.
    patches = (
        x.reshape(B, C, nh, PATCH, nw, PATCH)
        .transpose(0, 2, 4, 1, 3, 5)
        .reshape(B, NUM_PATCHES, CPP)
    )
    patches = jnp.pad(patches, ((0, 0), (1, SEQ_PAD - SEQ), (0, 0)))
    patches = patches.astype(jnp.bfloat16).reshape(steps, rows, CPP)

    pos_step = jnp.tile(params["pos_full"], (imgs_per_step, 1))          # [rows, D]

    out = pl.pallas_call(
        functools.partial(_vit_forward_kernel, imgs_per_step),
        out_shape=jax.ShapeDtypeStruct((steps, imgs_per_step, EMBED_DIM), jnp.float32),
        grid=(steps,),
        in_specs=[
            pl.BlockSpec((1, rows, CPP), lambda b: (b, 0, 0)),
            pl.BlockSpec((CPP, EMBED_DIM), lambda b: (0, 0)),
            pl.BlockSpec((rows, EMBED_DIM), lambda b: (0, 0)),
            pl.BlockSpec((4 * DEPTH + 2, EMBED_DIM), lambda b: (0, 0)),
            pl.BlockSpec((DEPTH, EMBED_DIM, 3 * EMBED_DIM), lambda b: (0, 0, 0)),
            pl.BlockSpec((DEPTH, EMBED_DIM, EMBED_DIM), lambda b: (0, 0, 0)),
            pl.BlockSpec((DEPTH, EMBED_DIM, MLP_HIDDEN), lambda b: (0, 0, 0)),
            pl.BlockSpec((DEPTH, MLP_HIDDEN, EMBED_DIM), lambda b: (0, 0, 0)),
            pl.BlockSpec((DEPTH, 1, 3 * EMBED_DIM), lambda b: (0, 0, 0)),
            pl.BlockSpec((DEPTH, 1, EMBED_DIM), lambda b: (0, 0, 0)),
            pl.BlockSpec((DEPTH, 1, MLP_HIDDEN), lambda b: (0, 0, 0)),
            pl.BlockSpec((DEPTH, 1, EMBED_DIM), lambda b: (0, 0, 0)),
        ],
        out_specs=pl.BlockSpec((1, imgs_per_step, EMBED_DIM), lambda b: (b, 0, 0)),
        compiler_params=pltpu.CompilerParams(dimension_semantics=("parallel",)),
    )(patches, params["patch_w"], pos_step, params["ln_all"],
      params["qkv_w"], params["proj_w"], params["fc1_w"], params["fc2_w"],
      params["qkv_b"], params["proj_b"], params["fc1_b"], params["fc2_b"])

    return out.reshape(B, EMBED_DIM)


# ----------------------------- main ---------------------------------------------
if __name__ == "__main__":
    key = jax.random.PRNGKey(0)
    key_x, key_p = jax.random.split(key)
    x = jax.random.normal(key_x, (BATCH, IN_CHANS, IMG_SIZE, IMG_SIZE), jnp.float32)
    params = init_params(key_p)

    fwd = jax.jit(functools.partial(cached_vision_model_forward,
                                    imgs_per_step=_default_imgs_per_step(BATCH)))
    out = jax.block_until_ready(fwd(x, params))

    assert out.shape == (BATCH, EMBED_DIM), out.shape
    assert bool(jnp.all(jnp.isfinite(out)))
    print("KERNEL_OK")
</pallas_src>

<mosaic_0001>
module attributes {stable_mosaic.version = 11 : i64} {
  func.func @_vit_forward_kernel(%arg0: i32, %arg1: memref<1x16x768xbf16, #tpu.memory_space<vmem>>, %arg2: memref<768x32xbf16, #tpu.memory_space<vmem>>, %arg3: memref<16x32xf32, #tpu.memory_space<vmem>>, %arg4: memref<10x32xf32, #tpu.memory_space<vmem>>, %arg5: memref<2x32x96xbf16, #tpu.memory_space<vmem>>, %arg6: memref<2x32x32xbf16, #tpu.memory_space<vmem>>, %arg7: memref<2x32x128xbf16, #tpu.memory_space<vmem>>, %arg8: memref<2x128x32xbf16, #tpu.memory_space<vmem>>, %arg9: memref<2x1x96xf32, #tpu.memory_space<vmem>>, %arg10: memref<2x1x32xf32, #tpu.memory_space<vmem>>, %arg11: memref<2x1x128xf32, #tpu.memory_space<vmem>>, %arg12: memref<2x1x32xf32, #tpu.memory_space<vmem>>, %arg13: memref<1x2x32xf32, #tpu.memory_space<vmem>>) attributes {dimension_semantics = [#tpu.dimension_semantics<parallel>], iteration_bounds = array<i64: 1>, scalar_prefetch = 0 : i64, scratch_operands = 0 : i64, tpu.core_type = #tpu.core_type<tc>, window_params = [{transform_indices = @transform_0, window_bounds = array<i64: 1, 16, 768>}, {pipeline_mode = #tpu.pipeline_mode<synchronous>, transform_indices = @transform_1, window_bounds = array<i64: 768, 32>}, {pipeline_mode = #tpu.pipeline_mode<synchronous>, transform_indices = @transform_2, window_bounds = array<i64: 16, 32>}, {pipeline_mode = #tpu.pipeline_mode<synchronous>, transform_indices = @transform_3, window_bounds = array<i64: 10, 32>}, {pipeline_mode = #tpu.pipeline_mode<synchronous>, transform_indices = @transform_4, window_bounds = array<i64: 2, 32, 96>}, {pipeline_mode = #tpu.pipeline_mode<synchronous>, transform_indices = @transform_5, window_bounds = array<i64: 2, 32, 32>}, {pipeline_mode = #tpu.pipeline_mode<synchronous>, transform_indices = @transform_6, window_bounds = array<i64: 2, 32, 128>}, {pipeline_mode = #tpu.pipeline_mode<synchronous>, transform_indices = @transform_7, window_bounds = array<i64: 2, 128, 32>}, {pipeline_mode = #tpu.pipeline_mode<synchronous>, transform_indices = @transform_8, window_bounds = array<i64: 2, 1, 96>}, {pipeline_mode = #tpu.pipeline_mode<synchronous>, transform_indices = @transform_9, window_bounds = array<i64: 2, 1, 32>}, {pipeline_mode = #tpu.pipeline_mode<synchronous>, transform_indices = @transform_10, window_bounds = array<i64: 2, 1, 128>}, {pipeline_mode = #tpu.pipeline_mode<synchronous>, transform_indices = @transform_11, window_bounds = array<i64: 2, 1, 32>}, {transform_indices = @transform_12, window_bounds = array<i64: 1, 2, 32>}]} {
    %c0 = arith.constant 0 : index
    %c0_0 = arith.constant 0 : index
    %c0_1 = arith.constant 0 : index
    %0 = vector.load %arg1[%c0, %c0_0, %c0_1] : memref<1x16x768xbf16, #tpu.memory_space<vmem>>, vector<1x16x768xbf16>
    %1 = vector.shape_cast %0 : vector<1x16x768xbf16> to vector<16x768xbf16>
    %c0_2 = arith.constant 0 : index
    %c0_3 = arith.constant 0 : index
    %2 = vector.load %arg2[%c0_2, %c0_3] : memref<768x32xbf16, #tpu.memory_space<vmem>>, vector<768x32xbf16>
    %cst = arith.constant dense<0.000000e+00> : vector<16x32xf32>
    %3 = tpu.matmul %1, %2, %cst {dimension_numbers = #tpu.dot_dimension_numbers<[1], [0], [0], [1], [0, 0, 1, 1], [], []>} : vector<16x768xbf16>, vector<768x32xbf16>, vector<16x32xf32> -> vector<16x32xf32>
    %c0_4 = arith.constant 0 : index
    %c0_5 = arith.constant 0 : index
    %4 = vector.load %arg3[%c0_4, %c0_5] : memref<16x32xf32, #tpu.memory_space<vmem>>, vector<16x32xf32>
    %5 = arith.addf %3, %4 : vector<16x32xf32>
    %6 = tpu.iota {dimensions = array<i32: 2>} : vector<1x1x8xi32>
    %c5_i32 = arith.constant 5 : i32
    %7 = vector.broadcast %c5_i32 : i32 to vector<1x1x8xi32>
    %8 = arith.cmpi slt, %6, %7 : vector<1x1x8xi32>
    %cst_6 = arith.constant 0.000000e+00 : f32
    %cst_7 = arith.constant -1.000000e+09 : f32
    %9 = vector.broadcast %cst_6 : f32 to vector<1x1x8xf32>
    %10 = vector.broadcast %cst_7 : f32 to vector<1x1x8xf32>
    %11 = arith.select %8, %9, %10 : vector<1x1x8xi1>, vector<1x1x8xf32>
    %c0_8 = arith.constant 0 : index
    %c0_9 = arith.constant 0 : index
    %12 = vector.load %arg4[%c0_8, %c0_9] : memref<10x32xf32, #tpu.memory_space<vmem>>, vector<1x32xf32>
    %c1 = arith.constant 1 : index
    %c0_10 = arith.constant 0 : index
    %13 = vector.load %arg4[%c1, %c0_10] : memref<10x32xf32, #tpu.memory_space<vmem>>, vector<1x32xf32>
    %cst_11 = arith.constant dense<0.000000e+00> : vector<16xf32>
    %14 = vector.multi_reduction <add>, %5, %cst_11 [1] : vector<16x32xf32> to vector<16xf32>
    %15 = vector.shape_cast %14 : vector<16xf32> to vector<16x1xf32>
    %cst_12 = arith.constant 3.200000e+01 : f32
    %16 = vector.broadcast %cst_12 : f32 to vector<16x1xf32>
    %17 = arith.divf %15, %16 : vector<16x1xf32>
    %18 = vector.broadcast %17 : vector<16x1xf32> to vector<16x32xf32>
    %19 = arith.subf %5, %18 : vector<16x32xf32>
    %20 = arith.mulf %19, %19 : vector<16x32xf32>
    %cst_13 = arith.constant dense<0.000000e+00> : vector<16xf32>
    %21 = vector.multi_reduction <add>, %20, %cst_13 [1] : vector<16x32xf32> to vector<16xf32>
    %22 = vector.shape_cast %21 : vector<16xf32> to vector<16x1xf32>
    %cst_14 = arith.constant 3.200000e+01 : f32
    %23 = vector.broadcast %cst_14 : f32 to vector<16x1xf32>
    %24 = arith.divf %22, %23 : vector<16x1xf32>
    %cst_15 = arith.constant 9.99999997E-7 : f32
    %25 = vector.broadcast %cst_15 : f32 to vector<16x1xf32>
    %26 = arith.addf %24, %25 : vector<16x1xf32>
    %27 = math.rsqrt %26 : vector<16x1xf32>
    %28 = vector.broadcast %27 : vector<16x1xf32> to vector<16x32xf32>
    %29 = arith.mulf %19, %28 : vector<16x32xf32>
    %30 = vector.broadcast %12 : vector<1x32xf32> to vector<16x32xf32>
    %31 = arith.mulf %29, %30 : vector<16x32xf32>
    %32 = vector.broadcast %13 : vector<1x32xf32> to vector<16x32xf32>
    %33 = arith.addf %31, %32 : vector<16x32xf32>
    %c0_16 = arith.constant 0 : index
    %c0_17 = arith.constant 0 : index
    %c0_18 = arith.constant 0 : index
    %34 = vector.load %arg5[%c0_16, %c0_17, %c0_18] : memref<2x32x96xbf16, #tpu.memory_space<vmem>>, vector<1x32x96xbf16>
    %35 = vector.shape_cast %34 : vector<1x32x96xbf16> to vector<32x96xbf16>
    %36 = arith.truncf %33 : vector<16x32xf32> to vector<16x32xbf16>
    %cst_19 = arith.constant dense<0.000000e+00> : vector<16x96xf32>
    %37 = tpu.matmul %36, %35, %cst_19 {dimension_numbers = #tpu.dot_dimension_numbers<[1], [0], [0], [1], [0, 0, 1, 1], [], []>} : vector<16x32xbf16>, vector<32x96xbf16>, vector<16x96xf32> -> vector<16x96xf32>
    %c0_20 = arith.constant 0 : index
    %c0_21 = arith.constant 0 : index
    %c0_22 = arith.constant 0 : index
    %38 = vector.load %arg9[%c0_20, %c0_21, %c0_22] : memref<2x1x96xf32, #tpu.memory_space<vmem>>, vector<1x1x96xf32>
    %39 = vector.shape_cast %38 : vector<1x1x96xf32> to vector<1x96xf32>
    %40 = vector.broadcast %39 : vector<1x96xf32> to vector<16x96xf32>
    %41 = arith.addf %37, %40 : vector<16x96xf32>
    %42 = vector.extract_strided_slice %41 {offsets = [0, 0], sizes = [8, 96], strides = [1, 1]} : vector<16x96xf32> to vector<8x96xf32>
    %43 = vector.extract_strided_slice %42 {offsets = [0, 0], sizes = [8, 8], strides = [1, 1]} : vector<8x96xf32> to vector<8x8xf32>
    %44 = arith.truncf %43 : vector<8x8xf32> to vector<8x8xbf16>
    %45 = vector.extract_strided_slice %42 {offsets = [0, 8], sizes = [8, 8], strides = [1, 1]} : vector<8x96xf32> to vector<8x8xf32>
    %46 = arith.truncf %45 : vector<8x8xf32> to vector<8x8xbf16>
    %47 = vector.extract_strided_slice %42 {offsets = [0, 16], sizes = [8, 8], strides = [1, 1]} : vector<8x96xf32> to vector<8x8xf32>
    %48 = arith.truncf %47 : vector<8x8xf32> to vector<8x8xbf16>
    %49 = vector.extract_strided_slice %42 {offsets = [0, 24], sizes = [8, 8], strides = [1, 1]} : vector<8x96xf32> to vector<8x8xf32>
    %50 = arith.truncf %49 : vector<8x8xf32> to vector<8x8xbf16>
    %51 = vector.extract_strided_slice %41 {offsets = [8, 0], sizes = [8, 96], strides = [1, 1]} : vector<16x96xf32> to vector<8x96xf32>
    %52 = vector.extract_strided_slice %51 {offsets = [0, 0], sizes = [8, 8], strides = [1, 1]} : vector<8x96xf32> to vector<8x8xf32>
    %53 = arith.truncf %52 : vector<8x8xf32> to vector<8x8xbf16>
    %54 = vector.extract_strided_slice %51 {offsets = [0, 8], sizes = [8, 8], strides = [1, 1]} : vector<8x96xf32> to vector<8x8xf32>
    %55 = arith.truncf %54 : vector<8x8xf32> to vector<8x8xbf16>
    %56 = vector.extract_strided_slice %51 {offsets = [0, 16], sizes = [8, 8], strides = [1, 1]} : vector<8x96xf32> to vector<8x8xf32>
    %57 = arith.truncf %56 : vector<8x8xf32> to vector<8x8xbf16>
    %58 = vector.extract_strided_slice %51 {offsets = [0, 24], sizes = [8, 8], strides = [1, 1]} : vector<8x96xf32> to vector<8x8xf32>
    %59 = arith.truncf %58 : vector<8x8xf32> to vector<8x8xbf16>
    %60 = vector.shape_cast %44 : vector<8x8xbf16> to vector<1x8x8xbf16>
    %61 = vector.shape_cast %46 : vector<8x8xbf16> to vector<1x8x8xbf16>
    %62 = vector.shape_cast %48 : vector<8x8xbf16> to vector<1x8x8xbf16>
    %63 = vector.shape_cast %50 : vector<8x8xbf16> to vector<1x8x8xbf16>
    %64 = vector.shape_cast %53 : vector<8x8xbf16> to vector<1x8x8xbf16>
    %65 = vector.shape_cast %55 : vector<8x8xbf16> to vector<1x8x8xbf16>
    %66 = vector.shape_cast %57 : vector<8x8xbf16> to vector<1x8x8xbf16>
    %67 = vector.shape_cast %59 : vector<8x8xbf16> to vector<1x8x8xbf16>
    %68 = tpu.concatenate %60, %61, %62, %63, %64, %65, %66, %67 in 0 : vector<1x8x8xbf16>, vector<1x8x8xbf16>, vector<1x8x8xbf16>, vector<1x8x8xbf16>, vector<1x8x8xbf16>, vector<1x8x8xbf16>, vector<1x8x8xbf16>, vector<1x8x8xbf16> -> vector<8x8x8xbf16>
    %69 = vector.extract_strided_slice %41 {offsets = [0, 0], sizes = [8, 96], strides = [1, 1]} : vector<16x96xf32> to vector<8x96xf32>
    %70 = vector.extract_strided_slice %69 {offsets = [0, 32], sizes = [8, 8], strides = [1, 1]} : vector<8x96xf32> to vector<8x8xf32>
    %71 = arith.truncf %70 : vector<8x8xf32> to vector<8x8xbf16>
    %72 = vector.extract_strided_slice %69 {offsets = [0, 40], sizes = [8, 8], strides = [1, 1]} : vector<8x96xf32> to vector<8x8xf32>
    %73 = arith.truncf %72 : vector<8x8xf32> to vector<8x8xbf16>
    %74 = vector.extract_strided_slice %69 {offsets = [0, 48], sizes = [8, 8], strides = [1, 1]} : vector<8x96xf32> to vector<8x8xf32>
    %75 = arith.truncf %74 : vector<8x8xf32> to vector<8x8xbf16>
    %76 = vector.extract_strided_slice %69 {offsets = [0, 56], sizes = [8, 8], strides = [1, 1]} : vector<8x96xf32> to vector<8x8xf32>
    %77 = arith.truncf %76 : vector<8x8xf32> to vector<8x8xbf16>
    %78 = vector.extract_strided_slice %41 {offsets = [8, 0], sizes = [8, 96], strides = [1, 1]} : vector<16x96xf32> to vector<8x96xf32>
    %79 = vector.extract_strided_slice %78 {offsets = [0, 32], sizes = [8, 8], strides = [1, 1]} : vector<8x96xf32> to vector<8x8xf32>
    %80 = arith.truncf %79 : vector<8x8xf32> to vector<8x8xbf16>
    %81 = vector.extract_strided_slice %78 {offsets = [0, 40], sizes = [8, 8], strides = [1, 1]} : vector<8x96xf32> to vector<8x8xf32>
    %82 = arith.truncf %81 : vector<8x8xf32> to vector<8x8xbf16>
    %83 = vector.extract_strided_slice %78 {offsets = [0, 48], sizes = [8, 8], strides = [1, 1]} : vector<8x96xf32> to vector<8x8xf32>
    %84 = arith.truncf %83 : vector<8x8xf32> to vector<8x8xbf16>
    %85 = vector.extract_strided_slice %78 {offsets = [0, 56], sizes = [8, 8], strides = [1, 1]} : vector<8x96xf32> to vector<8x8xf32>
    %86 = arith.truncf %85 : vector<8x8xf32> to vector<8x8xbf16>
    %87 = vector.shape_cast %71 : vector<8x8xbf16> to vector<1x8x8xbf16>
    %88 = vector.shape_cast %73 : vector<8x8xbf16> to vector<1x8x8xbf16>
    %89 = vector.shape_cast %75 : vector<8x8xbf16> to vector<1x8x8xbf16>
    %90 = vector.shape_cast %77 : vector<8x8xbf16> to vector<1x8x8xbf16>
    %91 = vector.shape_cast %80 : vector<8x8xbf16> to vector<1x8x8xbf16>
    %92 = vector.shape_cast %82 : vector<8x8xbf16> to vector<1x8x8xbf16>
    %93 = vector.shape_cast %84 : vector<8x8xbf16> to vector<1x8x8xbf16>
    %94 = vector.shape_cast %86 : vector<8x8xbf16> to vector<1x8x8xbf16>
    %95 = tpu.concatenate %87, %88, %89, %90, %91, %92, %93, %94 in 0 : vector<1x8x8xbf16>, vector<1x8x8xbf16>, vector<1x8x8xbf16>, vector<1x8x8xbf16>, vector<1x8x8xbf16>, vector<1x8x8xbf16>, vector<1x8x8xbf16>, vector<1x8x8xbf16> -> vector<8x8x8xbf16>
    %96 = vector.extract_strided_slice %41 {offsets = [0, 0], sizes = [8, 96], strides = [1, 1]} : vector<16x96xf32> to vector<8x96xf32>
    %97 = vector.extract_strided_slice %96 {offsets = [0, 64], sizes = [8, 8], strides = [1, 1]} : vector<8x96xf32> to vector<8x8xf32>
    %98 = arith.truncf %97 : vector<8x8xf32> to vector<8x8xbf16>
    %99 = vector.extract_strided_slice %96 {offsets = [0, 72], sizes = [8, 8], strides = [1, 1]} : vector<8x96xf32> to vector<8x8xf32>
    %100 = arith.truncf %99 : vector<8x8xf32> to vector<8x8xbf16>
    %101 = vector.extract_strided_slice %96 {offsets = [0, 80], sizes = [8, 8], strides = [1, 1]} : vector<8x96xf32> to vector<8x8xf32>
    %102 = arith.truncf %101 : vector<8x8xf32> to vector<8x8xbf16>
    %103 = vector.extract_strided_slice %96 {offsets = [0, 88], sizes = [8, 8], strides = [1, 1]} : vector<8x96xf32> to vector<8x8xf32>
    %104 = arith.truncf %103 : vector<8x8xf32> to vector<8x8xbf16>
    %105 = vector.extract_strided_slice %41 {offsets = [8, 0], sizes = [8, 96], strides = [1, 1]} : vector<16x96xf32> to vector<8x96xf32>
    %106 = vector.extract_strided_slice %105 {offsets = [0, 64], sizes = [8, 8], strides = [1, 1]} : vector<8x96xf32> to vector<8x8xf32>
    %107 = arith.truncf %106 : vector<8x8xf32> to vector<8x8xbf16>
    %108 = vector.extract_strided_slice %105 {offsets = [0, 72], sizes = [8, 8], strides = [1, 1]} : vector<8x96xf32> to vector<8x8xf32>
    %109 = arith.truncf %108 : vector<8x8xf32> to vector<8x8xbf16>
    %110 = vector.extract_strided_slice %105 {offsets = [0, 80], sizes = [8, 8], strides = [1, 1]} : vector<8x96xf32> to vector<8x8xf32>
    %111 = arith.truncf %110 : vector<8x8xf32> to vector<8x8xbf16>
    %112 = vector.extract_strided_slice %105 {offsets = [0, 88], sizes = [8, 8], strides = [1, 1]} : vector<8x96xf32> to vector<8x8xf32>
    %113 = arith.truncf %112 : vector<8x8xf32> to vector<8x8xbf16>
    %114 = vector.shape_cast %98 : vector<8x8xbf16> to vector<1x8x8xbf16>
    %115 = vector.shape_cast %100 : vector<8x8xbf16> to vector<1x8x8xbf16>
    %116 = vector.shape_cast %102 : vector<8x8xbf16> to vector<1x8x8xbf16>
    %117 = vector.shape_cast %104 : vector<8x8xbf16> to vector<1x8x8xbf16>
    %118 = vector.shape_cast %107 : vector<8x8xbf16> to vector<1x8x8xbf16>
    %119 = vector.shape_cast %109 : vector<8x8xbf16> to vector<1x8x8xbf16>
    %120 = vector.shape_cast %111 : vector<8x8xbf16> to vector<1x8x8xbf16>
    %121 = vector.shape_cast %113 : vector<8x8xbf16> to vector<1x8x8xbf16>
    %122 = tpu.concatenate %114, %115, %116, %117, %118, %119, %120, %121 in 0 : vector<1x8x8xbf16>, vector<1x8x8xbf16>, vector<1x8x8xbf16>, vector<1x8x8xbf16>, vector<1x8x8xbf16>, vector<1x8x8xbf16>, vector<1x8x8xbf16>, vector<1x8x8xbf16> -> vector<8x8x8xbf16>
    "tpu.trace_start"() <{level = 10 : i32, message = "hqd,hkd->hqk"}> : () -> ()
    %cst_23 = arith.constant dense<0.000000e+00> : vector<8x8x8xf32>
    %123 = tpu.matmul %68, %95, %cst_23 {dimension_numbers = #tpu.dot_dimension_numbers<[2], [2], [1], [1], [0, 0, 0, 1, 1, 1], [0], [0]>} : vector<8x8x8xbf16>, vector<8x8x8xbf16>, vector<8x8x8xf32> -> vector<8x8x8xf32>
    "tpu.trace_stop"() : () -> ()
    %124 = vector.broadcast %11 : vector<1x1x8xf32> to vector<8x8x8xf32>
    %125 = arith.addf %123, %124 : vector<8x8x8xf32>
    %cst_24 = arith.constant dense<0xFF800000> : vector<8x8xf32>
    %126 = vector.multi_reduction <maximumf>, %125, %cst_24 [2] : vector<8x8x8xf32> to vector<8x8xf32>
    %127 = vector.shape_cast %126 : vector<8x8xf32> to vector<8x8x1xf32>
    %128 = vector.broadcast %127 : vector<8x8x1xf32> to vector<8x8x8xf32>
    %129 = arith.subf %125, %128 : vector<8x8x8xf32>
    %130 = math.exp %129 : vector<8x8x8xf32>
    %cst_25 = arith.constant dense<0.000000e+00> : vector<8x8xf32>
    %131 = vector.multi_reduction <add>, %130, %cst_25 [2] : vector<8x8x8xf32> to vector<8x8xf32>
    %132 = vector.shape_cast %131 : vector<8x8xf32> to vector<8x8x1xf32>
    %133 = tpu.reciprocal %132 {approx = true} : vector<8x8x1xf32> -> vector<8x8x1xf32>
    %134 = vector.broadcast %133 : vector<8x8x1xf32> to vector<8x8x8xf32>
    %135 = arith.mulf %130, %134 : vector<8x8x8xf32>
    %136 = arith.truncf %135 : vector<8x8x8xf32> to vector<8x8x8xbf16>
    "tpu.trace_start"() <{level = 10 : i32, message = "hqk,hkd->hqd"}> : () -> ()
    %cst_26 = arith.constant dense<0.000000e+00> : vector<8x8x8xf32>
    %137 = tpu.matmul %136, %122, %cst_26 {dimension_numbers = #tpu.dot_dimension_numbers<[2], [1], [1], [2], [0, 0, 0, 1, 1, 2], [0], [0]>} : vector<8x8x8xbf16>, vector<8x8x8xbf16>, vector<8x8x8xf32> -> vector<8x8x8xf32>
    "tpu.trace_stop"() : () -> ()
    %138 = vector.extract_strided_slice %137 {offsets = [0, 0, 0], sizes = [1, 8, 8], strides = [1, 1, 1]} : vector<8x8x8xf32> to vector<1x8x8xf32>
    %139 = vector.shape_cast %138 : vector<1x8x8xf32> to vector<8x8xf32>
    %140 = vector.extract_strided_slice %137 {offsets = [1, 0, 0], sizes = [1, 8, 8], strides = [1, 1, 1]} : vector<8x8x8xf32> to vector<1x8x8xf32>
    %141 = vector.shape_cast %140 : vector<1x8x8xf32> to vector<8x8xf32>
    %142 = vector.extract_strided_slice %137 {offsets = [2, 0, 0], sizes = [1, 8, 8], strides = [1, 1, 1]} : vector<8x8x8xf32> to vector<1x8x8xf32>
    %143 = vector.shape_cast %142 : vector<1x8x8xf32> to vector<8x8xf32>
    %144 = vector.extract_strided_slice %137 {offsets = [3, 0, 0], sizes = [1, 8, 8], strides = [1, 1, 1]} : vector<8x8x8xf32> to vector<1x8x8xf32>
    %145 = vector.shape_cast %144 : vector<1x8x8xf32> to vector<8x8xf32>
    %146 = tpu.concatenate %139, %141, %143, %145 in 1 : vector<8x8xf32>, vector<8x8xf32>, vector<8x8xf32>, vector<8x8xf32> -> vector<8x32xf32>
    %147 = vector.extract_strided_slice %137 {offsets = [4, 0, 0], sizes = [1, 8, 8], strides = [1, 1, 1]} : vector<8x8x8xf32> to vector<1x8x8xf32>
    %148 = vector.shape_cast %147 : vector<1x8x8xf32> to vector<8x8xf32>
    %149 = vector.extract_strided_slice %137 {offsets = [5, 0, 0], sizes = [1, 8, 8], strides = [1, 1, 1]} : vector<8x8x8xf32> to vector<1x8x8xf32>
    %150 = vector.shape_cast %149 : vector<1x8x8xf32> to vector<8x8xf32>
    %151 = vector.extract_strided_slice %137 {offsets = [6, 0, 0], sizes = [1, 8, 8], strides = [1, 1, 1]} : vector<8x8x8xf32> to vector<1x8x8xf32>
    %152 = vector.shape_cast %151 : vector<1x8x8xf32> to vector<8x8xf32>
    %153 = vector.extract_strided_slice %137 {offsets = [7, 0, 0], sizes = [1, 8, 8], strides = [1, 1, 1]} : vector<8x8x8xf32> to vector<1x8x8xf32>
    %154 = vector.shape_cast %153 : vector<1x8x8xf32> to vector<8x8xf32>
    %155 = tpu.concatenate %148, %150, %152, %154 in 1 : vector<8x8xf32>, vector<8x8xf32>, vector<8x8xf32>, vector<8x8xf32> -> vector<8x32xf32>
    %156 = tpu.concatenate %146, %155 in 0 : vector<8x32xf32>, vector<8x32xf32> -> vector<16x32xf32>
    %c0_27 = arith.constant 0 : index
    %c0_28 = arith.constant 0 : index
    %c0_29 = arith.constant 0 : index
    %157 = vector.load %arg6[%c0_27, %c0_28, %c0_29] : memref<2x32x32xbf16, #tpu.memory_space<vmem>>, vector<1x32x32xbf16>
    %158 = vector.shape_cast %157 : vector<1x32x32xbf16> to vector<32x32xbf16>
    %159 = arith.truncf %156 : vector<16x32xf32> to vector<16x32xbf16>
    %cst_30 = arith.constant dense<0.000000e+00> : vector<16x32xf32>
    %160 = tpu.matmul %159, %158, %cst_30 {dimension_numbers = #tpu.dot_dimension_numbers<[1], [0], [0], [1], [0, 0, 1, 1], [], []>} : vector<16x32xbf16>, vector<32x32xbf16>, vector<16x32xf32> -> vector<16x32xf32>
    %161 = arith.addf %5, %160 : vector<16x32xf32>
    %c0_31 = arith.constant 0 : index
    %c0_32 = arith.constant 0 : index
    %c0_33 = arith.constant 0 : index
    %162 = vector.load %arg10[%c0_31, %c0_32, %c0_33] : memref<2x1x32xf32, #tpu.memory_space<vmem>>, vector<1x1x32xf32>
    %163 = vector.shape_cast %162 : vector<1x1x32xf32> to vector<1x32xf32>
    %164 = vector.broadcast %163 : vector<1x32xf32> to vector<16x32xf32>
    %165 = arith.addf %161, %164 : vector<16x32xf32>
    %c2 = arith.constant 2 : index
    %c0_34 = arith.constant 0 : index
    %166 = vector.load %arg4[%c2, %c0_34] : memref<10x32xf32, #tpu.memory_space<vmem>>, vector<1x32xf32>
    %c3 = arith.constant 3 : index
    %c0_35 = arith.constant 0 : index
    %167 = vector.load %arg4[%c3, %c0_35] : memref<10x32xf32, #tpu.memory_space<vmem>>, vector<1x32xf32>
    %cst_36 = arith.constant dense<0.000000e+00> : vector<16xf32>
    %168 = vector.multi_reduction <add>, %165, %cst_36 [1] : vector<16x32xf32> to vector<16xf32>
    %169 = vector.shape_cast %168 : vector<16xf32> to vector<16x1xf32>
    %cst_37 = arith.constant 3.200000e+01 : f32
    %170 = vector.broadcast %cst_37 : f32 to vector<16x1xf32>
    %171 = arith.divf %169, %170 : vector<16x1xf32>
    %172 = vector.broadcast %171 : vector<16x1xf32> to vector<16x32xf32>
    %173 = arith.subf %165, %172 : vector<16x32xf32>
    %174 = arith.mulf %173, %173 : vector<16x32xf32>
    %cst_38 = arith.constant dense<0.000000e+00> : vector<16xf32>
    %175 = vector.multi_reduction <add>, %174, %cst_38 [1] : vector<16x32xf32> to vector<16xf32>
    %176 = vector.shape_cast %175 : vector<16xf32> to vector<16x1xf32>
    %cst_39 = arith.constant 3.200000e+01 : f32
    %177 = vector.broadcast %cst_39 : f32 to vector<16x1xf32>
    %178 = arith.divf %176, %177 : vector<16x1xf32>
    %cst_40 = arith.constant 9.99999997E-7 : f32
    %179 = vector.broadcast %cst_40 : f32 to vector<16x1xf32>
    %180 = arith.addf %178, %179 : vector<16x1xf32>
    %181 = math.rsqrt %180 : vector<16x1xf32>
    %182 = vector.broadcast %181 : vector<16x1xf32> to vector<16x32xf32>
    %183 = arith.mulf %173, %182 : vector<16x32xf32>
    %184 = vector.broadcast %166 : vector<1x32xf32> to vector<16x32xf32>
    %185 = arith.mulf %183, %184 : vector<16x32xf32>
    %186 = vector.broadcast %167 : vector<1x32xf32> to vector<16x32xf32>
    %187 = arith.addf %185, %186 : vector<16x32xf32>
    %c0_41 = arith.constant 0 : index
    %c0_42 = arith.constant 0 : index
    %c0_43 = arith.constant 0 : index
    %188 = vector.load %arg7[%c0_41, %c0_42, %c0_43] : memref<2x32x128xbf16, #tpu.memory_space<vmem>>, vector<1x32x128xbf16>
    %189 = vector.shape_cast %188 : vector<1x32x128xbf16> to vector<32x128xbf16>
    %190 = arith.truncf %187 : vector<16x32xf32> to vector<16x32xbf16>
    %cst_44 = arith.constant dense<0.000000e+00> : vector<16x128xf32>
    %191 = tpu.matmul %190, %189, %cst_44 {dimension_numbers = #tpu.dot_dimension_numbers<[1], [0], [0], [1], [0, 0, 1, 1], [], []>} : vector<16x32xbf16>, vector<32x128xbf16>, vector<16x128xf32> -> vector<16x128xf32>
    %c0_45 = arith.constant 0 : index
    %c0_46 = arith.constant 0 : index
    %c0_47 = arith.constant 0 : index
    %192 = vector.load %arg11[%c0_45, %c0_46, %c0_47] : memref<2x1x128xf32, #tpu.memory_space<vmem>>, vector<1x1x128xf32>
    %193 = vector.shape_cast %192 : vector<1x1x128xf32> to vector<1x128xf32>
    %194 = vector.broadcast %193 : vector<1x128xf32> to vector<16x128xf32>
    %195 = arith.addf %191, %194 : vector<16x128xf32>
    %cst_48 = arith.constant 5.000000e-01 : f32
    %196 = vector.broadcast %cst_48 : f32 to vector<16x128xf32>
    %197 = arith.mulf %196, %195 : vector<16x128xf32>
    %cst_49 = arith.constant 4.471500e-02 : f32
    %198 = vector.broadcast %cst_49 : f32 to vector<16x128xf32>
    %199 = arith.mulf %198, %195 : vector<16x128xf32>
    %200 = arith.mulf %199, %195 : vector<16x128xf32>
    %201 = arith.mulf %200, %195 : vector<16x128xf32>
    %202 = arith.addf %195, %201 : vector<16x128xf32>
    %cst_50 = arith.constant 0.797884583 : f32
    %203 = vector.broadcast %cst_50 : f32 to vector<16x128xf32>
    %204 = arith.mulf %203, %202 : vector<16x128xf32>
    %205 = math.tanh %204 : vector<16x128xf32>
    %cst_51 = arith.constant 1.000000e+00 : f32
    %206 = vector.broadcast %cst_51 : f32 to vector<16x128xf32>
    %207 = arith.addf %206, %205 : vector<16x128xf32>
    %208 = arith.mulf %197, %207 : vector<16x128xf32>
    %c0_52 = arith.constant 0 : index
    %c0_53 = arith.constant 0 : index
    %c0_54 = arith.constant 0 : index
    %209 = vector.load %arg8[%c0_52, %c0_53, %c0_54] : memref<2x128x32xbf16, #tpu.memory_space<vmem>>, vector<1x128x32xbf16>
    %210 = vector.shape_cast %209 : vector<1x128x32xbf16> to vector<128x32xbf16>
    %211 = arith.truncf %208 : vector<16x128xf32> to vector<16x128xbf16>
    %cst_55 = arith.constant dense<0.000000e+00> : vector<16x32xf32>
    %212 = tpu.matmul %211, %210, %cst_55 {dimension_numbers = #tpu.dot_dimension_numbers<[1], [0], [0], [1], [0, 0, 1, 1], [], []>} : vector<16x128xbf16>, vector<128x32xbf16>, vector<16x32xf32> -> vector<16x32xf32>
    %213 = arith.addf %165, %212 : vector<16x32xf32>
    %c0_56 = arith.constant 0 : index
    %c0_57 = arith.constant 0 : index
    %c0_58 = arith.constant 0 : index
    %214 = vector.load %arg12[%c0_56, %c0_57, %c0_58] : memref<2x1x32xf32, #tpu.memory_space<vmem>>, vector<1x1x32xf32>
    %215 = vector.shape_cast %214 : vector<1x1x32xf32> to vector<1x32xf32>
    %216 = vector.broadcast %215 : vector<1x32xf32> to vector<16x32xf32>
    %217 = arith.addf %213, %216 : vector<16x32xf32>
    %c4 = arith.constant 4 : index
    %c0_59 = arith.constant 0 : index
    %218 = vector.load %arg4[%c4, %c0_59] : memref<10x32xf32, #tpu.memory_space<vmem>>, vector<1x32xf32>
    %c5 = arith.constant 5 : index
    %c0_60 = arith.constant 0 : index
    %219 = vector.load %arg4[%c5, %c0_60] : memref<10x32xf32, #tpu.memory_space<vmem>>, vector<1x32xf32>
    %cst_61 = arith.constant dense<0.000000e+00> : vector<16xf32>
    %220 = vector.multi_reduction <add>, %217, %cst_61 [1] : vector<16x32xf32> to vector<16xf32>
    %221 = vector.shape_cast %220 : vector<16xf32> to vector<16x1xf32>
    %cst_62 = arith.constant 3.200000e+01 : f32
    %222 = vector.broadcast %cst_62 : f32 to vector<16x1xf32>
    %223 = arith.divf %221, %222 : vector<16x1xf32>
    %224 = vector.broadcast %223 : vector<16x1xf32> to vector<16x32xf32>
    %225 = arith.subf %217, %224 : vector<16x32xf32>
    %226 = arith.mulf %225, %225 : vector<16x32xf32>
    %cst_63 = arith.constant dense<0.000000e+00> : vector<16xf32>
    %227 = vector.multi_reduction <add>, %226, %cst_63 [1] : vector<16x32xf32> to vector<16xf32>
    %228 = vector.shape_cast %227 : vector<16xf32> to vector<16x1xf32>
    %cst_64 = arith.constant 3.200000e+01 : f32
    %229 = vector.broadcast %cst_64 : f32 to vector<16x1xf32>
    %230 = arith.divf %228, %229 : vector<16x1xf32>
    %cst_65 = arith.constant 9.99999997E-7 : f32
    %231 = vector.broadcast %cst_65 : f32 to vector<16x1xf32>
    %232 = arith.addf %230, %231 : vector<16x1xf32>
    %233 = math.rsqrt %232 : vector<16x1xf32>
    %234 = vector.broadcast %233 : vector<16x1xf32> to vector<16x32xf32>
    %235 = arith.mulf %225, %234 : vector<16x32xf32>
    %236 = vector.broadcast %218 : vector<1x32xf32> to vector<16x32xf32>
    %237 = arith.mulf %235, %236 : vector<16x32xf32>
    %238 = vector.broadcast %219 : vector<1x32xf32> to vector<16x32xf32>
    %239 = arith.addf %237, %238 : vector<16x32xf32>
    %c1_66 = arith.constant 1 : index
    %c0_67 = arith.constant 0 : index
    %c0_68 = arith.constant 0 : index
    %240 = vector.load %arg5[%c1_66, %c0_67, %c0_68] : memref<2x32x96xbf16, #tpu.memory_space<vmem>>, vector<1x32x96xbf16>
    %241 = vector.shape_cast %240 : vector<1x32x96xbf16> to vector<32x96xbf16>
    %242 = arith.truncf %239 : vector<16x32xf32> to vector<16x32xbf16>
    %cst_69 = arith.constant dense<0.000000e+00> : vector<16x96xf32>
    %243 = tpu.matmul %242, %241, %cst_69 {dimension_numbers = #tpu.dot_dimension_numbers<[1], [0], [0], [1], [0, 0, 1, 1], [], []>} : vector<16x32xbf16>, vector<32x96xbf16>, vector<16x96xf32> -> vector<16x96xf32>
    %c1_70 = arith.constant 1 : index
    %c0_71 = arith.constant 0 : index
    %c0_72 = arith.constant 0 : index
    %244 = vector.load %arg9[%c1_70, %c0_71, %c0_72] : memref<2x1x96xf32, #tpu.memory_space<vmem>>, vector<1x1x96xf32>
    %245 = vector.shape_cast %244 : vector<1x1x96xf32> to vector<1x96xf32>
    %246 = vector.broadcast %245 : vector<1x96xf32> to vector<16x96xf32>
    %247 = arith.addf %243, %246 : vector<16x96xf32>
    %248 = vector.extract_strided_slice %247 {offsets = [0, 0], sizes = [8, 96], strides = [1, 1]} : vector<16x96xf32> to vector<8x96xf32>
    %249 = vector.extract_strided_slice %248 {offsets = [0, 0], sizes = [8, 8], strides = [1, 1]} : vector<8x96xf32> to vector<8x8xf32>
    %250 = arith.truncf %249 : vector<8x8xf32> to vector<8x8xbf16>
    %251 = vector.extract_strided_slice %248 {offsets = [0, 8], sizes = [8, 8], strides = [1, 1]} : vector<8x96xf32> to vector<8x8xf32>
    %252 = arith.truncf %251 : vector<8x8xf32> to vector<8x8xbf16>
    %253 = vector.extract_strided_slice %248 {offsets = [0, 16], sizes = [8, 8], strides = [1, 1]} : vector<8x96xf32> to vector<8x8xf32>
    %254 = arith.truncf %253 : vector<8x8xf32> to vector<8x8xbf16>
    %255 = vector.extract_strided_slice %248 {offsets = [0, 24], sizes = [8, 8], strides = [1, 1]} : vector<8x96xf32> to vector<8x8xf32>
    %256 = arith.truncf %255 : vector<8x8xf32> to vector<8x8xbf16>
    %257 = vector.extract_strided_slice %247 {offsets = [8, 0], sizes = [8, 96], strides = [1, 1]} : vector<16x96xf32> to vector<8x96xf32>
    %258 = vector.extract_strided_slice %257 {offsets = [0, 0], sizes = [8, 8], strides = [1, 1]} : vector<8x96xf32> to vector<8x8xf32>
    %259 = arith.truncf %258 : vector<8x8xf32> to vector<8x8xbf16>
    %260 = vector.extract_strided_slice %257 {offsets = [0, 8], sizes = [8, 8], strides = [1, 1]} : vector<8x96xf32> to vector<8x8xf32>
    %261 = arith.truncf %260 : vector<8x8xf32> to vector<8x8xbf16>
    %262 = vector.extract_strided_slice %257 {offsets = [0, 16], sizes = [8, 8], strides = [1, 1]} : vector<8x96xf32> to vector<8x8xf32>
    %263 = arith.truncf %262 : vector<8x8xf32> to vector<8x8xbf16>
    %264 = vector.extract_strided_slice %257 {offsets = [0, 24], sizes = [8, 8], strides = [1, 1]} : vector<8x96xf32> to vector<8x8xf32>
    %265 = arith.truncf %264 : vector<8x8xf32> to vector<8x8xbf16>
    %266 = vector.shape_cast %250 : vector<8x8xbf16> to vector<1x8x8xbf16>
    %267 = vector.shape_cast %252 : vector<8x8xbf16> to vector<1x8x8xbf16>
    %268 = vector.shape_cast %254 : vector<8x8xbf16> to vector<1x8x8xbf16>
    %269 = vector.shape_cast %256 : vector<8x8xbf16> to vector<1x8x8xbf16>
    %270 = vector.shape_cast %259 : vector<8x8xbf16> to vector<1x8x8xbf16>
    %271 = vector.shape_cast %261 : vector<8x8xbf16> to vector<1x8x8xbf16>
    %272 = vector.shape_cast %263 : vector<8x8xbf16> to vector<1x8x8xbf16>
    %273 = vector.shape_cast %265 : vector<8x8xbf16> to vector<1x8x8xbf16>
    %274 = tpu.concatenate %266, %267, %268, %269, %270, %271, %272, %273 in 0 : vector<1x8x8xbf16>, vector<1x8x8xbf16>, vector<1x8x8xbf16>, vector<1x8x8xbf16>, vector<1x8x8xbf16>, vector<1x8x8xbf16>, vector<1x8x8xbf16>, vector<1x8x8xbf16> -> vector<8x8x8xbf16>
    %275 = vector.extract_strided_slice %247 {offsets = [0, 0], sizes = [8, 96], strides = [1, 1]} : vector<16x96xf32> to vector<8x96xf32>
    %276 = vector.extract_strided_slice %275 {offsets = [0, 32], sizes = [8, 8], strides = [1, 1]} : vector<8x96xf32> to vector<8x8xf32>
    %277 = arith.truncf %276 : vector<8x8xf32> to vector<8x8xbf16>
    %278 = vector.extract_strided_slice %275 {offsets = [0, 40], sizes = [8, 8], strides = [1, 1]} : vector<8x96xf32> to vector<8x8xf32>
    %279 = arith.truncf %278 : vector<8x8xf32> to vector<8x8xbf16>
    %280 = vector.extract_strided_slice %275 {offsets = [0, 48], sizes = [8, 8], strides = [1, 1]} : vector<8x96xf32> to vector<8x8xf32>
    %281 = arith.truncf %280 : vector<8x8xf32> to vector<8x8xbf16>
    %282 = vector.extract_strided_slice %275 {offsets = [0, 56], sizes = [8, 8], strides = [1, 1]} : vector<8x96xf32> to vector<8x8xf32>
    %283 = arith.truncf %282 : vector<8x8xf32> to vector<8x8xbf16>
    %284 = vector.extract_strided_slice %247 {offsets = [8, 0], sizes = [8, 96], strides = [1, 1]} : vector<16x96xf32> to vector<8x96xf32>
    %285 = vector.extract_strided_slice %284 {offsets = [0, 32], sizes = [8, 8], strides = [1, 1]} : vector<8x96xf32> to vector<8x8xf32>
    %286 = arith.truncf %285 : vector<8x8xf32> to vector<8x8xbf16>
    %287 = vector.extract_strided_slice %284 {offsets = [0, 40], sizes = [8, 8], strides = [1, 1]} : vector<8x96xf32> to vector<8x8xf32>
    %288 = arith.truncf %287 : vector<8x8xf32> to vector<8x8xbf16>
    %289 = vector.extract_strided_slice %284 {offsets = [0, 48], sizes = [8, 8], strides = [1, 1]} : vector<8x96xf32> to vector<8x8xf32>
    %290 = arith.truncf %289 : vector<8x8xf32> to vector<8x8xbf16>
    %291 = vector.extract_strided_slice %284 {offsets = [0, 56], sizes = [8, 8], strides = [1, 1]} : vector<8x96xf32> to vector<8x8xf32>
    %292 = arith.truncf %291 : vector<8x8xf32> to vector<8x8xbf16>
    %293 = vector.shape_cast %277 : vector<8x8xbf16> to vector<1x8x8xbf16>
    %294 = vector.shape_cast %279 : vector<8x8xbf16> to vector<1x8x8xbf16>
    %295 = vector.shape_cast %281 : vector<8x8xbf16> to vector<1x8x8xbf16>
    %296 = vector.shape_cast %283 : vector<8x8xbf16> to vector<1x8x8xbf16>
    %297 = vector.shape_cast %286 : vector<8x8xbf16> to vector<1x8x8xbf16>
    %298 = vector.shape_cast %288 : vector<8x8xbf16> to vector<1x8x8xbf16>
    %299 = vector.shape_cast %290 : vector<8x8xbf16> to vector<1x8x8xbf16>
    %300 = vector.shape_cast %292 : vector<8x8xbf16> to vector<1x8x8xbf16>
    %301 = tpu.concatenate %293, %294, %295, %296, %297, %298, %299, %300 in 0 : vector<1x8x8xbf16>, vector<1x8x8xbf16>, vector<1x8x8xbf16>, vector<1x8x8xbf16>, vector<1x8x8xbf16>, vector<1x8x8xbf16>, vector<1x8x8xbf16>, vector<1x8x8xbf16> -> vector<8x8x8xbf16>
    %302 = vector.extract_strided_slice %247 {offsets = [0, 0], sizes = [8, 96], strides = [1, 1]} : vector<16x96xf32> to vector<8x96xf32>
    %303 = vector.extract_strided_slice %302 {offsets = [0, 64], sizes = [8, 8], strides = [1, 1]} : vector<8x96xf32> to vector<8x8xf32>
    %304 = arith.truncf %303 : vector<8x8xf32> to vector<8x8xbf16>
    %305 = vector.extract_strided_slice %302 {offsets = [0, 72], sizes = [8, 8], strides = [1, 1]} : vector<8x96xf32> to vector<8x8xf32>
    %306 = arith.truncf %305 : vector<8x8xf32> to vector<8x8xbf16>
    %307 = vector.extract_strided_slice %302 {offsets = [0, 80], sizes = [8, 8], strides = [1, 1]} : vector<8x96xf32> to vector<8x8xf32>
    %308 = arith.truncf %307 : vector<8x8xf32> to vector<8x8xbf16>
    %309 = vector.extract_strided_slice %302 {offsets = [0, 88], sizes = [8, 8], strides = [1, 1]} : vector<8x96xf32> to vector<8x8xf32>
    %310 = arith.truncf %309 : vector<8x8xf32> to vector<8x8xbf16>
    %311 = vector.extract_strided_slice %247 {offsets = [8, 0], sizes = [8, 96], strides = [1, 1]} : vector<16x96xf32> to vector<8x96xf32>
    %312 = vector.extract_strided_slice %311 {offsets = [0, 64], sizes = [8, 8], strides = [1, 1]} : vector<8x96xf32> to vector<8x8xf32>
    %313 = arith.truncf %312 : vector<8x8xf32> to vector<8x8xbf16>
    %314 = vector.extract_strided_slice %311 {offsets = [0, 72], sizes = [8, 8], strides = [1, 1]} : vector<8x96xf32> to vector<8x8xf32>
    %315 = arith.truncf %314 : vector<8x8xf32> to vector<8x8xbf16>
    %316 = vector.extract_strided_slice %311 {offsets = [0, 80], sizes = [8, 8], strides = [1, 1]} : vector<8x96xf32> to vector<8x8xf32>
    %317 = arith.truncf %316 : vector<8x8xf32> to vector<8x8xbf16>
    %318 = vector.extract_strided_slice %311 {offsets = [0, 88], sizes = [8, 8], strides = [1, 1]} : vector<8x96xf32> to vector<8x8xf32>
    %319 = arith.truncf %318 : vector<8x8xf32> to vector<8x8xbf16>
    %320 = vector.shape_cast %304 : vector<8x8xbf16> to vector<1x8x8xbf16>
    %321 = vector.shape_cast %306 : vector<8x8xbf16> to vector<1x8x8xbf16>
    %322 = vector.shape_cast %308 : vector<8x8xbf16> to vector<1x8x8xbf16>
    %323 = vector.shape_cast %310 : vector<8x8xbf16> to vector<1x8x8xbf16>
    %324 = vector.shape_cast %313 : vector<8x8xbf16> to vector<1x8x8xbf16>
    %325 = vector.shape_cast %315 : vector<8x8xbf16> to vector<1x8x8xbf16>
    %326 = vector.shape_cast %317 : vector<8x8xbf16> to vector<1x8x8xbf16>
    %327 = vector.shape_cast %319 : vector<8x8xbf16> to vector<1x8x8xbf16>
    %328 = tpu.concatenate %320, %321, %322, %323, %324, %325, %326, %327 in 0 : vector<1x8x8xbf16>, vector<1x8x8xbf16>, vector<1x8x8xbf16>, vector<1x8x8xbf16>, vector<1x8x8xbf16>, vector<1x8x8xbf16>, vector<1x8x8xbf16>, vector<1x8x8xbf16> -> vector<8x8x8xbf16>
    "tpu.trace_start"() <{level = 10 : i32, message = "hqd,hkd->hqk"}> : () -> ()
    %cst_73 = arith.constant dense<0.000000e+00> : vector<8x8x8xf32>
    %329 = tpu.matmul %274, %301, %cst_73 {dimension_numbers = #tpu.dot_dimension_numbers<[2], [2], [1], [1], [0, 0, 0, 1, 1, 1], [0], [0]>} : vector<8x8x8xbf16>, vector<8x8x8xbf16>, vector<8x8x8xf32> -> vector<8x8x8xf32>
    "tpu.trace_stop"() : () -> ()
    %330 = vector.broadcast %11 : vector<1x1x8xf32> to vector<8x8x8xf32>
    %331 = arith.addf %329, %330 : vector<8x8x8xf32>
    %cst_74 = arith.constant dense<0xFF800000> : vector<8x8xf32>
    %332 = vector.multi_reduction <maximumf>, %331, %cst_74 [2] : vector<8x8x8xf32> to vector<8x8xf32>
    %333 = vector.shape_cast %332 : vector<8x8xf32> to vector<8x8x1xf32>
    %334 = vector.broadcast %333 : vector<8x8x1xf32> to vector<8x8x8xf32>
    %335 = arith.subf %331, %334 : vector<8x8x8xf32>
    %336 = math.exp %335 : vector<8x8x8xf32>
    %cst_75 = arith.constant dense<0.000000e+00> : vector<8x8xf32>
    %337 = vector.multi_reduction <add>, %336, %cst_75 [2] : vector<8x8x8xf32> to vector<8x8xf32>
    %338 = vector.shape_cast %337 : vector<8x8xf32> to vector<8x8x1xf32>
    %339 = tpu.reciprocal %338 {approx = true} : vector<8x8x1xf32> -> vector<8x8x1xf32>
    %340 = vector.broadcast %339 : vector<8x8x1xf32> to vector<8x8x8xf32>
    %341 = arith.mulf %336, %340 : vector<8x8x8xf32>
    %342 = arith.truncf %341 : vector<8x8x8xf32> to vector<8x8x8xbf16>
    "tpu.trace_start"() <{level = 10 : i32, message = "hqk,hkd->hqd"}> : () -> ()
    %cst_76 = arith.constant dense<0.000000e+00> : vector<8x8x8xf32>
    %343 = tpu.matmul %342, %328, %cst_76 {dimension_numbers = #tpu.dot_dimension_numbers<[2], [1], [1], [2], [0, 0, 0, 1, 1, 2], [0], [0]>} : vector<8x8x8xbf16>, vector<8x8x8xbf16>, vector<8x8x8xf32> -> vector<8x8x8xf32>
    "tpu.trace_stop"() : () -> ()
    %344 = vector.extract_strided_slice %343 {offsets = [0, 0, 0], sizes = [1, 8, 8], strides = [1, 1, 1]} : vector<8x8x8xf32> to vector<1x8x8xf32>
    %345 = vector.shape_cast %344 : vector<1x8x8xf32> to vector<8x8xf32>
    %346 = vector.extract_strided_slice %343 {offsets = [1, 0, 0], sizes = [1, 8, 8], strides = [1, 1, 1]} : vector<8x8x8xf32> to vector<1x8x8xf32>
    %347 = vector.shape_cast %346 : vector<1x8x8xf32> to vector<8x8xf32>
    %348 = vector.extract_strided_slice %343 {offsets = [2, 0, 0], sizes = [1, 8, 8], strides = [1, 1, 1]} : vector<8x8x8xf32> to vector<1x8x8xf32>
    %349 = vector.shape_cast %348 : vector<1x8x8xf32> to vector<8x8xf32>
    %350 = vector.extract_strided_slice %343 {offsets = [3, 0, 0], sizes = [1, 8, 8], strides = [1, 1, 1]} : vector<8x8x8xf32> to vector<1x8x8xf32>
    %351 = vector.shape_cast %350 : vector<1x8x8xf32> to vector<8x8xf32>
    %352 = tpu.concatenate %345, %347, %349, %351 in 1 : vector<8x8xf32>, vector<8x8xf32>, vector<8x8xf32>, vector<8x8xf32> -> vector<8x32xf32>
    %353 = vector.extract_strided_slice %343 {offsets = [4, 0, 0], sizes = [1, 8, 8], strides = [1, 1, 1]} : vector<8x8x8xf32> to vector<1x8x8xf32>
    %354 = vector.shape_cast %353 : vector<1x8x8xf32> to vector<8x8xf32>
    %355 = vector.extract_strided_slice %343 {offsets = [5, 0, 0], sizes = [1, 8, 8], strides = [1, 1, 1]} : vector<8x8x8xf32> to vector<1x8x8xf32>
    %356 = vector.shape_cast %355 : vector<1x8x8xf32> to vector<8x8xf32>
    %357 = vector.extract_strided_slice %343 {offsets = [6, 0, 0], sizes = [1, 8, 8], strides = [1, 1, 1]} : vector<8x8x8xf32> to vector<1x8x8xf32>
    %358 = vector.shape_cast %357 : vector<1x8x8xf32> to vector<8x8xf32>
    %359 = vector.extract_strided_slice %343 {offsets = [7, 0, 0], sizes = [1, 8, 8], strides = [1, 1, 1]} : vector<8x8x8xf32> to vector<1x8x8xf32>
    %360 = vector.shape_cast %359 : vector<1x8x8xf32> to vector<8x8xf32>
    %361 = tpu.concatenate %354, %356, %358, %360 in 1 : vector<8x8xf32>, vector<8x8xf32>, vector<8x8xf32>, vector<8x8xf32> -> vector<8x32xf32>
    %362 = tpu.concatenate %352, %361 in 0 : vector<8x32xf32>, vector<8x32xf32> -> vector<16x32xf32>
    %c1_77 = arith.constant 1 : index
    %c0_78 = arith.constant 0 : index
    %c0_79 = arith.constant 0 : index
    %363 = vector.load %arg6[%c1_77, %c0_78, %c0_79] : memref<2x32x32xbf16, #tpu.memory_space<vmem>>, vector<1x32x32xbf16>
    %364 = vector.shape_cast %363 : vector<1x32x32xbf16> to vector<32x32xbf16>
    %365 = arith.truncf %362 : vector<16x32xf32> to vector<16x32xbf16>
    %cst_80 = arith.constant dense<0.000000e+00> : vector<16x32xf32>
    %366 = tpu.matmul %365, %364, %cst_80 {dimension_numbers = #tpu.dot_dimension_numbers<[1], [0], [0], [1], [0, 0, 1, 1], [], []>} : vector<16x32xbf16>, vector<32x32xbf16>, vector<16x32xf32> -> vector<16x32xf32>
    %367 = arith.addf %217, %366 : vector<16x32xf32>
    %c1_81 = arith.constant 1 : index
    %c0_82 = arith.constant 0 : index
    %c0_83 = arith.constant 0 : index
    %368 = vector.load %arg10[%c1_81, %c0_82, %c0_83] : memref<2x1x32xf32, #tpu.memory_space<vmem>>, vector<1x1x32xf32>
    %369 = vector.shape_cast %368 : vector<1x1x32xf32> to vector<1x32xf32>
    %370 = vector.broadcast %369 : vector<1x32xf32> to vector<16x32xf32>
    %371 = arith.addf %367, %370 : vector<16x32xf32>
    %c6 = arith.constant 6 : index
    %c0_84 = arith.constant 0 : index
    %372 = vector.load %arg4[%c6, %c0_84] : memref<10x32xf32, #tpu.memory_space<vmem>>, vector<1x32xf32>
    %c7 = arith.constant 7 : index
    %c0_85 = arith.constant 0 : index
    %373 = vector.load %arg4[%c7, %c0_85] : memref<10x32xf32, #tpu.memory_space<vmem>>, vector<1x32xf32>
    %cst_86 = arith.constant dense<0.000000e+00> : vector<16xf32>
    %374 = vector.multi_reduction <add>, %371, %cst_86 [1] : vector<16x32xf32> to vector<16xf32>
    %375 = vector.shape_cast %374 : vector<16xf32> to vector<16x1xf32>
    %cst_87 = arith.constant 3.200000e+01 : f32
    %376 = vector.broadcast %cst_87 : f32 to vector<16x1xf32>
    %377 = arith.divf %375, %376 : vector<16x1xf32>
    %378 = vector.broadcast %377 : vector<16x1xf32> to vector<16x32xf32>
    %379 = arith.subf %371, %378 : vector<16x32xf32>
    %380 = arith.mulf %379, %379 : vector<16x32xf32>
    %cst_88 = arith.constant dense<0.000000e+00> : vector<16xf32>
    %381 = vector.multi_reduction <add>, %380, %cst_88 [1] : vector<16x32xf32> to vector<16xf32>
    %382 = vector.shape_cast %381 : vector<16xf32> to vector<16x1xf32>
    %cst_89 = arith.constant 3.200000e+01 : f32
    %383 = vector.broadcast %cst_89 : f32 to vector<16x1xf32>
    %384 = arith.divf %382, %383 : vector<16x1xf32>
    %cst_90 = arith.constant 9.99999997E-7 : f32
    %385 = vector.broadcast %cst_90 : f32 to vector<16x1xf32>
    %386 = arith.addf %384, %385 : vector<16x1xf32>
    %387 = math.rsqrt %386 : vector<16x1xf32>
    %388 = vector.broadcast %387 : vector<16x1xf32> to vector<16x32xf32>
    %389 = arith.mulf %379, %388 : vector<16x32xf32>
    %390 = vector.broadcast %372 : vector<1x32xf32> to vector<16x32xf32>
    %391 = arith.mulf %389, %390 : vector<16x32xf32>
    %392 = vector.broadcast %373 : vector<1x32xf32> to vector<16x32xf32>
    %393 = arith.addf %391, %392 : vector<16x32xf32>
    %c1_91 = arith.constant 1 : index
    %c0_92 = arith.constant 0 : index
    %c0_93 = arith.constant 0 : index
    %394 = vector.load %arg7[%c1_91, %c0_92, %c0_93] : memref<2x32x128xbf16, #tpu.memory_space<vmem>>, vector<1x32x128xbf16>
    %395 = vector.shape_cast %394 : vector<1x32x128xbf16> to vector<32x128xbf16>
    %396 = arith.truncf %393 : vector<16x32xf32> to vector<16x32xbf16>
    %cst_94 = arith.constant dense<0.000000e+00> : vector<16x128xf32>
    %397 = tpu.matmul %396, %395, %cst_94 {dimension_numbers = #tpu.dot_dimension_numbers<[1], [0], [0], [1], [0, 0, 1, 1], [], []>} : vector<16x32xbf16>, vector<32x128xbf16>, vector<16x128xf32> -> vector<16x128xf32>
    %c1_95 = arith.constant 1 : index
    %c0_96 = arith.constant 0 : index
    %c0_97 = arith.constant 0 : index
    %398 = vector.load %arg11[%c1_95, %c0_96, %c0_97] : memref<2x1x128xf32, #tpu.memory_space<vmem>>, vector<1x1x128xf32>
    %399 = vector.shape_cast %398 : vector<1x1x128xf32> to vector<1x128xf32>
    %400 = vector.broadcast %399 : vector<1x128xf32> to vector<16x128xf32>
    %401 = arith.addf %397, %400 : vector<16x128xf32>
    %cst_98 = arith.constant 5.000000e-01 : f32
    %402 = vector.broadcast %cst_98 : f32 to vector<16x128xf32>
    %403 = arith.mulf %402, %401 : vector<16x128xf32>
    %cst_99 = arith.constant 4.471500e-02 : f32
    %404 = vector.broadcast %cst_99 : f32 to vector<16x128xf32>
    %405 = arith.mulf %404, %401 : vector<16x128xf32>
    %406 = arith.mulf %405, %401 : vector<16x128xf32>
    %407 = arith.mulf %406, %401 : vector<16x128xf32>
    %408 = arith.addf %401, %407 : vector<16x128xf32>
    %cst_100 = arith.constant 0.797884583 : f32
    %409 = vector.broadcast %cst_100 : f32 to vector<16x128xf32>
    %410 = arith.mulf %409, %408 : vector<16x128xf32>
    %411 = math.tanh %410 : vector<16x128xf32>
    %cst_101 = arith.constant 1.000000e+00 : f32
    %412 = vector.broadcast %cst_101 : f32 to vector<16x128xf32>
    %413 = arith.addf %412, %411 : vector<16x128xf32>
    %414 = arith.mulf %403, %413 : vector<16x128xf32>
    %c1_102 = arith.constant 1 : index
    %c0_103 = arith.constant 0 : index
    %c0_104 = arith.constant 0 : index
    %415 = vector.load %arg8[%c1_102, %c0_103, %c0_104] : memref<2x128x32xbf16, #tpu.memory_space<vmem>>, vector<1x128x32xbf16>
    %416 = vector.shape_cast %415 : vector<1x128x32xbf16> to vector<128x32xbf16>
    %417 = arith.truncf %414 : vector<16x128xf32> to vector<16x128xbf16>
    %cst_105 = arith.constant dense<0.000000e+00> : vector<16x32xf32>
    %418 = tpu.matmul %417, %416, %cst_105 {dimension_numbers = #tpu.dot_dimension_numbers<[1], [0], [0], [1], [0, 0, 1, 1], [], []>} : vector<16x128xbf16>, vector<128x32xbf16>, vector<16x32xf32> -> vector<16x32xf32>
    %419 = arith.addf %371, %418 : vector<16x32xf32>
    %c1_106 = arith.constant 1 : index
    %c0_107 = arith.constant 0 : index
    %c0_108 = arith.constant 0 : index
    %420 = vector.load %arg12[%c1_106, %c0_107, %c0_108] : memref<2x1x32xf32, #tpu.memory_space<vmem>>, vector<1x1x32xf32>
    %421 = vector.shape_cast %420 : vector<1x1x32xf32> to vector<1x32xf32>
    %422 = vector.broadcast %421 : vector<1x32xf32> to vector<16x32xf32>
    %423 = arith.addf %419, %422 : vector<16x32xf32>
    %424 = vector.extract_strided_slice %423 {offsets = [0, 0], sizes = [1, 32], strides = [1, 1]} : vector<16x32xf32> to vector<1x32xf32>
    %425 = vector.extract_strided_slice %423 {offsets = [8, 0], sizes = [1, 32], strides = [1, 1]} : vector<16x32xf32> to vector<1x32xf32>
    %426 = tpu.concatenate %424, %425 in 0 : vector<1x32xf32>, vector<1x32xf32> -> vector<2x32xf32>
    %c8 = arith.constant 8 : index
    %c0_109 = arith.constant 0 : index
    %427 = vector.load %arg4[%c8, %c0_109] : memref<10x32xf32, #tpu.memory_space<vmem>>, vector<1x32xf32>
    %c9 = arith.constant 9 : index
    %c0_110 = arith.constant 0 : index
    %428 = vector.load %arg4[%c9, %c0_110] : memref<10x32xf32, #tpu.memory_space<vmem>>, vector<1x32xf32>
    %cst_111 = arith.constant dense<0.000000e+00> : vector<2xf32>
    %429 = vector.multi_reduction <add>, %426, %cst_111 [1] : vector<2x32xf32> to vector<2xf32>
    %430 = vector.shape_cast %429 : vector<2xf32> to vector<2x1xf32>
    %cst_112 = arith.constant 3.200000e+01 : f32
    %431 = vector.broadcast %cst_112 : f32 to vector<2x1xf32>
    %432 = arith.divf %430, %431 : vector<2x1xf32>
    %433 = vector.broadcast %432 : vector<2x1xf32> to vector<2x32xf32>
    %434 = arith.subf %426, %433 : vector<2x32xf32>
    %435 = arith.mulf %434, %434 : vector<2x32xf32>
    %cst_113 = arith.constant dense<0.000000e+00> : vector<2xf32>
    %436 = vector.multi_reduction <add>, %435, %cst_113 [1] : vector<2x32xf32> to vector<2xf32>
    %437 = vector.shape_cast %436 : vector<2xf32> to vector<2x1xf32>
    %cst_114 = arith.constant 3.200000e+01 : f32
    %438 = vector.broadcast %cst_114 : f32 to vector<2x1xf32>
    %439 = arith.divf %437, %438 : vector<2x1xf32>
    %cst_115 = arith.constant 9.99999997E-7 : f32
    %440 = vector.broadcast %cst_115 : f32 to vector<2x1xf32>
    %441 = arith.addf %439, %440 : vector<2x1xf32>
    %442 = math.rsqrt %441 : vector<2x1xf32>
    %443 = vector.broadcast %442 : vector<2x1xf32> to vector<2x32xf32>
    %444 = arith.mulf %434, %443 : vector<2x32xf32>
    %445 = vector.broadcast %427 : vector<1x32xf32> to vector<2x32xf32>
    %446 = arith.mulf %444, %445 : vector<2x32xf32>
    %447 = vector.broadcast %428 : vector<1x32xf32> to vector<2x32xf32>
    %448 = arith.addf %446, %447 : vector<2x32xf32>
    %c0_116 = arith.constant 0 : index
    %c0_117 = arith.constant 0 : index
    %c0_118 = arith.constant 0 : index
    %449 = vector.load %arg13[%c0_116, %c0_117, %c0_118] : memref<1x2x32xf32, #tpu.memory_space<vmem>>, vector<1x2x32xf32>
    %450 = vector.shape_cast %449 : vector<1x2x32xf32> to vector<2x32xf32>
    %451 = vector.shape_cast %448 : vector<2x32xf32> to vector<1x2x32xf32>
    tpu.vector_store %arg13[%c0_116, %c0_117, %c0_118], %451 {strides = array<i32>} : memref<1x2x32xf32, #tpu.memory_space<vmem>>, vector<1x2x32xf32>,
    return
  }
  func.func @transform_0(%arg0: i32) -> (i32, i32, i32) {
    %c0_i32 = arith.constant 0 : i32
    %c0_i32_0 = arith.constant 0 : i32
    %c0_i32_1 = arith.constant 0 : i32
    return %arg0, %c0_i32, %c0_i32_0 : i32, i32, i32
  }
  func.func @transform_1(%arg0: i32) -> (i32, i32) {
    %c0_i32 = arith.constant 0 : i32
    %c0_i32_0 = arith.constant 0 : i32
    %c0_i32_1 = arith.constant 0 : i32
    return %c0_i32, %c0_i32_0 : i32, i32
  }
  func.func @transform_2(%arg0: i32) -> (i32, i32) {
    %c0_i32 = arith.constant 0 : i32
    %c0_i32_0 = arith.constant 0 : i32
    %c0_i32_1 = arith.constant 0 : i32
    return %c0_i32, %c0_i32_0 : i32, i32
  }
  func.func @transform_3(%arg0: i32) -> (i32, i32) {
    %c0_i32 = arith.constant 0 : i32
    %c0_i32_0 = arith.constant 0 : i32
    %c0_i32_1 = arith.constant 0 : i32
    return %c0_i32, %c0_i32_0 : i32, i32
  }
  func.func @transform_4(%arg0: i32) -> (i32, i32, i32) {
    %c0_i32 = arith.constant 0 : i32
    %c0_i32_0 = arith.constant 0 : i32
    %c0_i32_1 = arith.constant 0 : i32
    %c0_i32_2 = arith.constant 0 : i32
    return %c0_i32, %c0_i32_0, %c0_i32_1 : i32, i32, i32
  }
  func.func @transform_5(%arg0: i32) -> (i32, i32, i32) {
    %c0_i32 = arith.constant 0 : i32
    %c0_i32_0 = arith.constant 0 : i32
    %c0_i32_1 = arith.constant 0 : i32
    %c0_i32_2 = arith.constant 0 : i32
    return %c0_i32, %c0_i32_0, %c0_i32_1 : i32, i32, i32
  }
  func.func @transform_6(%arg0: i32) -> (i32, i32, i32) {
    %c0_i32 = arith.constant 0 : i32
    %c0_i32_0 = arith.constant 0 : i32
    %c0_i32_1 = arith.constant 0 : i32
    %c0_i32_2 = arith.constant 0 : i32
    return %c0_i32, %c0_i32_0, %c0_i32_1 : i32, i32, i32
  }
  func.func @transform_7(%arg0: i32) -> (i32, i32, i32) {
    %c0_i32 = arith.constant 0 : i32
    %c0_i32_0 = arith.constant 0 : i32
    %c0_i32_1 = arith.constant 0 : i32
    %c0_i32_2 = arith.constant 0 : i32
    return %c0_i32, %c0_i32_0, %c0_i32_1 : i32, i32, i32
  }
  func.func @transform_8(%arg0: i32) -> (i32, i32, i32) {
    %c0_i32 = arith.constant 0 : i32
    %c0_i32_0 = arith.constant 0 : i32
    %c0_i32_1 = arith.constant 0 : i32
    %c0_i32_2 = arith.constant 0 : i32
    return %c0_i32, %c0_i32_0, %c0_i32_1 : i32, i32, i32
  }
  func.func @transform_9(%arg0: i32) -> (i32, i32, i32) {
    %c0_i32 = arith.constant 0 : i32
    %c0_i32_0 = arith.constant 0 : i32
    %c0_i32_1 = arith.constant 0 : i32
    %c0_i32_2 = arith.constant 0 : i32
    return %c0_i32, %c0_i32_0, %c0_i32_1 : i32, i32, i32
  }
  func.func @transform_10(%arg0: i32) -> (i32, i32, i32) {
    %c0_i32 = arith.constant 0 : i32
    %c0_i32_0 = arith.constant 0 : i32
    %c0_i32_1 = arith.constant 0 : i32
    %c0_i32_2 = arith.constant 0 : i32
    return %c0_i32, %c0_i32_0, %c0_i32_1 : i32, i32, i32
  }
  func.func @transform_11(%arg0: i32) -> (i32, i32, i32) {
    %c0_i32 = arith.constant 0 : i32
    %c0_i32_0 = arith.constant 0 : i32
    %c0_i32_1 = arith.constant 0 : i32
    %c0_i32_2 = arith.constant 0 : i32
    return %c0_i32, %c0_i32_0, %c0_i32_1 : i32, i32, i32
  }
  func.func @transform_12(%arg0: i32) -> (i32, i32, i32) {
    %c0_i32 = arith.constant 0 : i32
    %c0_i32_0 = arith.constant 0 : i32
    %c0_i32_1 = arith.constant 0 : i32
    return %arg0, %c0_i32, %c0_i32_0 : i32, i32, i32
  }
}

</mosaic_0001>

<llo_original>
// kernel: cached_vision_model_forward.1
$region0: #{cached_vision_model_forward.1}
  #allocation0 [shape = 'u32[]', space=smem, size = 0x4, offset = 0x4, fixed_abs, tag = 'smem constant byte address 0x4 - core index']
  #allocation1 [shape = 'u32[144,128]{1,0:T(1,128)}', space=vmem, size = 0x12000, scoped, tag = 'internal scratch']
  %s0 = inlined_call_operand.vmem [shape: bf16[1,16,768], index: 0, kind: input, shape index: {}]
  %s1 = inlined_call_operand.vmem [shape: bf16[768,32], index: 1, kind: input, shape index: {}]
  %s2 = inlined_call_operand.vmem [shape: f32[16,32], index: 2, kind: input, shape index: {}]
  %s3 = inlined_call_operand.vmem [shape: f32[10,32], index: 3, kind: input, shape index: {}]
  %s4 = inlined_call_operand.vmem [shape: bf16[2,32,96], index: 4, kind: input, shape index: {}]
  %s5 = inlined_call_operand.vmem [shape: bf16[2,32,32], index: 5, kind: input, shape index: {}]
  %s6 = inlined_call_operand.vmem [shape: bf16[2,32,128], index: 6, kind: input, shape index: {}]
  %s7 = inlined_call_operand.vmem [shape: bf16[2,128,32], index: 7, kind: input, shape index: {}]
  %s8 = inlined_call_operand.vmem [shape: f32[2,1,96], index: 8, kind: input, shape index: {}]
  %s9 = inlined_call_operand.vmem [shape: f32[2,1,32], index: 9, kind: input, shape index: {}]
  %s10 = inlined_call_operand.vmem [shape: f32[2,1,128], index: 10, kind: input, shape index: {}]
  %s11 = inlined_call_operand.vmem [shape: f32[2,1,32], index: 11, kind: input, shape index: {}]
  %s12 = inlined_call_operand.hbm [shape: f32[1,2,32], index: 12, kind: output, shape index: {}]
  %s13 = sld [smem:[#allocation0]]
  $region58: #{cached_vision_model_forward.1} parent=0
    _
  %s15 = ssub.s32 1, %s13
  %s16 = scalar_select 0, %s15, %s13
  $region1: #{cached_vision_model_forward.1} parent=0
    #allocation2 [shape = 'u8[1024]{0}', space=vmem, size = 0x400, scoped, tag = 'output window, operand 0, single buffered']
    #allocation3 [shape = 's32[1]{0}', space=sflag, size = 0x4, scoped, tag = 'scoped memory for cached_vision_model_forward.1']
    %17 = vsyncpa [#allocation3], 0
    // Predicated region
    $region2: #{cached_vision_model_forward.1} parent=1 // pred_check
      _
    $region3: #{cached_vision_model_forward.1} parent=1 // pred_check_branch
      %19 = sbr.rel (0) target = $region5
    $region4: #{cached_vision_model_forward.1} parent=1 // pred_region
      _
    $region5: #{cached_vision_model_forward.1} parent=1 // pred_fallthru
      _
    // Predicated region
    $region6: #{cached_vision_model_forward.1} parent=1 // pred_check
      _
    $region7: #{cached_vision_model_forward.1} parent=1 // pred_check_branch
      %21 = sbr.rel (0) target = $region9
    $region8: #{cached_vision_model_forward.1} parent=1 // pred_region
      _
    $region9: #{cached_vision_model_forward.1} parent=1 // pred_fallthru
      _
    // Predicated region
    $region10: #{cached_vision_model_forward.1} parent=1 // pred_check
      _
    $region11: #{cached_vision_model_forward.1} parent=1 // pred_check_branch
      %23 = sbr.rel (0) target = $region13
    $region12: #{cached_vision_model_forward.1} parent=1 // pred_region
      _
    $region13: #{cached_vision_model_forward.1} parent=1 // pred_fallthru
      _
    // Predicated region
    $region14: #{cached_vision_model_forward.1} parent=1 // pred_check
      _
    $region15: #{cached_vision_model_forward.1} parent=1 // pred_check_branch
      %25 = sbr.rel (0) target = $region17
    $region16: #{cached_vision_model_forward.1} parent=1 // pred_region
      _
    $region17: #{cached_vision_model_forward.1} parent=1 // pred_fallthru
      _
    // Predicated region
    $region18: #{cached_vision_model_forward.1} parent=1 // pred_check
      _
    $region19: #{cached_vision_model_forward.1} parent=1 // pred_check_branch
      %27 = sbr.rel (0) target = $region21
    $region20: #{cached_vision_model_forward.1} parent=1 // pred_region
      _
    $region21: #{cached_vision_model_forward.1} parent=1 // pred_fallthru
      _
    // Predicated region
    $region22: #{cached_vision_model_forward.1} parent=1 // pred_check
      _
    $region23: #{cached_vision_model_forward.1} parent=1 // pred_check_branch
      %29 = sbr.rel (0) target = $region25
    $region24: #{cached_vision_model_forward.1} parent=1 // pred_region
      _
    $region25: #{cached_vision_model_forward.1} parent=1 // pred_fallthru
      _
    // Predicated region
    $region26: #{cached_vision_model_forward.1} parent=1 // pred_check
      _
    $region27: #{cached_vision_model_forward.1} parent=1 // pred_check_branch
      %31 = sbr.rel (0) target = $region29
    $region28: #{cached_vision_model_forward.1} parent=1 // pred_region
      _
    $region29: #{cached_vision_model_forward.1} parent=1 // pred_fallthru
      _
    // Predicated region
    $region30: #{cached_vision_model_forward.1} parent=1 // pred_check
      _
    $region31: #{cached_vision_model_forward.1} parent=1 // pred_check_branch
      %33 = sbr.rel (0) target = $region33
    $region32: #{cached_vision_model_forward.1} parent=1 // pred_region
      _
    $region33: #{cached_vision_model_forward.1} parent=1 // pred_fallthru
      _
    // Predicated region
    $region34: #{cached_vision_model_forward.1} parent=1 // pred_check
      _
    $region35: #{cached_vision_model_forward.1} parent=1 // pred_check_branch
      %35 = sbr.rel (0) target = $region37
    $region36: #{cached_vision_model_forward.1} parent=1 // pred_region
      _
    $region37: #{cached_vision_model_forward.1} parent=1 // pred_fallthru
      _
    // Predicated region
    $region38: #{cached_vision_model_forward.1} parent=1 // pred_check
      _
    $region39: #{cached_vision_model_forward.1} parent=1 // pred_check_branch
      %37 = sbr.rel (0) target = $region41
    $region40: #{cached_vision_model_forward.1} parent=1 // pred_region
      _
    $region41: #{cached_vision_model_forward.1} parent=1 // pred_fallthru
      _
    // Predicated region
    $region42: #{cached_vision_model_forward.1} parent=1 // pred_check
      _
    $region43: #{cached_vision_model_forward.1} parent=1 // pred_check_branch
      %39 = sbr.rel (0) target = $region45
    $region44: #{cached_vision_model_forward.1} parent=1 // pred_region
      _
    $region45: #{cached_vision_model_forward.1} parent=1 // pred_fallthru
      _
    // Predicated region
    $region46: #{cached_vision_model_forward.1} parent=1 // pred_check
      _
    $region47: #{cached_vision_model_forward.1} parent=1 // pred_check_branch
      %41 = sbr.rel (0) target = $region49
    $region48: #{cached_vision_model_forward.1} parent=1 // pred_region
      _
    $region49: #{cached_vision_model_forward.1} parent=1 // pred_fallthru
      _
    %v43 = vld [vmem:[%s0] sm:$0xff]
    %v44 = vld [vmem:[%s0 + $0x8] sm:$0xff]
    %v45 = vld [vmem:[%s0 + $0x10] sm:$0xff]
    %v46 = vld [vmem:[%s0 + $0x18] sm:$0xff]
    %v47 = vld [vmem:[%s0 + $0x20] sm:$0xff]
    %v48 = vld [vmem:[%s0 + $0x28] sm:$0xff]
    %v49 = vld [vmem:[%s1] sm:$0xf]
    %v50 = vld [vmem:[%s1 + $0x4] sm:$0xf]
    %v51 = vld [vmem:[%s1 + $0x8] sm:$0xf]
    %v52 = vld [vmem:[%s1 + $0xc] sm:$0xf]
    %v53 = vld [vmem:[%s1 + $0x10] sm:$0xf]
    %v54 = vld [vmem:[%s1 + $0x14] sm:$0xf]
    %v55 = vld [vmem:[%s1 + $0x18] sm:$0xf]
    %v56 = vld [vmem:[%s1 + $0x1c] sm:$0xf]
    %v57 = vld [vmem:[%s1 + $0x20] sm:$0xf]
    %v58 = vld [vmem:[%s1 + $0x24] sm:$0xf]
    %v59 = vld [vmem:[%s1 + $0x28] sm:$0xf]
    %v60 = vld [vmem:[%s1 + $0x2c] sm:$0xf]
    %v61 = vld [vmem:[%s1 + $0x30] sm:$0xf]
    %v62 = vld [vmem:[%s1 + $0x34] sm:$0xf]
    %v63 = vld [vmem:[%s1 + $0x38] sm:$0xf]
    %v64 = vld [vmem:[%s1 + $0x3c] sm:$0xf]
    %v65 = vld [vmem:[%s1 + $0x40] sm:$0xf]
    %v66 = vld [vmem:[%s1 + $0x44] sm:$0xf]
    %v67 = vld [vmem:[%s1 + $0x48] sm:$0xf]
    %v68 = vld [vmem:[%s1 + $0x4c] sm:$0xf]
    %v69 = vld [vmem:[%s1 + $0x50] sm:$0xf]
    %v70 = vld [vmem:[%s1 + $0x54] sm:$0xf]
    %v71 = vld [vmem:[%s1 + $0x58] sm:$0xf]
    %v72 = vld [vmem:[%s1 + $0x5c] sm:$0xf]
    %v73 = vld [vmem:[%s1 + $0x60] sm:$0xf]
    %v74 = vld [vmem:[%s1 + $0x64] sm:$0xf]
    %v75 = vld [vmem:[%s1 + $0x68] sm:$0xf]
    %v76 = vld [vmem:[%s1 + $0x6c] sm:$0xf]
    %v77 = vld [vmem:[%s1 + $0x70] sm:$0xf]
    %v78 = vld [vmem:[%s1 + $0x74] sm:$0xf]
    %v79 = vld [vmem:[%s1 + $0x78] sm:$0xf]
    %v80 = vld [vmem:[%s1 + $0x7c] sm:$0xf]
    %v81 = vld [vmem:[%s1 + $0x80] sm:$0xf]
    %v82 = vld [vmem:[%s1 + $0x84] sm:$0xf]
    %v83 = vld [vmem:[%s1 + $0x88] sm:$0xf]
    %v84 = vld [vmem:[%s1 + $0x8c] sm:$0xf]
    %v85 = vld [vmem:[%s1 + $0x90] sm:$0xf]
    %v86 = vld [vmem:[%s1 + $0x94] sm:$0xf]
    %v87 = vld [vmem:[%s1 + $0x98] sm:$0xf]
    %v88 = vld [vmem:[%s1 + $0x9c] sm:$0xf]
    %v89 = vld [vmem:[%s1 + $0xa0] sm:$0xf]
    %v90 = vld [vmem:[%s1 + $0xa4] sm:$0xf]
    %v91 = vld [vmem:[%s1 + $0xa8] sm:$0xf]
    %v92 = vld [vmem:[%s1 + $0xac] sm:$0xf]
    %v93 = vld [vmem:[%s1 + $0xb0] sm:$0xf]
    %v94 = vld [vmem:[%s1 + $0xb4] sm:$0xf]
    %v95 = vld [vmem:[%s1 + $0xb8] sm:$0xf]
    %v96 = vld [vmem:[%s1 + $0xbc] sm:$0xf]
    %v97 = vld [vmem:[%s1 + $0xc0] sm:$0xf]
    %v98 = vld [vmem:[%s1 + $0xc4] sm:$0xf]
    %v99 = vld [vmem:[%s1 + $0xc8] sm:$0xf]
    %v100 = vld [vmem:[%s1 + $0xcc] sm:$0xf]
    %v101 = vld [vmem:[%s1 + $0xd0] sm:$0xf]
    %v102 = vld [vmem:[%s1 + $0xd4] sm:$0xf]
    %v103 = vld [vmem:[%s1 + $0xd8] sm:$0xf]
    %v104 = vld [vmem:[%s1 + $0xdc] sm:$0xf]
    %v105 = vld [vmem:[%s1 + $0xe0] sm:$0xf]
    %v106 = vld [vmem:[%s1 + $0xe4] sm:$0xf]
    %v107 = vld [vmem:[%s1 + $0xe8] sm:$0xf]
    %v108 = vld [vmem:[%s1 + $0xec] sm:$0xf]
    %v109 = vld [vmem:[%s1 + $0xf0] sm:$0xf]
    %v110 = vld [vmem:[%s1 + $0xf4] sm:$0xf]
    %v111 = vld [vmem:[%s1 + $0xf8] sm:$0xf]
    %v112 = vld [vmem:[%s1 + $0xfc] sm:$0xf]
    %v113 = vld [vmem:[%s1 + $0x100] sm:$0xf]
    %v114 = vld [vmem:[%s1 + $0x104] sm:$0xf]
    %v115 = vld [vmem:[%s1 + $0x108] sm:$0xf]
    %v116 = vld [vmem:[%s1 + $0x10c] sm:$0xf]
    %v117 = vld [vmem:[%s1 + $0x110] sm:$0xf]
    %v118 = vld [vmem:[%s1 + $0x114] sm:$0xf]
    %v119 = vld [vmem:[%s1 + $0x118] sm:$0xf]
    %v120 = vld [vmem:[%s1 + $0x11c] sm:$0xf]
    %v121 = vld [vmem:[%s1 + $0x120] sm:$0xf]
    %v122 = vld [vmem:[%s1 + $0x124] sm:$0xf]
    %v123 = vld [vmem:[%s1 + $0x128] sm:$0xf]
    %v124 = vld [vmem:[%s1 + $0x12c] sm:$0xf]
    %v125 = vld [vmem:[%s1 + $0x130] sm:$0xf]
    %v126 = vld [vmem:[%s1 + $0x134] sm:$0xf]
    %v127 = vld [vmem:[%s1 + $0x138] sm:$0xf]
    %v128 = vld [vmem:[%s1 + $0x13c] sm:$0xf]
    %v129 = vld [vmem:[%s1 + $0x140] sm:$0xf]
    %v130 = vld [vmem:[%s1 + $0x144] sm:$0xf]
    %v131 = vld [vmem:[%s1 + $0x148] sm:$0xf]
    %v132 = vld [vmem:[%s1 + $0x14c] sm:$0xf]
    %v133 = vld [vmem:[%s1 + $0x150] sm:$0xf]
    %v134 = vld [vmem:[%s1 + $0x154] sm:$0xf]
    %v135 = vld [vmem:[%s1 + $0x158] sm:$0xf]
    %v136 = vld [vmem:[%s1 + $0x15c] sm:$0xf]
    %v137 = vld [vmem:[%s1 + $0x160] sm:$0xf]
    %v138 = vld [vmem:[%s1 + $0x164] sm:$0xf]
    %v139 = vld [vmem:[%s1 + $0x168] sm:$0xf]
    %v140 = vld [vmem:[%s1 + $0x16c] sm:$0xf]
    %v141 = vld [vmem:[%s1 + $0x170] sm:$0xf]
    %v142 = vld [vmem:[%s1 + $0x174] sm:$0xf]
    %v143 = vld [vmem:[%s1 + $0x178] sm:$0xf]
    %v144 = vld [vmem:[%s1 + $0x17c] sm:$0xf]
    %v145 = vld [vmem:[%s2] sm:$0xff]
    %v146 = vld [vmem:[%s2 + $0x8] sm:$0xff]
    %v153 = vunpack.c.l.b16 %v43
    %v154 = vunpack.c.h.b16 %v43
    %v155 = vunpack.c.l.b16 %v44
    %v156 = vunpack.c.h.b16 %v44
    %v157 = vunpack.c.l.b16 %v45
    %v158 = vunpack.c.h.b16 %v45
    %v159 = vunpack.c.l.b16 %v46
    %v160 = vunpack.c.h.b16 %v46
    %v161 = vunpack.c.l.b16 %v47
    %v162 = vunpack.c.h.b16 %v47
    %v163 = vunpack.c.l.b16 %v48
    %v164 = vunpack.c.h.b16 %v48
    %v165 = vpack.c.b16 %v159, %v153
    %v166 = vpack.c.b16 %v160, %v154
    %v167 = vpack.c.b16 %v161, %v155
    %v168 = vpack.c.b16 %v162, %v156
    %v169 = vpack.c.b16 %v163, %v157
    %v170 = vpack.c.b16 %v164, %v158
    %v273 = vunpack.c.l.b16 %v49
    %v274 = vunpack.c.l.b16 %v50
    %v275 = vunpack.c.l.b16 %v51
    %v276 = vunpack.c.l.b16 %v52
    %v277 = vunpack.c.l.b16 %v53
    %v278 = vunpack.c.l.b16 %v54
    %v279 = vunpack.c.l.b16 %v55
    %v280 = vunpack.c.l.b16 %v56
    %v281 = vunpack.c.l.b16 %v57
    %v282 = vunpack.c.l.b16 %v58
    %v283 = vunpack.c.l.b16 %v59
    %v284 = vunpack.c.l.b16 %v60
    %v285 = vunpack.c.l.b16 %v61
    %v286 = vunpack.c.l.b16 %v62
    %v287 = vunpack.c.l.b16 %v63
    %v288 = vunpack.c.l.b16 %v64
    %v289 = vunpack.c.l.b16 %v65
    %v290 = vunpack.c.l.b16 %v66
    %v291 = vunpack.c.l.b16 %v67
    %v292 = vunpack.c.l.b16 %v68
    %v293 = vunpack.c.l.b16 %v69
    %v294 = vunpack.c.l.b16 %v70
    %v295 = vunpack.c.l.b16 %v71
    %v296 = vunpack.c.l.b16 %v72
    %v297 = vunpack.c.l.b16 %v73
    %v298 = vunpack.c.l.b16 %v74
    %v299 = vunpack.c.l.b16 %v75
    %v300 = vunpack.c.l.b16 %v76
    %v301 = vunpack.c.l.b16 %v77
    %v302 = vunpack.c.l.b16 %v78
    %v303 = vunpack.c.l.b16 %v79
    %v304 = vunpack.c.l.b16 %v80
    %v305 = vunpack.c.l.b16 %v81
    %v306 = vunpack.c.l.b16 %v82
    %v307 = vunpack.c.l.b16 %v83
    %v308 = vunpack.c.l.b16 %v84
    %v309 = vunpack.c.l.b16 %v85
    %v310 = vunpack.c.l.b16 %v86
    %v311 = vunpack.c.l.b16 %v87
    %v312 = vunpack.c.l.b16 %v88
    %v313 = vunpack.c.l.b16 %v89
    %v314 = vunpack.c.l.b16 %v90
    %v315 = vunpack.c.l.b16 %v91
    %v316 = vunpack.c.l.b16 %v92
    %v317 = vunpack.c.l.b16 %v93
    %v318 = vunpack.c.l.b16 %v94
    %v319 = vunpack.c.l.b16 %v95
    %v320 = vunpack.c.l.b16 %v96
    %v321 = vunpack.c.l.b16 %v97
    %v322 = vunpack.c.l.b16 %v98
    %v323 = vunpack.c.l.b16 %v99
    %v324 = vunpack.c.l.b16 %v100
    %v325 = vunpack.c.l.b16 %v101
    %v326 = vunpack.c.l.b16 %v102
    %v327 = vunpack.c.l.b16 %v103
    %v328 = vunpack.c.l.b16 %v104
    %v329 = vunpack.c.l.b16 %v105
    %v330 = vunpack.c.l.b16 %v106
    %v331 = vunpack.c.l.b16 %v107
    %v332 = vunpack.c.l.b16 %v108
    %v333 = vunpack.c.l.b16 %v109
    %v334 = vunpack.c.l.b16 %v110
    %v335 = vunpack.c.l.b16 %v111
    %v336 = vunpack.c.l.b16 %v112
    %v337 = vunpack.c.l.b16 %v113
    %v338 = vunpack.c.l.b16 %v114
    %v339 = vunpack.c.l.b16 %v115
    %v340 = vunpack.c.l.b16 %v116
    %v341 = vunpack.c.l.b16 %v117
    %v342 = vunpack.c.l.b16 %v118
    %v343 = vunpack.c.l.b16 %v119
    %v344 = vunpack.c.l.b16 %v120
    %v345 = vunpack.c.l.b16 %v121
    %v346 = vunpack.c.l.b16 %v122
    %v347 = vunpack.c.l.b16 %v123
    %v348 = vunpack.c.l.b16 %v124
    %v349 = vunpack.c.l.b16 %v125
    %v350 = vunpack.c.l.b16 %v126
    %v351 = vunpack.c.l.b16 %v127
    %v352 = vunpack.c.l.b16 %v128
    %v353 = vunpack.c.l.b16 %v129
    %v354 = vunpack.c.l.b16 %v130
    %v355 = vunpack.c.l.b16 %v131
    %v356 = vunpack.c.l.b16 %v132
    %v357 = vunpack.c.l.b16 %v133
    %v358 = vunpack.c.l.b16 %v134
    %v359 = vunpack.c.l.b16 %v135
    %v360 = vunpack.c.l.b16 %v136
    %v361 = vunpack.c.l.b16 %v137
    %v362 = vunpack.c.l.b16 %v138
    %v363 = vunpack.c.l.b16 %v139
    %v364 = vunpack.c.l.b16 %v140
    %v365 = vunpack.c.l.b16 %v141
    %v366 = vunpack.c.l.b16 %v142
    %v367 = vunpack.c.l.b16 %v143
    %v368 = vunpack.c.l.b16 %v144
    %v369 = vpack.c.b16 %v274, %v273
    %v370 = vpack.c.b16 %v276, %v275
    %v371 = vpack.c.b16 %v278, %v277
    %v372 = vpack.c.b16 %v280, %v279
    %v373 = vpack.c.b16 %v282, %v281
    %v374 = vpack.c.b16 %v284, %v283
    %v375 = vpack.c.b16 %v286, %v285
    %v376 = vpack.c.b16 %v288, %v287
    %v377 = vpack.c.b16 %v290, %v289
    %v378 = vpack.c.b16 %v292, %v291
    %v379 = vpack.c.b16 %v294, %v293
    %v380 = vpack.c.b16 %v296, %v295
    %v381 = vpack.c.b16 %v298, %v297
    %v382 = vpack.c.b16 %v300, %v299
    %v383 = vpack.c.b16 %v302, %v301
    %v384 = vpack.c.b16 %v304, %v303
    %v385 = vpack.c.b16 %v306, %v305
    %v386 = vpack.c.b16 %v308, %v307
    %v387 = vpack.c.b16 %v310, %v309
    %v388 = vpack.c.b16 %v312, %v311
    %v389 = vpack.c.b16 %v314, %v313
    %v390 = vpack.c.b16 %v316, %v315
    %v391 = vpack.c.b16 %v318, %v317
    %v392 = vpack.c.b16 %v320, %v319
    %v393 = vpack.c.b16 %v322, %v321
    %v394 = vpack.c.b16 %v324, %v323
    %v395 = vpack.c.b16 %v326, %v325
    %v396 = vpack.c.b16 %v328, %v327
    %v397 = vpack.c.b16 %v330, %v329
    %v398 = vpack.c.b16 %v332, %v331
    %v399 = vpack.c.b16 %v334, %v333
    %v400 = vpack.c.b16 %v336, %v335
    %v401 = vpack.c.b16 %v338, %v337
    %v402 = vpack.c.b16 %v340, %v339
    %v403 = vpack.c.b16 %v342, %v341
    %v404 = vpack.c.b16 %v344, %v343
    %v405 = vpack.c.b16 %v346, %v345
    %v406 = vpack.c.b16 %v348, %v347
    %v407 = vpack.c.b16 %v350, %v349
    %v408 = vpack.c.b16 %v352, %v351
    %v409 = vpack.c.b16 %v354, %v353
    %v410 = vpack.c.b16 %v356, %v355
    %v411 = vpack.c.b16 %v358, %v357
    %v412 = vpack.c.b16 %v360, %v359
    %v413 = vpack.c.b16 %v362, %v361
    %v414 = vpack.c.b16 %v364, %v363
    %v415 = vpack.c.b16 %v366, %v365
    %v416 = vpack.c.b16 %v368, %v367
    %465 = vmatprep.subr.bf16.mxu0 0
    %466 = vmatpush1.bf16.msra.mxu0 %v369
    %467 = vmatprep.subr.bf16.mxu0 0
    %468 = vmatpush1.bf16.msra.mxu0 %v370
    %469 = vmatprep.subr.bf16.mxu0 0
    %470 = vmatpush1.bf16.msra.mxu0 %v371
    %471 = vmatprep.subr.bf16.mxu0 0
    %472 = vmatpush1.bf16.msra.mxu0 %v372
    %473 = vmatprep.subr.bf16.mxu0 0
    %474 = vmatpush1.bf16.msra.mxu0 %v373
    %475 = vmatprep.subr.bf16.mxu0 0
    %476 = vmatpush1.bf16.msra.mxu0 %v374
    %477 = vmatprep.subr.bf16.mxu0 0
    %478 = vmatpush1.bf16.msra.mxu0 %v375
    %479 = vmatprep.subr.bf16.mxu0 0
    %480 = vmatpush1.bf16.msra.mxu0 %v376
    %481 = vmatprep.subr.bf16.mxu0 0
    %482 = vmatpush1.bf16.msra.mxu0 %v377
    %483 = vmatprep.subr.bf16.mxu0 0
    %484 = vmatpush1.bf16.msra.mxu0 %v378
    %485 = vmatprep.subr.bf16.mxu0 0
    %486 = vmatpush1.bf16.msra.mxu0 %v379
    %487 = vmatprep.subr.bf16.mxu0 0
    %488 = vmatpush1.bf16.msra.mxu0 %v380
    %489 = vmatprep.subr.bf16.mxu0 0
    %490 = vmatpush1.bf16.msra.mxu0 %v381
    %491 = vmatprep.subr.bf16.mxu0 0
    %492 = vmatpush1.bf16.msra.mxu0 %v382
    %493 = vmatprep.subr.bf16.mxu0 0
    %494 = vmatpush1.bf16.msra.mxu0 %v383
    %495 = vmatprep.subr.bf16.mxu0 0
    %496 = vmatpush1.bf16.msra.mxu0 %v384
    %497 = vmatprep.mubr.bf16.mxu0 %v166
    %498 = vmatmul.mubr.bf16.gmra.mrb[0].mxu0 %v165
    %v499 = vpop.f32.mrb[0].mxu0
    %v500 = vadd.f32 %v145, %v499
    %v501 = vpop.f32.mrb[0].mxu0
    %v502 = vpop.f32.mrb[0].mxu0
    %v503 = vadd.f32 %v146, %v502
    %v504 = vpop.f32.mrb[0].mxu0
    %505 = vdwg.mxu0
    %506 = vmatprep.subr.bf16.mxu0 0
    %507 = vmatpush1.bf16.msra.mxu0 %v385
    %508 = vmatprep.subr.bf16.mxu0 0
    %509 = vmatpush1.bf16.msra.mxu0 %v386
    %510 = vmatprep.subr.bf16.mxu0 0
    %511 = vmatpush1.bf16.msra.mxu0 %v387
    %512 = vmatprep.subr.bf16.mxu0 0
    %513 = vmatpush1.bf16.msra.mxu0 %v388
    %514 = vmatprep.subr.bf16.mxu0 0
    %515 = vmatpush1.bf16.msra.mxu0 %v389
    %516 = vmatprep.subr.bf16.mxu0 0
    %517 = vmatpush1.bf16.msra.mxu0 %v390
    %518 = vmatprep.subr.bf16.mxu0 0
    %519 = vmatpush1.bf16.msra.mxu0 %v391
    %520 = vmatprep.subr.bf16.mxu0 0
    %521 = vmatpush1.bf16.msra.mxu0 %v392
    %522 = vmatprep.subr.bf16.mxu0 0
    %523 = vmatpush1.bf16.msra.mxu0 %v393
    %524 = vmatprep.subr.bf16.mxu0 0
    %525 = vmatpush1.bf16.msra.mxu0 %v394
    %526 = vmatprep.subr.bf16.mxu0 0
    %527 = vmatpush1.bf16.msra.mxu0 %v395
    %528 = vmatprep.subr.bf16.mxu0 0
    %529 = vmatpush1.bf16.msra.mxu0 %v396
    %530 = vmatprep.subr.bf16.mxu0 0
    %531 = vmatpush1.bf16.msra.mxu0 %v397
    %532 = vmatprep.subr.bf16.mxu0 0
    %533 = vmatpush1.bf16.msra.mxu0 %v398
    %534 = vmatprep.subr.bf16.mxu0 0
    %535 = vmatpush1.bf16.msra.mxu0 %v399
    %536 = vmatprep.subr.bf16.mxu0 0
    %537 = vmatpush1.bf16.msra.mxu0 %v400
    %538 = vmatprep.mubr.bf16.mxu0 %v168
    %539 = vmatmul.mubr.bf16.gmra.mrb[0].mxu0 %v167
    %v540 = vpop.f32.mrb[0].mxu0
    %v541 = vadd.f32 %v500, %v540
    %v542 = vpop.f32.mrb[0].mxu0
    %v543 = vpop.f32.mrb[0].mxu0
    %v544 = vadd.f32 %v503, %v543
    %v545 = vpop.f32.mrb[0].mxu0
    %546 = vdwg.mxu0
    %547 = vmatprep.subr.bf16.mxu0 0
    %548 = vmatpush1.bf16.msra.mxu0 %v401
    %549 = vmatprep.subr.bf16.mxu0 0
    %550 = vmatpush1.bf16.msra.mxu0 %v402
    %551 = vmatprep.subr.bf16.mxu0 0
    %552 = vmatpush1.bf16.msra.mxu0 %v403
    %553 = vmatprep.subr.bf16.mxu0 0
    %554 = vmatpush1.bf16.msra.mxu0 %v404
    %555 = vmatprep.subr.bf16.mxu0 0
    %556 = vmatpush1.bf16.msra.mxu0 %v405
    %557 = vmatprep.subr.bf16.mxu0 0
    %558 = vmatpush1.bf16.msra.mxu0 %v406
    %559 = vmatprep.subr.bf16.mxu0 0
    %560 = vmatpush1.bf16.msra.mxu0 %v407
    %561 = vmatprep.subr.bf16.mxu0 0
    %562 = vmatpush1.bf16.msra.mxu0 %v408
    %563 = vmatprep.subr.bf16.mxu0 0
    %564 = vmatpush1.bf16.msra.mxu0 %v409
    %565 = vmatprep.subr.bf16.mxu0 0
    %566 = vmatpush1.bf16.msra.mxu0 %v410
    %567 = vmatprep.subr.bf16.mxu0 0
    %568 = vmatpush1.bf16.msra.mxu0 %v411
    %569 = vmatprep.subr.bf16.mxu0 0
    %570 = vmatpush1.bf16.msra.mxu0 %v412
    %571 = vmatprep.subr.bf16.mxu0 0
    %572 = vmatpush1.bf16.msra.mxu0 %v413
    %573 = vmatprep.subr.bf16.mxu0 0
    %574 = vmatpush1.bf16.msra.mxu0 %v414
    %575 = vmatprep.subr.bf16.mxu0 0
    %576 = vmatpush1.bf16.msra.mxu0 %v415
    %577 = vmatprep.subr.bf16.mxu0 0
    %578 = vmatpush1.bf16.msra.mxu0 %v416
    %579 = vmatprep.mubr.bf16.mxu0 %v170
    %580 = vmatmul.mubr.bf16.gmra.mrb[0].mxu0 %v169
    %v581 = vpop.f32.mrb[0].mxu0
    %v582 = vadd.f32 %v541, %v581
    %v583 = vpop.f32.mrb[0].mxu0
    %v584 = vpop.f32.mrb[0].mxu0
    %v585 = vadd.f32 %v544, %v584
    %v586 = vpop.f32.mrb[0].mxu0
    %587 = vdwg.mxu0
    %v588 = vlaneseq
    %v589 = vand.u32 %v588, 127
    %vm590 = vcmp.lt.s32.totalorder %v589, 5
    %v591 = vsel %vm590, 0.0, -1e+09
    %v592 = vld [vmem:[%s3] sm:$0x1]
    %v593 = vld [vmem:[%s3 + $0x1] sm:$0x1]
    %vm594 = vcmask 261120
    %v595 = vsel %vm594, %v582, 0.0
    %596 = vadd.xlane.f32.xlu0 %v595
    %v597 = vpop.xlane.xlu0 %596
    %v598 = vsel %vm594, %v585, 0.0
    %599 = vadd.xlane.f32.xlu0 %v598
    %v600 = vpop.xlane.xlu0 %599
    %v601 = vrcp.pop 32.0
    %v602 = vmul.f32 %v597, %v601
    %v603 = vmul.f32 %v600, %v601
    %v604 = vsub.f32 %v582, %v602
    %v605 = vsub.f32 %v585, %v603
    %v606 = vmul.f32 %v604, %v604
    %v607 = vmul.f32 %v605, %v605
    %v608 = vsel %vm594, %v606, 0.0
    %609 = vadd.xlane.f32.xlu0 %v608
    %v610 = vpop.xlane.xlu0 %609
    %v611 = vsel %vm594, %v607, 0.0
    %612 = vadd.xlane.f32.xlu0 %v611
    %v613 = vpop.xlane.xlu0 %612
    %v614 = vmul.f32 %v610, %v601
    %v615 = vmul.f32 %v613, %v601
    %v616 = vadd.f32 %v614, 1e-06
    %v617 = vadd.f32 %v615, 1e-06
    %v618 = vrsqrt.pop %v616
    %v619 = vrsqrt.pop %v617
    %v620 = vmul.f32 %v604, %v618
    %v621 = vmul.f32 %v605, %v619
    %v622 = vlaneseq
    %v623 = vshrl.u32 %v622, 7
    %v624 = vsub.s32 0, %v623
    %v625 = vrot.slane %v592, %v624
    %v626 = vmul.f32 %v620, %v625
    %v627 = vmul.f32 %v621, %v625
    %v628 = vlaneseq
    %v629 = vshrl.u32 %v628, 7
    %v630 = vsub.s32 0, %v629
    %v631 = vrot.slane %v593, %v630
    %v632 = vadd.f32 %v626, %v631
    %v633 = vadd.f32 %v627, %v631
    %v634 = vld [vmem:[%s4] sm:$0xf]
    %v635 = vld [vmem:[%s4 + $0x4] sm:$0xf]
    %v636 = vld [vmem:[%s4 + $0x8] sm:$0xf]
    %v637 = vld [vmem:[%s4 + $0xc] sm:$0xf]
    %v638 = vpack.c.bf16 %v633, %v632
    %v639 = vld [vmem:[%s8] sm:$0x1]
    %v641 = vlaneseq
    %v642 = vshrl.u32 %v641, 7
    %v643 = vsub.s32 0, %v642
    %v644 = vrot.slane %v639, %v643
    %v650 = vunpack.c.l.b16 %v634
    %v651 = vunpack.c.l.b16 %v635
    %v652 = vunpack.c.l.b16 %v636
    %v653 = vunpack.c.l.b16 %v637
    %v654 = vpack.c.b16 %v651, %v650
    %v655 = vpack.c.b16 %v653, %v652
    %v659 = vsel %vm594, %v638, 0
    %661 = vmatprep.subr.bf16.mxu0 0
    %662 = vmatpush1.bf16.msra.mxu0 %v654
    %663 = vmatprep.subr.bf16.mxu0 0
    %664 = vmatpush1.bf16.msra.mxu0 %v655
    %665 = vmatprep.subr.bf16.mxu0 0
    %666 = vmatpush1.bf16.msra.mxu0 0
    %667 = vmatprep.subr.bf16.mxu0 0
    %668 = vmatpush1.bf16.msra.mxu0 0
    %669 = vmatprep.subr.bf16.mxu0 0
    %670 = vmatpush1.bf16.msra.mxu0 0
    %671 = vmatprep.subr.bf16.mxu0 0
    %672 = vmatpush1.bf16.msra.mxu0 0
    %673 = vmatprep.subr.bf16.mxu0 0
    %674 = vmatpush1.bf16.msra.mxu0 0
    %675 = vmatprep.subr.bf16.mxu0 0
    %676 = vmatpush1.bf16.msra.mxu0 0
    %677 = vmatprep.subr.bf16.mxu0 0
    %678 = vmatpush1.bf16.msra.mxu0 0
    %679 = vmatprep.subr.bf16.mxu0 0
    %680 = vmatpush1.bf16.msra.mxu0 0
    %681 = vmatprep.subr.bf16.mxu0 0
    %682 = vmatpush1.bf16.msra.mxu0 0
    %683 = vmatprep.subr.bf16.mxu0 0
    %684 = vmatpush1.bf16.msra.mxu0 0
    %685 = vmatprep.subr.bf16.mxu0 0
    %686 = vmatpush1.bf16.msra.mxu0 0
    %687 = vmatprep.subr.bf16.mxu0 0
    %688 = vmatpush1.bf16.msra.mxu0 0
    %689 = vmatprep.subr.bf16.mxu0 0
    %690 = vmatpush1.bf16.msra.mxu0 0
    %691 = vmatprep.subr.bf16.mxu0 0
    %692 = vmatpush1.bf16.msra.mxu0 0
    %693 = vmatprep.mubr.bf16.mxu0 0
    %694 = vmatmul.mubr.bf16.gmra.mrb[0].mxu0 %v659
    %v695 = vpop.f32.mrb[0].mxu0
    %v696 = vadd.f32 %v644, %v695
    %v697 = vpop.f32.mrb[0].mxu0
    %v698 = vpop.f32.mrb[0].mxu0
    %v699 = vadd.f32 %v644, %v698
    %v700 = vpop.f32.mrb[0].mxu0
    %701 = vdwg.mxu0
    %v702 = vpack.c.bf16 %v696, %v696
    %v703 = vpack.c.bf16 %v699, %v699
    %705 = vrot.lane.b32.xlu0 %v702, 120
    %v706 = vpop.permute.xlu0 %705
    %707 = vrot.lane.b32.xlu0 %v702, 112
    %v708 = vpop.permute.xlu0 %707
    %709 = vrot.lane.b32.xlu0 %v702, 104
    %v710 = vpop.permute.xlu0 %709
    %712 = vrot.lane.b32.xlu0 %v703, 120
    %v713 = vpop.permute.xlu0 %712
    %714 = vrot.lane.b32.xlu0 %v703, 112
    %v715 = vpop.permute.xlu0 %714
    %716 = vrot.lane.b32.xlu0 %v703, 104
    %v717 = vpop.permute.xlu0 %716
    %718 = vrot.lane.b32.xlu0 %v702, 96
    %v719 = vpop.permute.xlu0 %718
    %vm720 = vcmask 64512
    %v722 = vsel %vm720, %v702, 0
    %v725 = vsel %vm720, %v719, 0
    %727 = vmatprep.subr.bf16.mxu0 0
    %728 = vmatpush1.bf16.xpose.msra.mxu0 %v725
    %729 = vmatprep.subr.bf16.mxu0 0
    %730 = vmatpush1.bf16.xpose.msra.mxu0 0
    %731 = vmatprep.subr.bf16.mxu0 0
    %732 = vmatpush1.bf16.xpose.msra.mxu0 0
    %733 = vmatprep.subr.bf16.mxu0 0
    %734 = vmatpush1.bf16.xpose.msra.mxu0 0
    %735 = vmatprep.subr.bf16.mxu0 0
    %736 = vmatpush1.bf16.xpose.msra.mxu0 0
    %737 = vmatprep.subr.bf16.mxu0 0
    %738 = vmatpush1.bf16.xpose.msra.mxu0 0
    %739 = vmatprep.subr.bf16.mxu0 0
    %740 = vmatpush1.bf16.xpose.msra.mxu0 0
    %741 = vmatprep.subr.bf16.mxu0 0
    %742 = vmatpush1.bf16.xpose.msra.mxu0 0
    %743 = vmatprep.subr.bf16.mxu0 0
    %744 = vmatpush1.bf16.xpose.msra.mxu0 0
    %745 = vmatprep.subr.bf16.mxu0 0
    %746 = vmatpush1.bf16.xpose.msra.mxu0 0
    %747 = vmatprep.subr.bf16.mxu0 0
    %748 = vmatpush1.bf16.xpose.msra.mxu0 0
    %749 = vmatprep.subr.bf16.mxu0 0
    %750 = vmatpush1.bf16.xpose.msra.mxu0 0
    %751 = vmatprep.subr.bf16.mxu0 0
    %752 = vmatpush1.bf16.xpose.msra.mxu0 0
    %753 = vmatprep.subr.bf16.mxu0 0
    %754 = vmatpush1.bf16.xpose.msra.mxu0 0
    %755 = vmatprep.subr.bf16.mxu0 0
    %756 = vmatpush1.bf16.xpose.msra.mxu0 0
    %757 = vmatprep.subr.bf16.mxu0 0
    %758 = vmatpush1.bf16.xpose.msra.mxu0 0
    %759 = vmatprep.mubr.bf16.mxu0 0
    %760 = vmatmul.mubr.bf16.gmra.mrb[0].mxu0 %v722
    %v761 = vpop.f32.mrb[0].mxu0
    %v762 = vadd.f32 %v591, %v761
    %v763 = vpop.f32.mrb[0].mxu0
    %v764 = vpop.f32.mrb[0].mxu0
    %v765 = vpop.f32.mrb[0].mxu0
    %766 = vdwg.mxu0
    %767 = vrot.lane.b32.xlu0 %v706, 96
    %v768 = vpop.permute.xlu0 %767
    %v770 = vsel %vm720, %v706, 0
    %v773 = vsel %vm720, %v768, 0
    %775 = vmatprep.subr.bf16.mxu0 0
    %776 = vmatpush1.bf16.xpose.msra.mxu0 %v773
    %777 = vmatprep.subr.bf16.mxu0 0
    %778 = vmatpush1.bf16.xpose.msra.mxu0 0
    %779 = vmatprep.subr.bf16.mxu0 0
    %780 = vmatpush1.bf16.xpose.msra.mxu0 0
    %781 = vmatprep.subr.bf16.mxu0 0
    %782 = vmatpush1.bf16.xpose.msra.mxu0 0
    %783 = vmatprep.subr.bf16.mxu0 0
    %784 = vmatpush1.bf16.xpose.msra.mxu0 0
    %785 = vmatprep.subr.bf16.mxu0 0
    %786 = vmatpush1.bf16.xpose.msra.mxu0 0
    %787 = vmatprep.subr.bf16.mxu0 0
    %788 = vmatpush1.bf16.xpose.msra.mxu0 0
    %789 = vmatprep.subr.bf16.mxu0 0
    %790 = vmatpush1.bf16.xpose.msra.mxu0 0
    %791 = vmatprep.subr.bf16.mxu0 0
    %792 = vmatpush1.bf16.xpose.msra.mxu0 0
    %793 = vmatprep.subr.bf16.mxu0 0
    %794 = vmatpush1.bf16.xpose.msra.mxu0 0
    %795 = vmatprep.subr.bf16.mxu0 0
    %796 = vmatpush1.bf16.xpose.msra.mxu0 0
    %797 = vmatprep.subr.bf16.mxu0 0
    %798 = vmatpush1.bf16.xpose.msra.mxu0 0
    %799 = vmatprep.subr.bf16.mxu0 0
    %800 = vmatpush1.bf16.xpose.msra.mxu0 0
    %801 = vmatprep.subr.bf16.mxu0 0
    %802 = vmatpush1.bf16.xpose.msra.mxu0 0
    %803 = vmatprep.subr.bf16.mxu0 0
    %804 = vmatpush1.bf16.xpose.msra.mxu0 0
    %805 = vmatprep.subr.bf16.mxu0 0
    %806 = vmatpush1.bf16.xpose.msra.mxu0 0
    %807 = vmatprep.mubr.bf16.mxu0 0
    %808 = vmatmul.mubr.bf16.gmra.mrb[0].mxu0 %v770
    %v809 = vpop.f32.mrb[0].mxu0
    %v810 = vadd.f32 %v591, %v809
    %v811 = vpop.f32.mrb[0].mxu0
    %v812 = vpop.f32.mrb[0].mxu0
    %v813 = vpop.f32.mrb[0].mxu0
    %814 = vdwg.mxu0
    %815 = vrot.lane.b32.xlu0 %v708, 96
    %v816 = vpop.permute.xlu0 %815
    %v818 = vsel %vm720, %v708, 0
    %v821 = vsel %vm720, %v816, 0
    %823 = vmatprep.subr.bf16.mxu0 0
    %824 = vmatpush1.bf16.xpose.msra.mxu0 %v821
    %825 = vmatprep.subr.bf16.mxu0 0
    %826 = vmatpush1.bf16.xpose.msra.mxu0 0
    %827 = vmatprep.subr.bf16.mxu0 0
    %828 = vmatpush1.bf16.xpose.msra.mxu0 0
    %829 = vmatprep.subr.bf16.mxu0 0
    %830 = vmatpush1.bf16.xpose.msra.mxu0 0
    %831 = vmatprep.subr.bf16.mxu0 0
    %832 = vmatpush1.bf16.xpose.msra.mxu0 0
    %833 = vmatprep.subr.bf16.mxu0 0
    %834 = vmatpush1.bf16.xpose.msra.mxu0 0
    %835 = vmatprep.subr.bf16.mxu0 0
    %836 = vmatpush1.bf16.xpose.msra.mxu0 0
    %837 = vmatprep.subr.bf16.mxu0 0
    %838 = vmatpush1.bf16.xpose.msra.mxu0 0
    %839 = vmatprep.subr.bf16.mxu0 0
    %840 = vmatpush1.bf16.xpose.msra.mxu0 0
    %841 = vmatprep.subr.bf16.mxu0 0
    %842 = vmatpush1.bf16.xpose.msra.mxu0 0
    %843 = vmatprep.subr.bf16.mxu0 0
    %844 = vmatpush1.bf16.xpose.msra.mxu0 0
    %845 = vmatprep.subr.bf16.mxu0 0
    %846 = vmatpush1.bf16.xpose.msra.mxu0 0
    %847 = vmatprep.subr.bf16.mxu0 0
    %848 = vmatpush1.bf16.xpose.msra.mxu0 0
    %849 = vmatprep.subr.bf16.mxu0 0
    %850 = vmatpush1.bf16.xpose.msra.mxu0 0
    %851 = vmatprep.subr.bf16.mxu0 0
    %852 = vmatpush1.bf16.xpose.msra.mxu0 0
    %853 = vmatprep.subr.bf16.mxu0 0
    %854 = vmatpush1.bf16.xpose.msra.mxu0 0
    %855 = vmatprep.mubr.bf16.mxu0 0
    %856 = vmatmul.mubr.bf16.gmra.mrb[0].mxu0 %v818
    %v857 = vpop.f32.mrb[0].mxu0
    %v858 = vadd.f32 %v591, %v857
    %v859 = vpop.f32.mrb[0].mxu0
    %v860 = vpop.f32.mrb[0].mxu0
    %v861 = vpop.f32.mrb[0].mxu0
    %862 = vdwg.mxu0
    %863 = vrot.lane.b32.xlu0 %v710, 96
    %v864 = vpop.permute.xlu0 %863
    %v866 = vsel %vm720, %v710, 0
    %v869 = vsel %vm720, %v864, 0
    %871 = vmatprep.subr.bf16.mxu0 0
    %872 = vmatpush1.bf16.xpose.msra.mxu0 %v869
    %873 = vmatprep.subr.bf16.mxu0 0
    %874 = vmatpush1.bf16.xpose.msra.mxu0 0
    %875 = vmatprep.subr.bf16.mxu0 0
    %876 = vmatpush1.bf16.xpose.msra.mxu0 0
    %877 = vmatprep.subr.bf16.mxu0 0
    %878 = vmatpush1.bf16.xpose.msra.mxu0 0
    %879 = vmatprep.subr.bf16.mxu0 0
    %880 = vmatpush1.bf16.xpose.msra.mxu0 0
    %881 = vmatprep.subr.bf16.mxu0 0
    %882 = vmatpush1.bf16.xpose.msra.mxu0 0
    %883 = vmatprep.subr.bf16.mxu0 0
    %884 = vmatpush1.bf16.xpose.msra.mxu0 0
    %885 = vmatprep.subr.bf16.mxu0 0
    %886 = vmatpush1.bf16.xpose.msra.mxu0 0
    %887 = vmatprep.subr.bf16.mxu0 0
    %888 = vmatpush1.bf16.xpose.msra.mxu0 0
    %889 = vmatprep.subr.bf16.mxu0 0
    %890 = vmatpush1.bf16.xpose.msra.mxu0 0
    %891 = vmatprep.subr.bf16.mxu0 0
    %892 = vmatpush1.bf16.xpose.msra.mxu0 0
    %893 = vmatprep.subr.bf16.mxu0 0
    %894 = vmatpush1.bf16.xpose.msra.mxu0 0
    %895 = vmatprep.subr.bf16.mxu0 0
    %896 = vmatpush1.bf16.xpose.msra.mxu0 0
    %897 = vmatprep.subr.bf16.mxu0 0
    %898 = vmatpush1.bf16.xpose.msra.mxu0 0
    %899 = vmatprep.subr.bf16.mxu0 0
    %900 = vmatpush1.bf16.xpose.msra.mxu0 0
    %901 = vmatprep.subr.bf16.mxu0 0
    %902 = vmatpush1.bf16.xpose.msra.mxu0 0
    %903 = vmatprep.mubr.bf16.mxu0 0
    %904 = vmatmul.mubr.bf16.gmra.mrb[0].mxu0 %v866
    %v905 = vpop.f32.mrb[0].mxu0
    %v906 = vadd.f32 %v591, %v905
    %v907 = vpop.f32.mrb[0].mxu0
    %v908 = vpop.f32.mrb[0].mxu0
    %v909 = vpop.f32.mrb[0].mxu0
    %910 = vdwg.mxu0
    %911 = vrot.lane.b32.xlu0 %v703, 96
    %v912 = vpop.permute.xlu0 %911
    %v914 = vsel %vm720, %v703, 0
    %v917 = vsel %vm720, %v912, 0
    %919 = vmatprep.subr.bf16.mxu0 0
    %920 = vmatpush1.bf16.xpose.msra.mxu0 %v917
    %921 = vmatprep.subr.bf16.mxu0 0
    %922 = vmatpush1.bf16.xpose.msra.mxu0 0
    %923 = vmatprep.subr.bf16.mxu0 0
    %924 = vmatpush1.bf16.xpose.msra.mxu0 0
    %925 = vmatprep.subr.bf16.mxu0 0
    %926 = vmatpush1.bf16.xpose.msra.mxu0 0
    %927 = vmatprep.subr.bf16.mxu0 0
    %928 = vmatpush1.bf16.xpose.msra.mxu0 0
    %929 = vmatprep.subr.bf16.mxu0 0
    %930 = vmatpush1.bf16.xpose.msra.mxu0 0
    %931 = vmatprep.subr.bf16.mxu0 0
    %932 = vmatpush1.bf16.xpose.msra.mxu0 0
    %933 = vmatprep.subr.bf16.mxu0 0
    %934 = vmatpush1.bf16.xpose.msra.mxu0 0
    %935 = vmatprep.subr.bf16.mxu0 0
    %936 = vmatpush1.bf16.xpose.msra.mxu0 0
    %937 = vmatprep.subr.bf16.mxu0 0
    %938 = vmatpush1.bf16.xpose.msra.mxu0 0
    %939 = vmatprep.subr.bf16.mxu0 0
    %940 = vmatpush1.bf16.xpose.msra.mxu0 0
    %941 = vmatprep.subr.bf16.mxu0 0
    %942 = vmatpush1.bf16.xpose.msra.mxu0 0
    %943 = vmatprep.subr.bf16.mxu0 0
    %944 = vmatpush1.bf16.xpose.msra.mxu0 0
    %945 = vmatprep.subr.bf16.mxu0 0
    %946 = vmatpush1.bf16.xpose.msra.mxu0 0
    %947 = vmatprep.subr.bf16.mxu0 0
    %948 = vmatpush1.bf16.xpose.msra.mxu0 0
    %949 = vmatprep.subr.bf16.mxu0 0
    %950 = vmatpush1.bf16.xpose.msra.mxu0 0
    %951 = vmatprep.mubr.bf16.mxu0 0
    %952 = vmatmul.mubr.bf16.gmra.mrb[0].mxu0 %v914
    %v953 = vpop.f32.mrb[0].mxu0
    %v954 = vadd.f32 %v591, %v953
    %v955 = vpop.f32.mrb[0].mxu0
    %v956 = vpop.f32.mrb[0].mxu0
    %v957 = vpop.f32.mrb[0].mxu0
    %958 = vdwg.mxu0
    %959 = vrot.lane.b32.xlu0 %v713, 96
    %v960 = vpop.permute.xlu0 %959
    %v962 = vsel %vm720, %v713, 0
    %v965 = vsel %vm720, %v960, 0
    %967 = vmatprep.subr.bf16.mxu0 0
    %968 = vmatpush1.bf16.xpose.msra.mxu0 %v965
    %969 = vmatprep.subr.bf16.mxu0 0
    %970 = vmatpush1.bf16.xpose.msra.mxu0 0
    %971 = vmatprep.subr.bf16.mxu0 0
    %972 = vmatpush1.bf16.xpose.msra.mxu0 0
    %973 = vmatprep.subr.bf16.mxu0 0
    %974 = vmatpush1.bf16.xpose.msra.mxu0 0
    %975 = vmatprep.subr.bf16.mxu0 0
    %976 = vmatpush1.bf16.xpose.msra.mxu0 0
    %977 = vmatprep.subr.bf16.mxu0 0
    %978 = vmatpush1.bf16.xpose.msra.mxu0 0
    %979 = vmatprep.subr.bf16.mxu0 0
    %980 = vmatpush1.bf16.xpose.msra.mxu0 0
    %981 = vmatprep.subr.bf16.mxu0 0
    %982 = vmatpush1.bf16.xpose.msra.mxu0 0
    %983 = vmatprep.subr.bf16.mxu0 0
    %984 = vmatpush1.bf16.xpose.msra.mxu0 0
    %985 = vmatprep.subr.bf16.mxu0 0
    %986 = vmatpush1.bf16.xpose.msra.mxu0 0
    %987 = vmatprep.subr.bf16.mxu0 0
    %988 = vmatpush1.bf16.xpose.msra.mxu0 0
    %989 = vmatprep.subr.bf16.mxu0 0
    %990 = vmatpush1.bf16.xpose.msra.mxu0 0
    %991 = vmatprep.subr.bf16.mxu0 0
    %992 = vmatpush1.bf16.xpose.msra.mxu0 0
    %993 = vmatprep.subr.bf16.mxu0 0
    %994 = vmatpush1.bf16.xpose.msra.mxu0 0
    %995 = vmatprep.subr.bf16.mxu0 0
    %996 = vmatpush1.bf16.xpose.msra.mxu0 0
    %997 = vmatprep.subr.bf16.mxu0 0
    %998 = vmatpush1.bf16.xpose.msra.mxu0 0
    %999 = vmatprep.mubr.bf16.mxu0 0
    %1000 = vmatmul.mubr.bf16.gmra.mrb[0].mxu0 %v962
    %v1001 = vpop.f32.mrb[0].mxu0
    %v1002 = vadd.f32 %v591, %v1001
    %v1003 = vpop.f32.mrb[0].mxu0
    %v1004 = vpop.f32.mrb[0].mxu0
    %v1005 = vpop.f32.mrb[0].mxu0
    %1006 = vdwg.mxu0
    %1007 = vrot.lane.b32.xlu0 %v715, 96
    %v1008 = vpop.permute.xlu0 %1007
    %v1010 = vsel %vm720, %v715, 0
    %v1013 = vsel %vm720, %v1008, 0
    %1015 = vmatprep.subr.bf16.mxu0 0
    %1016 = vmatpush1.bf16.xpose.msra.mxu0 %v1013
    %1017 = vmatprep.subr.bf16.mxu0 0
    %1018 = vmatpush1.bf16.xpose.msra.mxu0 0
    %1019 = vmatprep.subr.bf16.mxu0 0
    %1020 = vmatpush1.bf16.xpose.msra.mxu0 0
    %1021 = vmatprep.subr.bf16.mxu0 0
    %1022 = vmatpush1.bf16.xpose.msra.mxu0 0
    %1023 = vmatprep.subr.bf16.mxu0 0
    %1024 = vmatpush1.bf16.xpose.msra.mxu0 0
    %1025 = vmatprep.subr.bf16.mxu0 0
    %1026 = vmatpush1.bf16.xpose.msra.mxu0 0
    %1027 = vmatprep.subr.bf16.mxu0 0
    %1028 = vmatpush1.bf16.xpose.msra.mxu0 0
    %1029 = vmatprep.subr.bf16.mxu0 0
    %1030 = vmatpush1.bf16.xpose.msra.mxu0 0
    %1031 = vmatprep.subr.bf16.mxu0 0
    %1032 = vmatpush1.bf16.xpose.msra.mxu0 0
    %1033 = vmatprep.subr.bf16.mxu0 0
    %1034 = vmatpush1.bf16.xpose.msra.mxu0 0
    %1035 = vmatprep.subr.bf16.mxu0 0
    %1036 = vmatpush1.bf16.xpose.msra.mxu0 0
    %1037 = vmatprep.subr.bf16.mxu0 0
    %1038 = vmatpush1.bf16.xpose.msra.mxu0 0
    %1039 = vmatprep.subr.bf16.mxu0 0
    %1040 = vmatpush1.bf16.xpose.msra.mxu0 0
    %1041 = vmatprep.subr.bf16.mxu0 0
    %1042 = vmatpush1.bf16.xpose.msra.mxu0 0
    %1043 = vmatprep.subr.bf16.mxu0 0
    %1044 = vmatpush1.bf16.xpose.msra.mxu0 0
    %1045 = vmatprep.subr.bf16.mxu0 0
    %1046 = vmatpush1.bf16.xpose.msra.mxu0 0
    %1047 = vmatprep.mubr.bf16.mxu0 0
    %1048 = vmatmul.mubr.bf16.gmra.mrb[0].mxu0 %v1010
    %v1049 = vpop.f32.mrb[0].mxu0
    %v1050 = vadd.f32 %v591, %v1049
    %v1051 = vpop.f32.mrb[0].mxu0
    %v1052 = vpop.f32.mrb[0].mxu0
    %v1053 = vpop.f32.mrb[0].mxu0
    %1054 = vdwg.mxu0
    %1055 = vrot.lane.b32.xlu0 %v717, 96
    %v1056 = vpop.permute.xlu0 %1055
    %v1058 = vsel %vm720, %v717, 0
    %v1061 = vsel %vm720, %v1056, 0
    %1063 = vmatprep.subr.bf16.mxu0 0
    %1064 = vmatpush1.bf16.xpose.msra.mxu0 %v1061
    %1065 = vmatprep.subr.bf16.mxu0 0
    %1066 = vmatpush1.bf16.xpose.msra.mxu0 0
    %1067 = vmatprep.subr.bf16.mxu0 0
    %1068 = vmatpush1.bf16.xpose.msra.mxu0 0
    %1069 = vmatprep.subr.bf16.mxu0 0
    %1070 = vmatpush1.bf16.xpose.msra.mxu0 0
    %1071 = vmatprep.subr.bf16.mxu0 0
    %1072 = vmatpush1.bf16.xpose.msra.mxu0 0
    %1073 = vmatprep.subr.bf16.mxu0 0
    %1074 = vmatpush1.bf16.xpose.msra.mxu0 0
    %1075 = vmatprep.subr.bf16.mxu0 0
    %1076 = vmatpush1.bf16.xpose.msra.mxu0 0
    %1077 = vmatprep.subr.bf16.mxu0 0
    %1078 = vmatpush1.bf16.xpose.msra.mxu0 0
    %1079 = vmatprep.subr.bf16.mxu0 0
    %1080 = vmatpush1.bf16.xpose.msra.mxu0 0
    %1081 = vmatprep.subr.bf16.mxu0 0
    %1082 = vmatpush1.bf16.xpose.msra.mxu0 0
    %1083 = vmatprep.subr.bf16.mxu0 0
    %1084 = vmatpush1.bf16.xpose.msra.mxu0 0
    %1085 = vmatprep.subr.bf16.mxu0 0
    %1086 = vmatpush1.bf16.xpose.msra.mxu0 0
    %1087 = vmatprep.subr.bf16.mxu0 0
    %1088 = vmatpush1.bf16.xpose.msra.mxu0 0
    %1089 = vmatprep.subr.bf16.mxu0 0
    %1090 = vmatpush1.bf16.xpose.msra.mxu0 0
    %1091 = vmatprep.subr.bf16.mxu0 0
    %1092 = vmatpush1.bf16.xpose.msra.mxu0 0
    %1093 = vmatprep.subr.bf16.mxu0 0
    %1094 = vmatpush1.bf16.xpose.msra.mxu0 0
    %1095 = vmatprep.mubr.bf16.mxu0 0
    %1096 = vmatmul.mubr.bf16.gmra.mrb[0].mxu0 %v1058
    %v1097 = vpop.f32.mrb[0].mxu0
    %v1098 = vadd.f32 %v591, %v1097
    %v1099 = vpop.f32.mrb[0].mxu0
    %v1100 = vpop.f32.mrb[0].mxu0
    %v1101 = vpop.f32.mrb[0].mxu0
    %1102 = vdwg.mxu0
    %v1103 = vsel %vm720, %v762, -inf
    %1104 = vmax.xlane.f32.xlu0 %v1103
    %v1105 = vpop.xlane.xlu0 %1104
    %v1106 = vsel %vm720, %v810, -inf
    %1107 = vmax.xlane.f32.xlu0 %v1106
    %v1108 = vpop.xlane.xlu0 %1107
    %v1109 = vsel %vm720, %v858, -inf
    %1110 = vmax.xlane.f32.xlu0 %v1109
    %v1111 = vpop.xlane.xlu0 %1110
    %v1112 = vsel %vm720, %v906, -inf
    %1113 = vmax.xlane.f32.xlu0 %v1112
    %v1114 = vpop.xlane.xlu0 %1113
    %v1115 = vsel %vm720, %v954, -inf
    %1116 = vmax.xlane.f32.xlu0 %v1115
    %v1117 = vpop.xlane.xlu0 %1116
    %v1118 = vsel %vm720, %v1002, -inf
    %1119 = vmax.xlane.f32.xlu0 %v1118
    %v1120 = vpop.xlane.xlu0 %1119
    %v1121 = vsel %vm720, %v1050, -inf
    %1122 = vmax.xlane.f32.xlu0 %v1121
    %v1123 = vpop.xlane.xlu0 %1122
    %v1124 = vsel %vm720, %v1098, -inf
    %1125 = vmax.xlane.f32.xlu0 %v1124
    %v1126 = vpop.xlane.xlu0 %1125
    %v1127 = vsub.f32 %v762, %v1105
    %v1128 = vsub.f32 %v810, %v1108
    %v1129 = vsub.f32 %v858, %v1111
    %v1130 = vsub.f32 %v906, %v1114
    %v1131 = vsub.f32 %v954, %v1117
    %v1132 = vsub.f32 %v1002, %v1120
    %v1133 = vsub.f32 %v1050, %v1123
    %v1134 = vsub.f32 %v1098, %v1126
    %v1135 = vmul.f32 %v1127, 1.442695
    %v1136 = vpow.pop %v1135
    %v1137 = vmul.f32 %v1128, 1.442695
    %v1138 = vpow.pop %v1137
    %v1139 = vmul.f32 %v1129, 1.442695
    %v1140 = vpow.pop %v1139
    %v1141 = vmul.f32 %v1130, 1.442695
    %v1142 = vpow.pop %v1141
    %v1143 = vmul.f32 %v1131, 1.442695
    %v1144 = vpow.pop %v1143
    %v1145 = vmul.f32 %v1132, 1.442695
    %v1146 = vpow.pop %v1145
    %v1147 = vmul.f32 %v1133, 1.442695
    %v1148 = vpow.pop %v1147
    %v1149 = vmul.f32 %v1134, 1.442695
    %v1150 = vpow.pop %v1149
    %v1151 = vsel %vm720, %v1136, 0.0
    %1152 = vadd.xlane.f32.xlu0 %v1151
    %v1153 = vpop.xlane.xlu0 %1152
    %v1154 = vsel %vm720, %v1138, 0.0
    %1155 = vadd.xlane.f32.xlu0 %v1154
    %v1156 = vpop.xlane.xlu0 %1155
    %v1157 = vsel %vm720, %v1140, 0.0
    %1158 = vadd.xlane.f32.xlu0 %v1157
    %v1159 = vpop.xlane.xlu0 %1158
    %v1160 = vsel %vm720, %v1142, 0.0
    %1161 = vadd.xlane.f32.xlu0 %v1160
    %v1162 = vpop.xlane.xlu0 %1161
    %v1163 = vsel %vm720, %v1144, 0.0
    %1164 = vadd.xlane.f32.xlu0 %v1163
    %v1165 = vpop.xlane.xlu0 %1164
    %v1166 = vsel %vm720, %v1146, 0.0
    %1167 = vadd.xlane.f32.xlu0 %v1166
    %v1168 = vpop.xlane.xlu0 %1167
    %v1169 = vsel %vm720, %v1148, 0.0
    %1170 = vadd.xlane.f32.xlu0 %v1169
    %v1171 = vpop.xlane.xlu0 %1170
    %v1172 = vsel %vm720, %v1150, 0.0
    %1173 = vadd.xlane.f32.xlu0 %v1172
    %v1174 = vpop.xlane.xlu0 %1173
    %v1175 = vrcp.pop %v1153
    %v1176 = vrcp.pop %v1156
    %v1177 = vrcp.pop %v1159
    %v1178 = vrcp.pop %v1162
    %v1179 = vrcp.pop %v1165
    %v1180 = vrcp.pop %v1168
    %v1181 = vrcp.pop %v1171
    %v1182 = vrcp.pop %v1174
    %v1183 = vmul.f32 %v1136, %v1175
    %v1184 = vmul.f32 %v1138, %v1176
    %v1185 = vmul.f32 %v1140, %v1177
    %v1186 = vmul.f32 %v1142, %v1178
    %v1187 = vmul.f32 %v1144, %v1179
    %v1188 = vmul.f32 %v1146, %v1180
    %v1189 = vmul.f32 %v1148, %v1181
    %v1190 = vmul.f32 %v1150, %v1182
    %v1191 = vpack.c.bf16 %v1183, %v1183
    %v1192 = vpack.c.bf16 %v1184, %v1184
    %v1193 = vpack.c.bf16 %v1185, %v1185
    %v1194 = vpack.c.bf16 %v1186, %v1186
    %v1195 = vpack.c.bf16 %v1187, %v1187
    %v1196 = vpack.c.bf16 %v1188, %v1188
    %v1197 = vpack.c.bf16 %v1189, %v1189
    %v1198 = vpack.c.bf16 %v1190, %v1190
    %1199 = vrot.lane.b32.xlu0 %v702, 64
    %v1200 = vpop.permute.xlu0 %1199
    %v1202 = vsel %vm720, %v1191, 0
    %vm1204 = vcmask 1043456
    %v1206 = vsel %vm1204, %v1200, 0
    %1208 = vmatprep.subr.bf16.mxu0 0
    %1209 = vmatpush1.bf16.msra.mxu0 %v1206
    %1210 = vmatprep.subr.bf16.mxu0 0
    %1211 = vmatpush1.bf16.msra.mxu0 0
    %1212 = vmatprep.subr.bf16.mxu0 0
    %1213 = vmatpush1.bf16.msra.mxu0 0
    %1214 = vmatprep.subr.bf16.mxu0 0
    %1215 = vmatpush1.bf16.msra.mxu0 0
    %1216 = vmatprep.subr.bf16.mxu0 0
    %1217 = vmatpush1.bf16.msra.mxu0 0
    %1218 = vmatprep.subr.bf16.mxu0 0
    %1219 = vmatpush1.bf16.msra.mxu0 0
    %1220 = vmatprep.subr.bf16.mxu0 0
    %1221 = vmatpush1.bf16.msra.mxu0 0
    %1222 = vmatprep.subr.bf16.mxu0 0
    %1223 = vmatpush1.bf16.msra.mxu0 0
    %1224 = vmatprep.subr.bf16.mxu0 0
    %1225 = vmatpush1.bf16.msra.mxu0 0
    %1226 = vmatprep.subr.bf16.mxu0 0
    %1227 = vmatpush1.bf16.msra.mxu0 0
    %1228 = vmatprep.subr.bf16.mxu0 0
    %1229 = vmatpush1.bf16.msra.mxu0 0
    %1230 = vmatprep.subr.bf16.mxu0 0
    %1231 = vmatpush1.bf16.msra.mxu0 0
    %1232 = vmatprep.subr.bf16.mxu0 0
    %1233 = vmatpush1.bf16.msra.mxu0 0
    %1234 = vmatprep.subr.bf16.mxu0 0
    %1235 = vmatpush1.bf16.msra.mxu0 0
    %1236 = vmatprep.subr.bf16.mxu0 0
    %1237 = vmatpush1.bf16.msra.mxu0 0
    %1238 = vmatprep.subr.bf16.mxu0 0
    %1239 = vmatpush1.bf16.msra.mxu0 0
    %1240 = vmatprep.mubr.bf16.mxu0 0
    %1241 = vmatmul.mubr.bf16.gmra.mrb[0].mxu0 %v1202
    %v1242 = vpop.f32.mrb[0].mxu0
    %v1243 = vadd.f32 0.0, %v1242
    %v1244 = vpop.f32.mrb[0].mxu0
    %v1245 = vpop.f32.mrb[0].mxu0
    %v1246 = vpop.f32.mrb[0].mxu0
    %1247 = vdwg.mxu0
    %1248 = vrot.lane.b32.xlu0 %v706, 64
    %v1249 = vpop.permute.xlu0 %1248
    %v1251 = vsel %vm720, %v1192, 0
    %v1254 = vsel %vm1204, %v1249, 0
    %1256 = vmatprep.subr.bf16.mxu0 0
    %1257 = vmatpush1.bf16.msra.mxu0 %v1254
    %1258 = vmatprep.subr.bf16.mxu0 0
    %1259 = vmatpush1.bf16.msra.mxu0 0
    %1260 = vmatprep.subr.bf16.mxu0 0
    %1261 = vmatpush1.bf16.msra.mxu0 0
    %1262 = vmatprep.subr.bf16.mxu0 0
    %1263 = vmatpush1.bf16.msra.mxu0 0
    %1264 = vmatprep.subr.bf16.mxu0 0
    %1265 = vmatpush1.bf16.msra.mxu0 0
    %1266 = vmatprep.subr.bf16.mxu0 0
    %1267 = vmatpush1.bf16.msra.mxu0 0
    %1268 = vmatprep.subr.bf16.mxu0 0
    %1269 = vmatpush1.bf16.msra.mxu0 0
    %1270 = vmatprep.subr.bf16.mxu0 0
    %1271 = vmatpush1.bf16.msra.mxu0 0
    %1272 = vmatprep.subr.bf16.mxu0 0
    %1273 = vmatpush1.bf16.msra.mxu0 0
    %1274 = vmatprep.subr.bf16.mxu0 0
    %1275 = vmatpush1.bf16.msra.mxu0 0
    %1276 = vmatprep.subr.bf16.mxu0 0
    %1277 = vmatpush1.bf16.msra.mxu0 0
    %1278 = vmatprep.subr.bf16.mxu0 0
    %1279 = vmatpush1.bf16.msra.mxu0 0
    %1280 = vmatprep.subr.bf16.mxu0 0
    %1281 = vmatpush1.bf16.msra.mxu0 0
    %1282 = vmatprep.subr.bf16.mxu0 0
    %1283 = vmatpush1.bf16.msra.mxu0 0
    %1284 = vmatprep.subr.bf16.mxu0 0
    %1285 = vmatpush1.bf16.msra.mxu0 0
    %1286 = vmatprep.subr.bf16.mxu0 0
    %1287 = vmatpush1.bf16.msra.mxu0 0
    %1288 = vmatprep.mubr.bf16.mxu0 0
    %1289 = vmatmul.mubr.bf16.gmra.mrb[0].mxu0 %v1251
    %v1290 = vpop.f32.mrb[0].mxu0
    %v1291 = vadd.f32 0.0, %v1290
    %v1292 = vpop.f32.mrb[0].mxu0
    %v1293 = vpop.f32.mrb[0].mxu0
    %v1294 = vpop.f32.mrb[0].mxu0
    %1295 = vdwg.mxu0
    %1296 = vrot.lane.b32.xlu0 %v708, 64
    %v1297 = vpop.permute.xlu0 %1296
    %v1299 = vsel %vm720, %v1193, 0
    %v1302 = vsel %vm1204, %v1297, 0
    %1304 = vmatprep.subr.bf16.mxu0 0
    %1305 = vmatpush1.bf16.msra.mxu0 %v1302
    %1306 = vmatprep.subr.bf16.mxu0 0
    %1307 = vmatpush1.bf16.msra.mxu0 0
    %1308 = vmatprep.subr.bf16.mxu0 0
    %1309 = vmatpush1.bf16.msra.mxu0 0
    %1310 = vmatprep.subr.bf16.mxu0 0
    %1311 = vmatpush1.bf16.msra.mxu0 0
    %1312 = vmatprep.subr.bf16.mxu0 0
    %1313 = vmatpush1.bf16.msra.mxu0 0
    %1314 = vmatprep.subr.bf16.mxu0 0
    %1315 = vmatpush1.bf16.msra.mxu0 0
    %1316 = vmatprep.subr.bf16.mxu0 0
    %1317 = vmatpush1.bf16.msra.mxu0 0
    %1318 = vmatprep.subr.bf16.mxu0 0
    %1319 = vmatpush1.bf16.msra.mxu0 0
    %1320 = vmatprep.subr.bf16.mxu0 0
    %1321 = vmatpush1.bf16.msra.mxu0 0
    %1322 = vmatprep.subr.bf16.mxu0 0
    %1323 = vmatpush1.bf16.msra.mxu0 0
    %1324 = vmatprep.subr.bf16.mxu0 0
    %1325 = vmatpush1.bf16.msra.mxu0 0
    %1326 = vmatprep.subr.bf16.mxu0 0
    %1327 = vmatpush1.bf16.msra.mxu0 0
    %1328 = vmatprep.subr.bf16.mxu0 0
    %1329 = vmatpush1.bf16.msra.mxu0 0
    %1330 = vmatprep.subr.bf16.mxu0 0
    %1331 = vmatpush1.bf16.msra.mxu0 0
    %1332 = vmatprep.subr.bf16.mxu0 0
    %1333 = vmatpush1.bf16.msra.mxu0 0
    %1334 = vmatprep.subr.bf16.mxu0 0
    %1335 = vmatpush1.bf16.msra.mxu0 0
    %1336 = vmatprep.mubr.bf16.mxu0 0
    %1337 = vmatmul.mubr.bf16.gmra.mrb[0].mxu0 %v1299
    %v1338 = vpop.f32.mrb[0].mxu0
    %v1339 = vadd.f32 0.0, %v1338
    %v1340 = vpop.f32.mrb[0].mxu0
    %v1341 = vpop.f32.mrb[0].mxu0
    %v1342 = vpop.f32.mrb[0].mxu0
    %1343 = vdwg.mxu0
    %1344 = vrot.lane.b32.xlu0 %v710, 64
    %v1345 = vpop.permute.xlu0 %1344
    %v1347 = vsel %vm720, %v1194, 0
    %v1350 = vsel %vm1204, %v1345, 0
    %1352 = vmatprep.subr.bf16.mxu0 0
    %1353 = vmatpush1.bf16.msra.mxu0 %v1350
    %1354 = vmatprep.subr.bf16.mxu0 0
    %1355 = vmatpush1.bf16.msra.mxu0 0
    %1356 = vmatprep.subr.bf16.mxu0 0
    %1357 = vmatpush1.bf16.msra.mxu0 0
    %1358 = vmatprep.subr.bf16.mxu0 0
    %1359 = vmatpush1.bf16.msra.mxu0 0
    %1360 = vmatprep.subr.bf16.mxu0 0
    %1361 = vmatpush1.bf16.msra.mxu0 0
    %1362 = vmatprep.subr.bf16.mxu0 0
    %1363 = vmatpush1.bf16.msra.mxu0 0
    %1364 = vmatprep.subr.bf16.mxu0 0
    %1365 = vmatpush1.bf16.msra.mxu0 0
    %1366 = vmatprep.subr.bf16.mxu0 0
    %1367 = vmatpush1.bf16.msra.mxu0 0
    %1368 = vmatprep.subr.bf16.mxu0 0
    %1369 = vmatpush1.bf16.msra.mxu0 0
    %1370 = vmatprep.subr.bf16.mxu0 0
    %1371 = vmatpush1.bf16.msra.mxu0 0
    %1372 = vmatprep.subr.bf16.mxu0 0
    %1373 = vmatpush1.bf16.msra.mxu0 0
    %1374 = vmatprep.subr.bf16.mxu0 0
    %1375 = vmatpush1.bf16.msra.mxu0 0
    %1376 = vmatprep.subr.bf16.mxu0 0
    %1377 = vmatpush1.bf16.msra.mxu0 0
    %1378 = vmatprep.subr.bf16.mxu0 0
    %1379 = vmatpush1.bf16.msra.mxu0 0
    %1380 = vmatprep.subr.bf16.mxu0 0
    %1381 = vmatpush1.bf16.msra.mxu0 0
    %1382 = vmatprep.subr.bf16.mxu0 0
    %1383 = vmatpush1.bf16.msra.mxu0 0
    %1384 = vmatprep.mubr.bf16.mxu0 0
    %1385 = vmatmul.mubr.bf16.gmra.mrb[0].mxu0 %v1347
    %v1386 = vpop.f32.mrb[0].mxu0
    %v1387 = vadd.f32 0.0, %v1386
    %v1388 = vpop.f32.mrb[0].mxu0
    %v1389 = vpop.f32.mrb[0].mxu0
    %v1390 = vpop.f32.mrb[0].mxu0
    %1391 = vdwg.mxu0
    %1392 = vrot.lane.b32.xlu0 %v703, 64
    %v1393 = vpop.permute.xlu0 %1392
    %v1395 = vsel %vm720, %v1195, 0
    %v1398 = vsel %vm1204, %v1393, 0
    %1400 = vmatprep.subr.bf16.mxu0 0
    %1401 = vmatpush1.bf16.msra.mxu0 %v1398
    %1402 = vmatprep.subr.bf16.mxu0 0
    %1403 = vmatpush1.bf16.msra.mxu0 0
    %1404 = vmatprep.subr.bf16.mxu0 0
    %1405 = vmatpush1.bf16.msra.mxu0 0
    %1406 = vmatprep.subr.bf16.mxu0 0
    %1407 = vmatpush1.bf16.msra.mxu0 0
    %1408 = vmatprep.subr.bf16.mxu0 0
    %1409 = vmatpush1.bf16.msra.mxu0 0
    %1410 = vmatprep.subr.bf16.mxu0 0
    %1411 = vmatpush1.bf16.msra.mxu0 0
    %1412 = vmatprep.subr.bf16.mxu0 0
    %1413 = vmatpush1.bf16.msra.mxu0 0
    %1414 = vmatprep.subr.bf16.mxu0 0
    %1415 = vmatpush1.bf16.msra.mxu0 0
    %1416 = vmatprep.subr.bf16.mxu0 0
    %1417 = vmatpush1.bf16.msra.mxu0 0
    %1418 = vmatprep.subr.bf16.mxu0 0
    %1419 = vmatpush1.bf16.msra.mxu0 0
    %1420 = vmatprep.subr.bf16.mxu0 0
    %1421 = vmatpush1.bf16.msra.mxu0 0
    %1422 = vmatprep.subr.bf16.mxu0 0
    %1423 = vmatpush1.bf16.msra.mxu0 0
    %1424 = vmatprep.subr.bf16.mxu0 0
    %1425 = vmatpush1.bf16.msra.mxu0 0
    %1426 = vmatprep.subr.bf16.mxu0 0
    %1427 = vmatpush1.bf16.msra.mxu0 0
    %1428 = vmatprep.subr.bf16.mxu0 0
    %1429 = vmatpush1.bf16.msra.mxu0 0
    %1430 = vmatprep.subr.bf16.mxu0 0
    %1431 = vmatpush1.bf16.msra.mxu0 0
    %1432 = vmatprep.mubr.bf16.mxu0 0
    %1433 = vmatmul.mubr.bf16.gmra.mrb[0].mxu0 %v1395
    %v1434 = vpop.f32.mrb[0].mxu0
    %v1435 = vadd.f32 0.0, %v1434
    %v1436 = vpop.f32.mrb[0].mxu0
    %v1437 = vpop.f32.mrb[0].mxu0
    %v1438 = vpop.f32.mrb[0].mxu0
    %1439 = vdwg.mxu0
    %1440 = vrot.lane.b32.xlu0 %v713, 64
    %v1441 = vpop.permute.xlu0 %1440
    %v1443 = vsel %vm720, %v1196, 0
    %v1446 = vsel %vm1204, %v1441, 0
    %1448 = vmatprep.subr.bf16.mxu0 0
    %1449 = vmatpush1.bf16.msra.mxu0 %v1446
    %1450 = vmatprep.subr.bf16.mxu0 0
    %1451 = vmatpush1.bf16.msra.mxu0 0
    %1452 = vmatprep.subr.bf16.mxu0 0
    %1453 = vmatpush1.bf16.msra.mxu0 0
    %1454 = vmatprep.subr.bf16.mxu0 0
    %1455 = vmatpush1.bf16.msra.mxu0 0
    %1456 = vmatprep.subr.bf16.mxu0 0
    %1457 = vmatpush1.bf16.msra.mxu0 0
    %1458 = vmatprep.subr.bf16.mxu0 0
    %1459 = vmatpush1.bf16.msra.mxu0 0
    %1460 = vmatprep.subr.bf16.mxu0 0
    %1461 = vmatpush1.bf16.msra.mxu0 0
    %1462 = vmatprep.subr.bf16.mxu0 0
    %1463 = vmatpush1.bf16.msra.mxu0 0
    %1464 = vmatprep.subr.bf16.mxu0 0
    %1465 = vmatpush1.bf16.msra.mxu0 0
    %1466 = vmatprep.subr.bf16.mxu0 0
    %1467 = vmatpush1.bf16.msra.mxu0 0
    %1468 = vmatprep.subr.bf16.mxu0 0
    %1469 = vmatpush1.bf16.msra.mxu0 0
    %1470 = vmatprep.subr.bf16.mxu0 0
    %1471 = vmatpush1.bf16.msra.mxu0 0
    %1472 = vmatprep.subr.bf16.mxu0 0
    %1473 = vmatpush1.bf16.msra.mxu0 0
    %1474 = vmatprep.subr.bf16.mxu0 0
    %1475 = vmatpush1.bf16.msra.mxu0 0
    %1476 = vmatprep.subr.bf16.mxu0 0
    %1477 = vmatpush1.bf16.msra.mxu0 0
    %1478 = vmatprep.subr.bf16.mxu0 0
    %1479 = vmatpush1.bf16.msra.mxu0 0
    %1480 = vmatprep.mubr.bf16.mxu0 0
    %1481 = vmatmul.mubr.bf16.gmra.mrb[0].mxu0 %v1443
    %v1482 = vpop.f32.mrb[0].mxu0
    %v1483 = vadd.f32 0.0, %v1482
    %v1484 = vpop.f32.mrb[0].mxu0
    %v1485 = vpop.f32.mrb[0].mxu0
    %v1486 = vpop.f32.mrb[0].mxu0
    %1487 = vdwg.mxu0
    %1488 = vrot.lane.b32.xlu0 %v715, 64
    %v1489 = vpop.permute.xlu0 %1488
    %v1491 = vsel %vm720, %v1197, 0
    %v1494 = vsel %vm1204, %v1489, 0
    %1496 = vmatprep.subr.bf16.mxu0 0
    %1497 = vmatpush1.bf16.msra.mxu0 %v1494
    %1498 = vmatprep.subr.bf16.mxu0 0
    %1499 = vmatpush1.bf16.msra.mxu0 0
    %1500 = vmatprep.subr.bf16.mxu0 0
    %1501 = vmatpush1.bf16.msra.mxu0 0
    %1502 = vmatprep.subr.bf16.mxu0 0
    %1503 = vmatpush1.bf16.msra.mxu0 0
    %1504 = vmatprep.subr.bf16.mxu0 0
    %1505 = vmatpush1.bf16.msra.mxu0 0
    %1506 = vmatprep.subr.bf16.mxu0 0
    %1507 = vmatpush1.bf16.msra.mxu0 0
    %1508 = vmatprep.subr.bf16.mxu0 0
    %1509 = vmatpush1.bf16.msra.mxu0 0
    %1510 = vmatprep.subr.bf16.mxu0 0
    %1511 = vmatpush1.bf16.msra.mxu0 0
    %1512 = vmatprep.subr.bf16.mxu0 0
    %1513 = vmatpush1.bf16.msra.mxu0 0
    %1514 = vmatprep.subr.bf16.mxu0 0
    %1515 = vmatpush1.bf16.msra.mxu0 0
    %1516 = vmatprep.subr.bf16.mxu0 0
    %1517 = vmatpush1.bf16.msra.mxu0 0
    %1518 = vmatprep.subr.bf16.mxu0 0
    %1519 = vmatpush1.bf16.msra.mxu0 0
    %1520 = vmatprep.subr.bf16.mxu0 0
    %1521 = vmatpush1.bf16.msra.mxu0 0
    %1522 = vmatprep.subr.bf16.mxu0 0
    %1523 = vmatpush1.bf16.msra.mxu0 0
    %1524 = vmatprep.subr.bf16.mxu0 0
    %1525 = vmatpush1.bf16.msra.mxu0 0
    %1526 = vmatprep.subr.bf16.mxu0 0
    %1527 = vmatpush1.bf16.msra.mxu0 0
    %1528 = vmatprep.mubr.bf16.mxu0 0
    %1529 = vmatmul.mubr.bf16.gmra.mrb[0].mxu0 %v1491
    %v1530 = vpop.f32.mrb[0].mxu0
    %v1531 = vadd.f32 0.0, %v1530
    %v1532 = vpop.f32.mrb[0].mxu0
    %v1533 = vpop.f32.mrb[0].mxu0
    %v1534 = vpop.f32.mrb[0].mxu0
    %1535 = vdwg.mxu0
    %1536 = vrot.lane.b32.xlu0 %v717, 64
    %v1537 = vpop.permute.xlu0 %1536
    %v1539 = vsel %vm720, %v1198, 0
    %v1542 = vsel %vm1204, %v1537, 0
    %1544 = vmatprep.subr.bf16.mxu0 0
    %1545 = vmatpush1.bf16.msra.mxu0 %v1542
    %1546 = vmatprep.subr.bf16.mxu0 0
    %1547 = vmatpush1.bf16.msra.mxu0 0
    %1548 = vmatprep.subr.bf16.mxu0 0
    %1549 = vmatpush1.bf16.msra.mxu0 0
    %1550 = vmatprep.subr.bf16.mxu0 0
    %1551 = vmatpush1.bf16.msra.mxu0 0
    %1552 = vmatprep.subr.bf16.mxu0 0
    %1553 = vmatpush1.bf16.msra.mxu0 0
    %1554 = vmatprep.subr.bf16.mxu0 0
    %1555 = vmatpush1.bf16.msra.mxu0 0
    %1556 = vmatprep.subr.bf16.mxu0 0
    %1557 = vmatpush1.bf16.msra.mxu0 0
    %1558 = vmatprep.subr.bf16.mxu0 0
    %1559 = vmatpush1.bf16.msra.mxu0 0
    %1560 = vmatprep.subr.bf16.mxu0 0
    %1561 = vmatpush1.bf16.msra.mxu0 0
    %1562 = vmatprep.subr.bf16.mxu0 0
    %1563 = vmatpush1.bf16.msra.mxu0 0
    %1564 = vmatprep.subr.bf16.mxu0 0
    %1565 = vmatpush1.bf16.msra.mxu0 0
    %1566 = vmatprep.subr.bf16.mxu0 0
    %1567 = vmatpush1.bf16.msra.mxu0 0
    %1568 = vmatprep.subr.bf16.mxu0 0
    %1569 = vmatpush1.bf16.msra.mxu0 0
    %1570 = vmatprep.subr.bf16.mxu0 0
    %1571 = vmatpush1.bf16.msra.mxu0 0
    %1572 = vmatprep.subr.bf16.mxu0 0
    %1573 = vmatpush1.bf16.msra.mxu0 0
    %1574 = vmatprep.subr.bf16.mxu0 0
    %1575 = vmatpush1.bf16.msra.mxu0 0
    %1576 = vmatprep.mubr.bf16.mxu0 0
    %1577 = vmatmul.mubr.bf16.gmra.mrb[0].mxu0 %v1539
    %v1578 = vpop.f32.mrb[0].mxu0
    %v1579 = vadd.f32 0.0, %v1578
    %v1580 = vpop.f32.mrb[0].mxu0
    %v1581 = vpop.f32.mrb[0].mxu0
    %v1582 = vpop.f32.mrb[0].mxu0
    %1583 = vdwg.mxu0
    %1585 = vrot.lane.b32.xlu0 %v1291, 8
    %v1586 = vpop.permute.xlu0 %1585
    %1589 = vrot.lane.b32.xlu0 %v1339, 16
    %v1590 = vpop.permute.xlu0 %1589
    %1593 = vrot.lane.b32.xlu0 %v1387, 24
    %v1594 = vpop.permute.xlu0 %1593
    %v1596 = vsel %vm720, %v1243, %v1586
    %vm1597 = vcmask 130048
    %v1598 = vsel %vm1597, %v1596, %v1590
    %vm1599 = vcmask 195584
    %v1600 = vsel %vm1599, %v1598, %v1594
    %1602 = vrot.lane.b32.xlu0 %v1483, 8
    %v1603 = vpop.permute.xlu0 %1602
    %1606 = vrot.lane.b32.xlu0 %v1531, 16
    %v1607 = vpop.permute.xlu0 %1606
    %1610 = vrot.lane.b32.xlu0 %v1579, 24
    %v1611 = vpop.permute.xlu0 %1610
    %v1613 = vsel %vm720, %v1435, %v1603
    %v1614 = vsel %vm1597, %v1613, %v1607
    %v1615 = vsel %vm1599, %v1614, %v1611
    %v1616 = vld [vmem:[%s5] sm:$0xf]
    %v1617 = vld [vmem:[%s5 + $0x4] sm:$0xf]
    %v1618 = vld [vmem:[%s5 + $0x8] sm:$0xf]
    %v1619 = vld [vmem:[%s5 + $0xc] sm:$0xf]
    %v1620 = vpack.c.bf16 %v1615, %v1600
    %v1625 = vunpack.c.l.b16 %v1616
    %v1626 = vunpack.c.l.b16 %v1617
    %v1627 = vunpack.c.l.b16 %v1618
    %v1628 = vunpack.c.l.b16 %v1619
    %v1629 = vpack.c.b16 %v1626, %v1625
    %v1630 = vpack.c.b16 %v1628, %v1627
    %v1634 = vsel %vm594, %v1620, 0
    %1636 = vmatprep.subr.bf16.mxu0 0
    %1637 = vmatpush1.bf16.msra.mxu0 %v1629
    %1638 = vmatprep.subr.bf16.mxu0 0
    %1639 = vmatpush1.bf16.msra.mxu0 %v1630
    %1640 = vmatprep.subr.bf16.mxu0 0
    %1641 = vmatpush1.bf16.msra.mxu0 0
    %1642 = vmatprep.subr.bf16.mxu0 0
    %1643 = vmatpush1.bf16.msra.mxu0 0
    %1644 = vmatprep.subr.bf16.mxu0 0
    %1645 = vmatpush1.bf16.msra.mxu0 0
    %1646 = vmatprep.subr.bf16.mxu0 0
    %1647 = vmatpush1.bf16.msra.mxu0 0
    %1648 = vmatprep.subr.bf16.mxu0 0
    %1649 = vmatpush1.bf16.msra.mxu0 0
    %1650 = vmatprep.subr.bf16.mxu0 0
    %1651 = vmatpush1.bf16.msra.mxu0 0
    %1652 = vmatprep.subr.bf16.mxu0 0
    %1653 = vmatpush1.bf16.msra.mxu0 0
    %1654 = vmatprep.subr.bf16.mxu0 0
    %1655 = vmatpush1.bf16.msra.mxu0 0
    %1656 = vmatprep.subr.bf16.mxu0 0
    %1657 = vmatpush1.bf16.msra.mxu0 0
    %1658 = vmatprep.subr.bf16.mxu0 0
    %1659 = vmatpush1.bf16.msra.mxu0 0
    %1660 = vmatprep.subr.bf16.mxu0 0
    %1661 = vmatpush1.bf16.msra.mxu0 0
    %1662 = vmatprep.subr.bf16.mxu0 0
    %1663 = vmatpush1.bf16.msra.mxu0 0
    %1664 = vmatprep.subr.bf16.mxu0 0
    %1665 = vmatpush1.bf16.msra.mxu0 0
    %1666 = vmatprep.subr.bf16.mxu0 0
    %1667 = vmatpush1.bf16.msra.mxu0 0
    %1668 = vmatprep.mubr.bf16.mxu0 0
    %1669 = vmatmul.mubr.bf16.gmra.mrb[0].mxu0 %v1634
    %v1670 = vpop.f32.mrb[0].mxu0
    %v1671 = vadd.f32 0.0, %v1670
    %v1672 = vpop.f32.mrb[0].mxu0
    %v1673 = vpop.f32.mrb[0].mxu0
    %v1674 = vadd.f32 0.0, %v1673
    %v1675 = vpop.f32.mrb[0].mxu0
    %1676 = vdwg.mxu0
    %v1677 = vadd.f32 %v582, %v1671
    %v1678 = vadd.f32 %v585, %v1674
    %v1679 = vld [vmem:[%s9] sm:$0x1]
    %v1681 = vlaneseq
    %v1682 = vshrl.u32 %v1681, 7
    %v1683 = vsub.s32 0, %v1682
    %v1684 = vrot.slane %v1679, %v1683
    %v1686 = vadd.f32 %v1677, %v1684
    %v1687 = vadd.f32 %v1678, %v1684
    %v1688 = vld [vmem:[%s3 + $0x2] sm:$0x1]
    %v1689 = vld [vmem:[%s3 + $0x3] sm:$0x1]
    %v1690 = vsel %vm594, %v1686, 0.0
    %1691 = vadd.xlane.f32.xlu0 %v1690
    %v1692 = vpop.xlane.xlu0 %1691
    %v1693 = vsel %vm594, %v1687, 0.0
    %1694 = vadd.xlane.f32.xlu0 %v1693
    %v1695 = vpop.xlane.xlu0 %1694
    %v1696 = vmul.f32 %v1692, %v601
    %v1697 = vmul.f32 %v1695, %v601
    %v1698 = vsub.f32 %v1686, %v1696
    %v1699 = vsub.f32 %v1687, %v1697
    %v1700 = vmul.f32 %v1698, %v1698
    %v1701 = vmul.f32 %v1699, %v1699
    %v1702 = vsel %vm594, %v1700, 0.0
    %1703 = vadd.xlane.f32.xlu0 %v1702
    %v1704 = vpop.xlane.xlu0 %1703
    %v1705 = vsel %vm594, %v1701, 0.0
    %1706 = vadd.xlane.f32.xlu0 %v1705
    %v1707 = vpop.xlane.xlu0 %1706
    %v1708 = vmul.f32 %v1704, %v601
    %v1709 = vmul.f32 %v1707, %v601
    %v1710 = vadd.f32 %v1708, 1e-06
    %v1711 = vadd.f32 %v1709, 1e-06
    %v1712 = vrsqrt.pop %v1710
    %v1713 = vrsqrt.pop %v1711
    %v1714 = vmul.f32 %v1698, %v1712
    %v1715 = vmul.f32 %v1699, %v1713
    %v1716 = vlaneseq
    %v1717 = vshrl.u32 %v1716, 7
    %v1718 = vsub.s32 0, %v1717
    %v1719 = vrot.slane %v1688, %v1718
    %v1720 = vmul.f32 %v1714, %v1719
    %v1721 = vmul.f32 %v1715, %v1719
    %v1722 = vlaneseq
    %v1723 = vshrl.u32 %v1722, 7
    %v1724 = vsub.s32 0, %v1723
    %v1725 = vrot.slane %v1689, %v1724
    %v1726 = vadd.f32 %v1720, %v1725
    %v1727 = vadd.f32 %v1721, %v1725
    %v1728 = vld [vmem:[%s6] sm:$0xf]
    %v1729 = vld [vmem:[%s6 + $0x4] sm:$0xf]
    %v1730 = vld [vmem:[%s6 + $0x8] sm:$0xf]
    %v1731 = vld [vmem:[%s6 + $0xc] sm:$0xf]
    %v1732 = vpack.c.bf16 %v1727, %v1726
    %v1733 = vld [vmem:[%s10] sm:$0x1]
    %v1735 = vlaneseq
    %v1736 = vshrl.u32 %v1735, 7
    %v1737 = vsub.s32 0, %v1736
    %v1738 = vrot.slane %v1733, %v1737
    %v1744 = vunpack.c.l.b16 %v1728
    %v1745 = vunpack.c.l.b16 %v1729
    %v1746 = vunpack.c.l.b16 %v1730
    %v1747 = vunpack.c.l.b16 %v1731
    %v1748 = vpack.c.b16 %v1745, %v1744
    %v1749 = vpack.c.b16 %v1747, %v1746
    %v1753 = vsel %vm594, %v1732, 0
    %1755 = vmatprep.subr.bf16.mxu0 0
    %1756 = vmatpush1.bf16.msra.mxu0 %v1748
    %1757 = vmatprep.subr.bf16.mxu0 0
    %1758 = vmatpush1.bf16.msra.mxu0 %v1749
    %1759 = vmatprep.subr.bf16.mxu0 0
    %1760 = vmatpush1.bf16.msra.mxu0 0
    %1761 = vmatprep.subr.bf16.mxu0 0
    %1762 = vmatpush1.bf16.msra.mxu0 0
    %1763 = vmatprep.subr.bf16.mxu0 0
    %1764 = vmatpush1.bf16.msra.mxu0 0
    %1765 = vmatprep.subr.bf16.mxu0 0
    %1766 = vmatpush1.bf16.msra.mxu0 0
    %1767 = vmatprep.subr.bf16.mxu0 0
    %1768 = vmatpush1.bf16.msra.mxu0 0
    %1769 = vmatprep.subr.bf16.mxu0 0
    %1770 = vmatpush1.bf16.msra.mxu0 0
    %1771 = vmatprep.subr.bf16.mxu0 0
    %1772 = vmatpush1.bf16.msra.mxu0 0
    %1773 = vmatprep.subr.bf16.mxu0 0
    %1774 = vmatpush1.bf16.msra.mxu0 0
    %1775 = vmatprep.subr.bf16.mxu0 0
    %1776 = vmatpush1.bf16.msra.mxu0 0
    %1777 = vmatprep.subr.bf16.mxu0 0
    %1778 = vmatpush1.bf16.msra.mxu0 0
    %1779 = vmatprep.subr.bf16.mxu0 0
    %1780 = vmatpush1.bf16.msra.mxu0 0
    %1781 = vmatprep.subr.bf16.mxu0 0
    %1782 = vmatpush1.bf16.msra.mxu0 0
    %1783 = vmatprep.subr.bf16.mxu0 0
    %1784 = vmatpush1.bf16.msra.mxu0 0
    %1785 = vmatprep.subr.bf16.mxu0 0
    %1786 = vmatpush1.bf16.msra.mxu0 0
    %1787 = vmatprep.mubr.bf16.mxu0 0
    %1788 = vmatmul.mubr.bf16.gmra.mrb[0].mxu0 %v1753
    %v1789 = vpop.f32.mrb[0].mxu0
    %v1790 = vadd.f32 %v1738, %v1789
    %v1791 = vpop.f32.mrb[0].mxu0
    %v1792 = vpop.f32.mrb[0].mxu0
    %v1793 = vadd.f32 %v1738, %v1792
    %v1794 = vpop.f32.mrb[0].mxu0
    %1795 = vdwg.mxu0
    %v1796 = vmul.f32 %v1790, 0.5
    %v1797 = vmul.f32 %v1793, 0.5
    %v1798 = vmul.f32 %v1790, 0.044715
    %v1799 = vmul.f32 %v1793, 0.044715
    %v1800 = vmul.f32 %v1798, %v1790
    %v1801 = vmul.f32 %v1799, %v1793
    %v1802 = vmul.f32 %v1800, %v1790
    %v1803 = vmul.f32 %v1801, %v1793
    %v1804 = vadd.f32 %v1790, %v1802
    %v1805 = vadd.f32 %v1793, %v1803
    %v1806 = vmul.f32 %v1804, 0.7978846
    %v1807 = vmul.f32 %v1805, 0.7978846
    %v1808 = vtanh.pop %v1806
    %v1809 = vtanh.pop %v1807
    %v1810 = vadd.f32 %v1808, 1.0
    %v1811 = vadd.f32 %v1809, 1.0
    %v1812 = vmul.f32 %v1796, %v1810
    %v1813 = vmul.f32 %v1797, %v1811
    %v1814 = vld [vmem:[%s7] sm:$0xf]
    %v1815 = vld [vmem:[%s7 + $0x4] sm:$0xf]
    %v1816 = vld [vmem:[%s7 + $0x8] sm:$0xf]
    %v1817 = vld [vmem:[%s7 + $0xc] sm:$0xf]
    %v1818 = vld [vmem:[%s7 + $0x10] sm:$0xf]
    %v1819 = vld [vmem:[%s7 + $0x14] sm:$0xf]
    %v1820 = vld [vmem:[%s7 + $0x18] sm:$0xf]
    %v1821 = vld [vmem:[%s7 + $0x1c] sm:$0xf]
    %v1822 = vld [vmem:[%s7 + $0x20] sm:$0xf]
    %v1823 = vld [vmem:[%s7 + $0x24] sm:$0xf]
    %v1824 = vld [vmem:[%s7 + $0x28] sm:$0xf]
    %v1825 = vld [vmem:[%s7 + $0x2c] sm:$0xf]
    %v1826 = vld [vmem:[%s7 + $0x30] sm:$0xf]
    %v1827 = vld [vmem:[%s7 + $0x34] sm:$0xf]
    %v1828 = vld [vmem:[%s7 + $0x38] sm:$0xf]
    %v1829 = vld [vmem:[%s7 + $0x3c] sm:$0xf]
    %v1830 = vpack.c.bf16 %v1813, %v1812
    %v1847 = vunpack.c.l.b16 %v1814
    %v1848 = vunpack.c.l.b16 %v1815
    %v1849 = vunpack.c.l.b16 %v1816
    %v1850 = vunpack.c.l.b16 %v1817
    %v1851 = vunpack.c.l.b16 %v1818
    %v1852 = vunpack.c.l.b16 %v1819
    %v1853 = vunpack.c.l.b16 %v1820
    %v1854 = vunpack.c.l.b16 %v1821
    %v1855 = vunpack.c.l.b16 %v1822
    %v1856 = vunpack.c.l.b16 %v1823
    %v1857 = vunpack.c.l.b16 %v1824
    %v1858 = vunpack.c.l.b16 %v1825
    %v1859 = vunpack.c.l.b16 %v1826
    %v1860 = vunpack.c.l.b16 %v1827
    %v1861 = vunpack.c.l.b16 %v1828
    %v1862 = vunpack.c.l.b16 %v1829
    %v1863 = vpack.c.b16 %v1848, %v1847
    %v1864 = vpack.c.b16 %v1850, %v1849
    %v1865 = vpack.c.b16 %v1852, %v1851
    %v1866 = vpack.c.b16 %v1854, %v1853
    %v1867 = vpack.c.b16 %v1856, %v1855
    %v1868 = vpack.c.b16 %v1858, %v1857
    %v1869 = vpack.c.b16 %v1860, %v1859
    %v1870 = vpack.c.b16 %v1862, %v1861
    %1879 = vmatprep.subr.bf16.mxu0 0
    %1880 = vmatpush1.bf16.msra.mxu0 %v1863
    %1881 = vmatprep.subr.bf16.mxu0 0
    %1882 = vmatpush1.bf16.msra.mxu0 %v1864
    %1883 = vmatprep.subr.bf16.mxu0 0
    %1884 = vmatpush1.bf16.msra.mxu0 %v1865
    %1885 = vmatprep.subr.bf16.mxu0 0
    %1886 = vmatpush1.bf16.msra.mxu0 %v1866
    %1887 = vmatprep.subr.bf16.mxu0 0
    %1888 = vmatpush1.bf16.msra.mxu0 %v1867
    %1889 = vmatprep.subr.bf16.mxu0 0
    %1890 = vmatpush1.bf16.msra.mxu0 %v1868
    %1891 = vmatprep.subr.bf16.mxu0 0
    %1892 = vmatpush1.bf16.msra.mxu0 %v1869
    %1893 = vmatprep.subr.bf16.mxu0 0
    %1894 = vmatpush1.bf16.msra.mxu0 %v1870
    %1895 = vmatprep.subr.bf16.mxu0 0
    %1896 = vmatpush1.bf16.msra.mxu0 0
    %1897 = vmatprep.subr.bf16.mxu0 0
    %1898 = vmatpush1.bf16.msra.mxu0 0
    %1899 = vmatprep.subr.bf16.mxu0 0
    %1900 = vmatpush1.bf16.msra.mxu0 0
    %1901 = vmatprep.subr.bf16.mxu0 0
    %1902 = vmatpush1.bf16.msra.mxu0 0
    %1903 = vmatprep.subr.bf16.mxu0 0
    %1904 = vmatpush1.bf16.msra.mxu0 0
    %1905 = vmatprep.subr.bf16.mxu0 0
    %1906 = vmatpush1.bf16.msra.mxu0 0
    %1907 = vmatprep.subr.bf16.mxu0 0
    %1908 = vmatpush1.bf16.msra.mxu0 0
    %1909 = vmatprep.subr.bf16.mxu0 0
    %1910 = vmatpush1.bf16.msra.mxu0 0
    %1911 = vmatprep.mubr.bf16.mxu0 0
    %1912 = vmatmul.mubr.bf16.gmra.mrb[0].mxu0 %v1830
    %v1913 = vpop.f32.mrb[0].mxu0
    %v1914 = vadd.f32 0.0, %v1913
    %v1915 = vpop.f32.mrb[0].mxu0
    %v1916 = vpop.f32.mrb[0].mxu0
    %v1917 = vadd.f32 0.0, %v1916
    %v1918 = vpop.f32.mrb[0].mxu0
    %1919 = vdwg.mxu0
    %v1920 = vadd.f32 %v1686, %v1914
    %v1921 = vadd.f32 %v1687, %v1917
    %v1922 = vld [vmem:[%s11] sm:$0x1]
    %v1924 = vlaneseq
    %v1925 = vshrl.u32 %v1924, 7
    %v1926 = vsub.s32 0, %v1925
    %v1927 = vrot.slane %v1922, %v1926
    %v1929 = vadd.f32 %v1920, %v1927
    %v1930 = vadd.f32 %v1921, %v1927
    %v1931 = vld [vmem:[%s3 + $0x4] sm:$0x1]
    %v1932 = vld [vmem:[%s3 + $0x5] sm:$0x1]
    %v1933 = vsel %vm594, %v1929, 0.0
    %1934 = vadd.xlane.f32.xlu0 %v1933
    %v1935 = vpop.xlane.xlu0 %1934
    %v1936 = vsel %vm594, %v1930, 0.0
    %1937 = vadd.xlane.f32.xlu0 %v1936
    %v1938 = vpop.xlane.xlu0 %1937
    %v1939 = vmul.f32 %v1935, %v601
    %v1940 = vmul.f32 %v1938, %v601
    %v1941 = vsub.f32 %v1929, %v1939
    %v1942 = vsub.f32 %v1930, %v1940
    %v1943 = vmul.f32 %v1941, %v1941
    %v1944 = vmul.f32 %v1942, %v1942
    %v1945 = vsel %vm594, %v1943, 0.0
    %1946 = vadd.xlane.f32.xlu0 %v1945
    %v1947 = vpop.xlane.xlu0 %1946
    %v1948 = vsel %vm594, %v1944, 0.0
    %1949 = vadd.xlane.f32.xlu0 %v1948
    %v1950 = vpop.xlane.xlu0 %1949
    %v1951 = vmul.f32 %v1947, %v601
    %v1952 = vmul.f32 %v1950, %v601
    %v1953 = vadd.f32 %v1951, 1e-06
    %v1954 = vadd.f32 %v1952, 1e-06
    %v1955 = vrsqrt.pop %v1953
    %v1956 = vrsqrt.pop %v1954
    %v1957 = vmul.f32 %v1941, %v1955
    %v1958 = vmul.f32 %v1942, %v1956
    %v1959 = vlaneseq
    %v1960 = vshrl.u32 %v1959, 7
    %v1961 = vsub.s32 0, %v1960
    %v1962 = vrot.slane %v1931, %v1961
    %v1963 = vmul.f32 %v1957, %v1962
    %v1964 = vmul.f32 %v1958, %v1962
    %v1965 = vlaneseq
    %v1966 = vshrl.u32 %v1965, 7
    %v1967 = vsub.s32 0, %v1966
    %v1968 = vrot.slane %v1932, %v1967
    %v1969 = vadd.f32 %v1963, %v1968
    %v1970 = vadd.f32 %v1964, %v1968
    %s1971 = scalar_lea.vmem %s4, 16
    %v1972 = vld [vmem:[%s1971] sm:$0xf]
    %v1973 = vld [vmem:[%s1971 + $0x4] sm:$0xf]
    %v1974 = vld [vmem:[%s1971 + $0x8] sm:$0xf]
    %v1975 = vld [vmem:[%s1971 + $0xc] sm:$0xf]
    %v1976 = vpack.c.bf16 %v1970, %v1969
    %s1977 = scalar_lea.vmem %s8, 1
    %v1978 = vld [vmem:[%s1977] sm:$0x1]
    %v1980 = vlaneseq
    %v1981 = vshrl.u32 %v1980, 7
    %v1982 = vsub.s32 0, %v1981
    %v1983 = vrot.slane %v1978, %v1982
    %v1989 = vunpack.c.l.b16 %v1972
    %v1990 = vunpack.c.l.b16 %v1973
    %v1991 = vunpack.c.l.b16 %v1974
    %v1992 = vunpack.c.l.b16 %v1975
    %v1993 = vpack.c.b16 %v1990, %v1989
    %v1994 = vpack.c.b16 %v1992, %v1991
    %v1998 = vsel %vm594, %v1976, 0
    %2000 = vmatprep.subr.bf16.mxu0 0
    %2001 = vmatpush1.bf16.msra.mxu0 %v1993
    %2002 = vmatprep.subr.bf16.mxu0 0
    %2003 = vmatpush1.bf16.msra.mxu0 %v1994
    %2004 = vmatprep.subr.bf16.mxu0 0
    %2005 = vmatpush1.bf16.msra.mxu0 0
    %2006 = vmatprep.subr.bf16.mxu0 0
    %2007 = vmatpush1.bf16.msra.mxu0 0
    %2008 = vmatprep.subr.bf16.mxu0 0
    %2009 = vmatpush1.bf16.msra.mxu0 0
    %2010 = vmatprep.subr.bf16.mxu0 0
    %2011 = vmatpush1.bf16.msra.mxu0 0
    %2012 = vmatprep.subr.bf16.mxu0 0
    %2013 = vmatpush1.bf16.msra.mxu0 0
    %2014 = vmatprep.subr.bf16.mxu0 0
    %2015 = vmatpush1.bf16.msra.mxu0 0
    %2016 = vmatprep.subr.bf16.mxu0 0
    %2017 = vmatpush1.bf16.msra.mxu0 0
    %2018 = vmatprep.subr.bf16.mxu0 0
    %2019 = vmatpush1.bf16.msra.mxu0 0
    %2020 = vmatprep.subr.bf16.mxu0 0
    %2021 = vmatpush1.bf16.msra.mxu0 0
    %2022 = vmatprep.subr.bf16.mxu0 0
    %2023 = vmatpush1.bf16.msra.mxu0 0
    %2024 = vmatprep.subr.bf16.mxu0 0
    %2025 = vmatpush1.bf16.msra.mxu0 0
    %2026 = vmatprep.subr.bf16.mxu0 0
    %2027 = vmatpush1.bf16.msra.mxu0 0
    %2028 = vmatprep.subr.bf16.mxu0 0
    %2029 = vmatpush1.bf16.msra.mxu0 0
    %2030 = vmatprep.subr.bf16.mxu0 0
    %2031 = vmatpush1.bf16.msra.mxu0 0
    %2032 = vmatprep.mubr.bf16.mxu0 0
    %2033 = vmatmul.mubr.bf16.gmra.mrb[0].mxu0 %v1998
    %v2034 = vpop.f32.mrb[0].mxu0
    %v2035 = vadd.f32 %v1983, %v2034
    %v2036 = vpop.f32.mrb[0].mxu0
    %v2037 = vpop.f32.mrb[0].mxu0
    %v2038 = vadd.f32 %v1983, %v2037
    %v2039 = vpop.f32.mrb[0].mxu0
    %2040 = vdwg.mxu0
    %v2041 = vpack.c.bf16 %v2035, %v2035
    %v2042 = vpack.c.bf16 %v2038, %v2038
    %2044 = vrot.lane.b32.xlu0 %v2041, 120
    %v2045 = vpop.permute.xlu0 %2044
    %2046 = vrot.lane.b32.xlu0 %v2041, 112
    %v2047 = vpop.permute.xlu0 %2046
    %2048 = vrot.lane.b32.xlu0 %v2041, 104
    %v2049 = vpop.permute.xlu0 %2048
    %2051 = vrot.lane.b32.xlu0 %v2042, 120
    %v2052 = vpop.permute.xlu0 %2051
    %2053 = vrot.lane.b32.xlu0 %v2042, 112
    %v2054 = vpop.permute.xlu0 %2053
    %2055 = vrot.lane.b32.xlu0 %v2042, 104
    %v2056 = vpop.permute.xlu0 %2055
    %2057 = vrot.lane.b32.xlu0 %v2041, 96
    %v2058 = vpop.permute.xlu0 %2057
    %v2060 = vsel %vm720, %v2041, 0
    %v2063 = vsel %vm720, %v2058, 0
    %2065 = vmatprep.subr.bf16.mxu0 0
    %2066 = vmatpush1.bf16.xpose.msra.mxu0 %v2063
    %2067 = vmatprep.subr.bf16.mxu0 0
    %2068 = vmatpush1.bf16.xpose.msra.mxu0 0
    %2069 = vmatprep.subr.bf16.mxu0 0
    %2070 = vmatpush1.bf16.xpose.msra.mxu0 0
    %2071 = vmatprep.subr.bf16.mxu0 0
    %2072 = vmatpush1.bf16.xpose.msra.mxu0 0
    %2073 = vmatprep.subr.bf16.mxu0 0
    %2074 = vmatpush1.bf16.xpose.msra.mxu0 0
    %2075 = vmatprep.subr.bf16.mxu0 0
    %2076 = vmatpush1.bf16.xpose.msra.mxu0 0
    %2077 = vmatprep.subr.bf16.mxu0 0
    %2078 = vmatpush1.bf16.xpose.msra.mxu0 0
    %2079 = vmatprep.subr.bf16.mxu0 0
    %2080 = vmatpush1.bf16.xpose.msra.mxu0 0
    %2081 = vmatprep.subr.bf16.mxu0 0
    %2082 = vmatpush1.bf16.xpose.msra.mxu0 0
    %2083 = vmatprep.subr.bf16.mxu0 0
    %2084 = vmatpush1.bf16.xpose.msra.mxu0 0
    %2085 = vmatprep.subr.bf16.mxu0 0
    %2086 = vmatpush1.bf16.xpose.msra.mxu0 0
    %2087 = vmatprep.subr.bf16.mxu0 0
    %2088 = vmatpush1.bf16.xpose.msra.mxu0 0
    %2089 = vmatprep.subr.bf16.mxu0 0
    %2090 = vmatpush1.bf16.xpose.msra.mxu0 0
    %2091 = vmatprep.subr.bf16.mxu0 0
    %2092 = vmatpush1.bf16.xpose.msra.mxu0 0
    %2093 = vmatprep.subr.bf16.mxu0 0
    %2094 = vmatpush1.bf16.xpose.msra.mxu0 0
    %2095 = vmatprep.subr.bf16.mxu0 0
    %2096 = vmatpush1.bf16.xpose.msra.mxu0 0
    %2097 = vmatprep.mubr.bf16.mxu0 0
    %2098 = vmatmul.mubr.bf16.gmra.mrb[0].mxu0 %v2060
    %v2099 = vpop.f32.mrb[0].mxu0
    %v2100 = vadd.f32 %v591, %v2099
    %v2101 = vpop.f32.mrb[0].mxu0
    %v2102 = vpop.f32.mrb[0].mxu0
    %v2103 = vpop.f32.mrb[0].mxu0
    %2104 = vdwg.mxu0
    %2105 = vrot.lane.b32.xlu0 %v2045, 96
    %v2106 = vpop.permute.xlu0 %2105
    %v2108 = vsel %vm720, %v2045, 0
    %v2111 = vsel %vm720, %v2106, 0
    %2113 = vmatprep.subr.bf16.mxu0 0
    %2114 = vmatpush1.bf16.xpose.msra.mxu0 %v2111
    %2115 = vmatprep.subr.bf16.mxu0 0
    %2116 = vmatpush1.bf16.xpose.msra.mxu0 0
    %2117 = vmatprep.subr.bf16.mxu0 0
    %2118 = vmatpush1.bf16.xpose.msra.mxu0 0
    %2119 = vmatprep.subr.bf16.mxu0 0
    %2120 = vmatpush1.bf16.xpose.msra.mxu0 0
    %2121 = vmatprep.subr.bf16.mxu0 0
    %2122 = vmatpush1.bf16.xpose.msra.mxu0 0
    %2123 = vmatprep.subr.bf16.mxu0 0
    %2124 = vmatpush1.bf16.xpose.msra.mxu0 0
    %2125 = vmatprep.subr.bf16.mxu0 0
    %2126 = vmatpush1.bf16.xpose.msra.mxu0 0
    %2127 = vmatprep.subr.bf16.mxu0 0
    %2128 = vmatpush1.bf16.xpose.msra.mxu0 0
    %2129 = vmatprep.subr.bf16.mxu0 0
    %2130 = vmatpush1.bf16.xpose.msra.mxu0 0
    %2131 = vmatprep.subr.bf16.mxu0 0
    %2132 = vmatpush1.bf16.xpose.msra.mxu0 0
    %2133 = vmatprep.subr.bf16.mxu0 0
    %2134 = vmatpush1.bf16.xpose.msra.mxu0 0
    %2135 = vmatprep.subr.bf16.mxu0 0
    %2136 = vmatpush1.bf16.xpose.msra.mxu0 0
    %2137 = vmatprep.subr.bf16.mxu0 0
    %2138 = vmatpush1.bf16.xpose.msra.mxu0 0
    %2139 = vmatprep.subr.bf16.mxu0 0
    %2140 = vmatpush1.bf16.xpose.msra.mxu0 0
    %2141 = vmatprep.subr.bf16.mxu0 0
    %2142 = vmatpush1.bf16.xpose.msra.mxu0 0
    %2143 = vmatprep.subr.bf16.mxu0 0
    %2144 = vmatpush1.bf16.xpose.msra.mxu0 0
    %2145 = vmatprep.mubr.bf16.mxu0 0
    %2146 = vmatmul.mubr.bf16.gmra.mrb[0].mxu0 %v2108
    %v2147 = vpop.f32.mrb[0].mxu0
    %v2148 = vadd.f32 %v591, %v2147
    %v2149 = vpop.f32.mrb[0].mxu0
    %v2150 = vpop.f32.mrb[0].mxu0
    %v2151 = vpop.f32.mrb[0].mxu0
    %2152 = vdwg.mxu0
    %2153 = vrot.lane.b32.xlu0 %v2047, 96
    %v2154 = vpop.permute.xlu0 %2153
    %v2156 = vsel %vm720, %v2047, 0
    %v2159 = vsel %vm720, %v2154, 0
    %2161 = vmatprep.subr.bf16.mxu0 0
    %2162 = vmatpush1.bf16.xpose.msra.mxu0 %v2159
    %2163 = vmatprep.subr.bf16.mxu0 0
    %2164 = vmatpush1.bf16.xpose.msra.mxu0 0
    %2165 = vmatprep.subr.bf16.mxu0 0
    %2166 = vmatpush1.bf16.xpose.msra.mxu0 0
    %2167 = vmatprep.subr.bf16.mxu0 0
    %2168 = vmatpush1.bf16.xpose.msra.mxu0 0
    %2169 = vmatprep.subr.bf16.mxu0 0
    %2170 = vmatpush1.bf16.xpose.msra.mxu0 0
    %2171 = vmatprep.subr.bf16.mxu0 0
    %2172 = vmatpush1.bf16.xpose.msra.mxu0 0
    %2173 = vmatprep.subr.bf16.mxu0 0
    %2174 = vmatpush1.bf16.xpose.msra.mxu0 0
    %2175 = vmatprep.subr.bf16.mxu0 0
    %2176 = vmatpush1.bf16.xpose.msra.mxu0 0
    %2177 = vmatprep.subr.bf16.mxu0 0
    %2178 = vmatpush1.bf16.xpose.msra.mxu0 0
    %2179 = vmatprep.subr.bf16.mxu0 0
    %2180 = vmatpush1.bf16.xpose.msra.mxu0 0
    %2181 = vmatprep.subr.bf16.mxu0 0
    %2182 = vmatpush1.bf16.xpose.msra.mxu0 0
    %2183 = vmatprep.subr.bf16.mxu0 0
    %2184 = vmatpush1.bf16.xpose.msra.mxu0 0
    %2185 = vmatprep.subr.bf16.mxu0 0
    %2186 = vmatpush1.bf16.xpose.msra.mxu0 0
    %2187 = vmatprep.subr.bf16.mxu0 0
    %2188 = vmatpush1.bf16.xpose.msra.mxu0 0
    %2189 = vmatprep.subr.bf16.mxu0 0
    %2190 = vmatpush1.bf16.xpose.msra.mxu0 0
    %2191 = vmatprep.subr.bf16.mxu0 0
    %2192 = vmatpush1.bf16.xpose.msra.mxu0 0
    %2193 = vmatprep.mubr.bf16.mxu0 0
    %2194 = vmatmul.mubr.bf16.gmra.mrb[0].mxu0 %v2156
    %v2195 = vpop.f32.mrb[0].mxu0
    %v2196 = vadd.f32 %v591, %v2195
    %v2197 = vpop.f32.mrb[0].mxu0
    %v2198 = vpop.f32.mrb[0].mxu0
    %v2199 = vpop.f32.mrb[0].mxu0
    %2200 = vdwg.mxu0
    %2201 = vrot.lane.b32.xlu0 %v2049, 96
    %v2202 = vpop.permute.xlu0 %2201
    %v2204 = vsel %vm720, %v2049, 0
    %v2207 = vsel %vm720, %v2202, 0
    %2209 = vmatprep.subr.bf16.mxu0 0
    %2210 = vmatpush1.bf16.xpose.msra.mxu0 %v2207
    %2211 = vmatprep.subr.bf16.mxu0 0
    %2212 = vmatpush1.bf16.xpose.msra.mxu0 0
    %2213 = vmatprep.subr.bf16.mxu0 0
    %2214 = vmatpush1.bf16.xpose.msra.mxu0 0
    %2215 = vmatprep.subr.bf16.mxu0 0
    %2216 = vmatpush1.bf16.xpose.msra.mxu0 0
    %2217 = vmatprep.subr.bf16.mxu0 0
    %2218 = vmatpush1.bf16.xpose.msra.mxu0 0
    %2219 = vmatprep.subr.bf16.mxu0 0
    %2220 = vmatpush1.bf16.xpose.msra.mxu0 0
    %2221 = vmatprep.subr.bf16.mxu0 0
    %2222 = vmatpush1.bf16.xpose.msra.mxu0 0
    %2223 = vmatprep.subr.bf16.mxu0 0
    %2224 = vmatpush1.bf16.xpose.msra.mxu0 0
    %2225 = vmatprep.subr.bf16.mxu0 0
    %2226 = vmatpush1.bf16.xpose.msra.mxu0 0
    %2227 = vmatprep.subr.bf16.mxu0 0
    %2228 = vmatpush1.bf16.xpose.msra.mxu0 0
    %2229 = vmatprep.subr.bf16.mxu0 0
    %2230 = vmatpush1.bf16.xpose.msra.mxu0 0
    %2231 = vmatprep.subr.bf16.mxu0 0
    %2232 = vmatpush1.bf16.xpose.msra.mxu0 0
    %2233 = vmatprep.subr.bf16.mxu0 0
    %2234 = vmatpush1.bf16.xpose.msra.mxu0 0
    %2235 = vmatprep.subr.bf16.mxu0 0
    %2236 = vmatpush1.bf16.xpose.msra.mxu0 0
    %2237 = vmatprep.subr.bf16.mxu0 0
    %2238 = vmatpush1.bf16.xpose.msra.mxu0 0
    %2239 = vmatprep.subr.bf16.mxu0 0
    %2240 = vmatpush1.bf16.xpose.msra.mxu0 0
    %2241 = vmatprep.mubr.bf16.mxu0 0
    %2242 = vmatmul.mubr.bf16.gmra.mrb[0].mxu0 %v2204
    %v2243 = vpop.f32.mrb[0].mxu0
    %v2244 = vadd.f32 %v591, %v2243
    %v2245 = vpop.f32.mrb[0].mxu0
    %v2246 = vpop.f32.mrb[0].mxu0
    %v2247 = vpop.f32.mrb[0].mxu0
    %2248 = vdwg.mxu0
    %2249 = vrot.lane.b32.xlu0 %v2042, 96
    %v2250 = vpop.permute.xlu0 %2249
    %v2252 = vsel %vm720, %v2042, 0
    %v2255 = vsel %vm720, %v2250, 0
    %2257 = vmatprep.subr.bf16.mxu0 0
    %2258 = vmatpush1.bf16.xpose.msra.mxu0 %v2255
    %2259 = vmatprep.subr.bf16.mxu0 0
    %2260 = vmatpush1.bf16.xpose.msra.mxu0 0
    %2261 = vmatprep.subr.bf16.mxu0 0
    %2262 = vmatpush1.bf16.xpose.msra.mxu0 0
    %2263 = vmatprep.subr.bf16.mxu0 0
    %2264 = vmatpush1.bf16.xpose.msra.mxu0 0
    %2265 = vmatprep.subr.bf16.mxu0 0
    %2266 = vmatpush1.bf16.xpose.msra.mxu0 0
    %2267 = vmatprep.subr.bf16.mxu0 0
    %2268 = vmatpush1.bf16.xpose.msra.mxu0 0
    %2269 = vmatprep.subr.bf16.mxu0 0
    %2270 = vmatpush1.bf16.xpose.msra.mxu0 0
    %2271 = vmatprep.subr.bf16.mxu0 0
    %2272 = vmatpush1.bf16.xpose.msra.mxu0 0
    %2273 = vmatprep.subr.bf16.mxu0 0
    %2274 = vmatpush1.bf16.xpose.msra.mxu0 0
    %2275 = vmatprep.subr.bf16.mxu0 0
    %2276 = vmatpush1.bf16.xpose.msra.mxu0 0
    %2277 = vmatprep.subr.bf16.mxu0 0
    %2278 = vmatpush1.bf16.xpose.msra.mxu0 0
    %2279 = vmatprep.subr.bf16.mxu0 0
    %2280 = vmatpush1.bf16.xpose.msra.mxu0 0
    %2281 = vmatprep.subr.bf16.mxu0 0
    %2282 = vmatpush1.bf16.xpose.msra.mxu0 0
    %2283 = vmatprep.subr.bf16.mxu0 0
    %2284 = vmatpush1.bf16.xpose.msra.mxu0 0
    %2285 = vmatprep.subr.bf16.mxu0 0
    %2286 = vmatpush1.bf16.xpose.msra.mxu0 0
    %2287 = vmatprep.subr.bf16.mxu0 0
    %2288 = vmatpush1.bf16.xpose.msra.mxu0 0
    %2289 = vmatprep.mubr.bf16.mxu0 0
    %2290 = vmatmul.mubr.bf16.gmra.mrb[0].mxu0 %v2252
    %v2291 = vpop.f32.mrb[0].mxu0
    %v2292 = vadd.f32 %v591, %v2291
    %v2293 = vpop.f32.mrb[0].mxu0
    %v2294 = vpop.f32.mrb[0].mxu0
    %v2295 = vpop.f32.mrb[0].mxu0
    %2296 = vdwg.mxu0
    %2297 = vrot.lane.b32.xlu0 %v2052, 96
    %v2298 = vpop.permute.xlu0 %2297
    %v2300 = vsel %vm720, %v2052, 0
    %v2303 = vsel %vm720, %v2298, 0
    %2305 = vmatprep.subr.bf16.mxu0 0
    %2306 = vmatpush1.bf16.xpose.msra.mxu0 %v2303
    %2307 = vmatprep.subr.bf16.mxu0 0
    %2308 = vmatpush1.bf16.xpose.msra.mxu0 0
    %2309 = vmatprep.subr.bf16.mxu0 0
    %2310 = vmatpush1.bf16.xpose.msra.mxu0 0
    %2311 = vmatprep.subr.bf16.mxu0 0
    %2312 = vmatpush1.bf16.xpose.msra.mxu0 0
    %2313 = vmatprep.subr.bf16.mxu0 0
    %2314 = vmatpush1.bf16.xpose.msra.mxu0 0
    %2315 = vmatprep.subr.bf16.mxu0 0
    %2316 = vmatpush1.bf16.xpose.msra.mxu0 0
    %2317 = vmatprep.subr.bf16.mxu0 0
    %2318 = vmatpush1.bf16.xpose.msra.mxu0 0
    %2319 = vmatprep.subr.bf16.mxu0 0
    %2320 = vmatpush1.bf16.xpose.msra.mxu0 0
    %2321 = vmatprep.subr.bf16.mxu0 0
    %2322 = vmatpush1.bf16.xpose.msra.mxu0 0
    %2323 = vmatprep.subr.bf16.mxu0 0
    %2324 = vmatpush1.bf16.xpose.msra.mxu0 0
    %2325 = vmatprep.subr.bf16.mxu0 0
    %2326 = vmatpush1.bf16.xpose.msra.mxu0 0
    %2327 = vmatprep.subr.bf16.mxu0 0
    %2328 = vmatpush1.bf16.xpose.msra.mxu0 0
    %2329 = vmatprep.subr.bf16.mxu0 0
    %2330 = vmatpush1.bf16.xpose.msra.mxu0 0
    %2331 = vmatprep.subr.bf16.mxu0 0
    %2332 = vmatpush1.bf16.xpose.msra.mxu0 0
    %2333 = vmatprep.subr.bf16.mxu0 0
    %2334 = vmatpush1.bf16.xpose.msra.mxu0 0
    %2335 = vmatprep.subr.bf16.mxu0 0
    %2336 = vmatpush1.bf16.xpose.msra.mxu0 0
    %2337 = vmatprep.mubr.bf16.mxu0 0
    %2338 = vmatmul.mubr.bf16.gmra.mrb[0].mxu0 %v2300
    %v2339 = vpop.f32.mrb[0].mxu0
    %v2340 = vadd.f32 %v591, %v2339
    %v2341 = vpop.f32.mrb[0].mxu0
    %v2342 = vpop.f32.mrb[0].mxu0
    %v2343 = vpop.f32.mrb[0].mxu0
    %2344 = vdwg.mxu0
    %2345 = vrot.lane.b32.xlu0 %v2054, 96
    %v2346 = vpop.permute.xlu0 %2345
    %v2348 = vsel %vm720, %v2054, 0
    %v2351 = vsel %vm720, %v2346, 0
    %2353 = vmatprep.subr.bf16.mxu0 0
    %2354 = vmatpush1.bf16.xpose.msra.mxu0 %v2351
    %2355 = vmatprep.subr.bf16.mxu0 0
    %2356 = vmatpush1.bf16.xpose.msra.mxu0 0
    %2357 = vmatprep.subr.bf16.mxu0 0
    %2358 = vmatpush1.bf16.xpose.msra.mxu0 0
    %2359 = vmatprep.subr.bf16.mxu0 0
    %2360 = vmatpush1.bf16.xpose.msra.mxu0 0
    %2361 = vmatprep.subr.bf16.mxu0 0
    %2362 = vmatpush1.bf16.xpose.msra.mxu0 0
    %2363 = vmatprep.subr.bf16.mxu0 0
    %2364 = vmatpush1.bf16.xpose.msra.mxu0 0
    %2365 = vmatprep.subr.bf16.mxu0 0
    %2366 = vmatpush1.bf16.xpose.msra.mxu0 0
    %2367 = vmatprep.subr.bf16.mxu0 0
    %2368 = vmatpush1.bf16.xpose.msra.mxu0 0
    %2369 = vmatprep.subr.bf16.mxu0 0
    %2370 = vmatpush1.bf16.xpose.msra.mxu0 0
    %2371 = vmatprep.subr.bf16.mxu0 0
    %2372 = vmatpush1.bf16.xpose.msra.mxu0 0
    %2373 = vmatprep.subr.bf16.mxu0 0
    %2374 = vmatpush1.bf16.xpose.msra.mxu0 0
    %2375 = vmatprep.subr.bf16.mxu0 0
    %2376 = vmatpush1.bf16.xpose.msra.mxu0 0
    %2377 = vmatprep.subr.bf16.mxu0 0
    %2378 = vmatpush1.bf16.xpose.msra.mxu0 0
    %2379 = vmatprep.subr.bf16.mxu0 0
    %2380 = vmatpush1.bf16.xpose.msra.mxu0 0
    %2381 = vmatprep.subr.bf16.mxu0 0
    %2382 = vmatpush1.bf16.xpose.msra.mxu0 0
    %2383 = vmatprep.subr.bf16.mxu0 0
    %2384 = vmatpush1.bf16.xpose.msra.mxu0 0
    %2385 = vmatprep.mubr.bf16.mxu0 0
    %2386 = vmatmul.mubr.bf16.gmra.mrb[0].mxu0 %v2348
    %v2387 = vpop.f32.mrb[0].mxu0
    %v2388 = vadd.f32 %v591, %v2387
    %v2389 = vpop.f32.mrb[0].mxu0
    %v2390 = vpop.f32.mrb[0].mxu0
    %v2391 = vpop.f32.mrb[0].mxu0
    %2392 = vdwg.mxu0
    %2393 = vrot.lane.b32.xlu0 %v2056, 96
    %v2394 = vpop.permute.xlu0 %2393
    %v2396 = vsel %vm720, %v2056, 0
    %v2399 = vsel %vm720, %v2394, 0
    %2401 = vmatprep.subr.bf16.mxu0 0
    %2402 = vmatpush1.bf16.xpose.msra.mxu0 %v2399
    %2403 = vmatprep.subr.bf16.mxu0 0
    %2404 = vmatpush1.bf16.xpose.msra.mxu0 0
    %2405 = vmatprep.subr.bf16.mxu0 0
    %2406 = vmatpush1.bf16.xpose.msra.mxu0 0
    %2407 = vmatprep.subr.bf16.mxu0 0
    %2408 = vmatpush1.bf16.xpose.msra.mxu0 0
    %2409 = vmatprep.subr.bf16.mxu0 0
    %2410 = vmatpush1.bf16.xpose.msra.mxu0 0
    %2411 = vmatprep.subr.bf16.mxu0 0
    %2412 = vmatpush1.bf16.xpose.msra.mxu0 0
    %2413 = vmatprep.subr.bf16.mxu0 0
    %2414 = vmatpush1.bf16.xpose.msra.mxu0 0
    %2415 = vmatprep.subr.bf16.mxu0 0
    %2416 = vmatpush1.bf16.xpose.msra.mxu0 0
    %2417 = vmatprep.subr.bf16.mxu0 0
    %2418 = vmatpush1.bf16.xpose.msra.mxu0 0
    %2419 = vmatprep.subr.bf16.mxu0 0
    %2420 = vmatpush1.bf16.xpose.msra.mxu0 0
    %2421 = vmatprep.subr.bf16.mxu0 0
    %2422 = vmatpush1.bf16.xpose.msra.mxu0 0
    %2423 = vmatprep.subr.bf16.mxu0 0
    %2424 = vmatpush1.bf16.xpose.msra.mxu0 0
    %2425 = vmatprep.subr.bf16.mxu0 0
    %2426 = vmatpush1.bf16.xpose.msra.mxu0 0
    %2427 = vmatprep.subr.bf16.mxu0 0
    %2428 = vmatpush1.bf16.xpose.msra.mxu0 0
    %2429 = vmatprep.subr.bf16.mxu0 0
    %2430 = vmatpush1.bf16.xpose.msra.mxu0 0
    %2431 = vmatprep.subr.bf16.mxu0 0
    %2432 = vmatpush1.bf16.xpose.msra.mxu0 0
    %2433 = vmatprep.mubr.bf16.mxu0 0
    %2434 = vmatmul.mubr.bf16.gmra.mrb[0].mxu0 %v2396
    %v2435 = vpop.f32.mrb[0].mxu0
    %v2436 = vadd.f32 %v591, %v2435
    %v2437 = vpop.f32.mrb[0].mxu0
    %v2438 = vpop.f32.mrb[0].mxu0
    %v2439 = vpop.f32.mrb[0].mxu0
    %2440 = vdwg.mxu0
    %v2441 = vsel %vm720, %v2100, -inf
    %2442 = vmax.xlane.f32.xlu0 %v2441
    %v2443 = vpop.xlane.xlu0 %2442
    %v2444 = vsel %vm720, %v2148, -inf
    %2445 = vmax.xlane.f32.xlu0 %v2444
    %v2446 = vpop.xlane.xlu0 %2445
    %v2447 = vsel %vm720, %v2196, -inf
    %2448 = vmax.xlane.f32.xlu0 %v2447
    %v2449 = vpop.xlane.xlu0 %2448
    %v2450 = vsel %vm720, %v2244, -inf
    %2451 = vmax.xlane.f32.xlu0 %v2450
    %v2452 = vpop.xlane.xlu0 %2451
    %v2453 = vsel %vm720, %v2292, -inf
    %2454 = vmax.xlane.f32.xlu0 %v2453
    %v2455 = vpop.xlane.xlu0 %2454
    %v2456 = vsel %vm720, %v2340, -inf
    %2457 = vmax.xlane.f32.xlu0 %v2456
    %v2458 = vpop.xlane.xlu0 %2457
    %v2459 = vsel %vm720, %v2388, -inf
    %2460 = vmax.xlane.f32.xlu0 %v2459
    %v2461 = vpop.xlane.xlu0 %2460
    %v2462 = vsel %vm720, %v2436, -inf
    %2463 = vmax.xlane.f32.xlu0 %v2462
    %v2464 = vpop.xlane.xlu0 %2463
    %v2465 = vsub.f32 %v2100, %v2443
    %v2466 = vsub.f32 %v2148, %v2446
    %v2467 = vsub.f32 %v2196, %v2449
    %v2468 = vsub.f32 %v2244, %v2452
    %v2469 = vsub.f32 %v2292, %v2455
    %v2470 = vsub.f32 %v2340, %v2458
    %v2471 = vsub.f32 %v2388, %v2461
    %v2472 = vsub.f32 %v2436, %v2464
    %v2473 = vmul.f32 %v2465, 1.442695
    %v2474 = vpow.pop %v2473
    %v2475 = vmul.f32 %v2466, 1.442695
    %v2476 = vpow.pop %v2475
    %v2477 = vmul.f32 %v2467, 1.442695
    %v2478 = vpow.pop %v2477
    %v2479 = vmul.f32 %v2468, 1.442695
    %v2480 = vpow.pop %v2479
    %v2481 = vmul.f32 %v2469, 1.442695
    %v2482 = vpow.pop %v2481
    %v2483 = vmul.f32 %v2470, 1.442695
    %v2484 = vpow.pop %v2483
    %v2485 = vmul.f32 %v2471, 1.442695
    %v2486 = vpow.pop %v2485
    %v2487 = vmul.f32 %v2472, 1.442695
    %v2488 = vpow.pop %v2487
    %v2489 = vsel %vm720, %v2474, 0.0
    %2490 = vadd.xlane.f32.xlu0 %v2489
    %v2491 = vpop.xlane.xlu0 %2490
    %v2492 = vsel %vm720, %v2476, 0.0
    %2493 = vadd.xlane.f32.xlu0 %v2492
    %v2494 = vpop.xlane.xlu0 %2493
    %v2495 = vsel %vm720, %v2478, 0.0
    %2496 = vadd.xlane.f32.xlu0 %v2495
    %v2497 = vpop.xlane.xlu0 %2496
    %v2498 = vsel %vm720, %v2480, 0.0
    %2499 = vadd.xlane.f32.xlu0 %v2498
    %v2500 = vpop.xlane.xlu0 %2499
    %v2501 = vsel %vm720, %v2482, 0.0
    %2502 = vadd.xlane.f32.xlu0 %v2501
    %v2503 = vpop.xlane.xlu0 %2502
    %v2504 = vsel %vm720, %v2484, 0.0
    %2505 = vadd.xlane.f32.xlu0 %v2504
    %v2506 = vpop.xlane.xlu0 %2505
    %v2507 = vsel %vm720, %v2486, 0.0
    %2508 = vadd.xlane.f32.xlu0 %v2507
    %v2509 = vpop.xlane.xlu0 %2508
    %v2510 = vsel %vm720, %v2488, 0.0
    %2511 = vadd.xlane.f32.xlu0 %v2510
    %v2512 = vpop.xlane.xlu0 %2511
    %v2513 = vrcp.pop %v2491
    %v2514 = vrcp.pop %v2494
    %v2515 = vrcp.pop %v2497
    %v2516 = vrcp.pop %v2500
    %v2517 = vrcp.pop %v2503
    %v2518 = vrcp.pop %v2506
    %v2519 = vrcp.pop %v2509
    %v2520 = vrcp.pop %v2512
    %v2521 = vmul.f32 %v2474, %v2513
    %v2522 = vmul.f32 %v2476, %v2514
    %v2523 = vmul.f32 %v2478, %v2515
    %v2524 = vmul.f32 %v2480, %v2516
    %v2525 = vmul.f32 %v2482, %v2517
    %v2526 = vmul.f32 %v2484, %v2518
    %v2527 = vmul.f32 %v2486, %v2519
    %v2528 = vmul.f32 %v2488, %v2520
    %v2529 = vpack.c.bf16 %v2521, %v2521
    %v2530 = vpack.c.bf16 %v2522, %v2522
    %v2531 = vpack.c.bf16 %v2523, %v2523
    %v2532 = vpack.c.bf16 %v2524, %v2524
    %v2533 = vpack.c.bf16 %v2525, %v2525
    %v2534 = vpack.c.bf16 %v2526, %v2526
    %v2535 = vpack.c.bf16 %v2527, %v2527
    %v2536 = vpack.c.bf16 %v2528, %v2528
    %2537 = vrot.lane.b32.xlu0 %v2041, 64
    %v2538 = vpop.permute.xlu0 %2537
    %v2540 = vsel %vm720, %v2529, 0
    %v2543 = vsel %vm1204, %v2538, 0
    %2545 = vmatprep.subr.bf16.mxu0 0
    %2546 = vmatpush1.bf16.msra.mxu0 %v2543
    %2547 = vmatprep.subr.bf16.mxu0 0
    %2548 = vmatpush1.bf16.msra.mxu0 0
    %2549 = vmatprep.subr.bf16.mxu0 0
    %2550 = vmatpush1.bf16.msra.mxu0 0
    %2551 = vmatprep.subr.bf16.mxu0 0
    %2552 = vmatpush1.bf16.msra.mxu0 0
    %2553 = vmatprep.subr.bf16.mxu0 0
    %2554 = vmatpush1.bf16.msra.mxu0 0
    %2555 = vmatprep.subr.bf16.mxu0 0
    %2556 = vmatpush1.bf16.msra.mxu0 0
    %2557 = vmatprep.subr.bf16.mxu0 0
    %2558 = vmatpush1.bf16.msra.mxu0 0
    %2559 = vmatprep.subr.bf16.mxu0 0
    %2560 = vmatpush1.bf16.msra.mxu0 0
    %2561 = vmatprep.subr.bf16.mxu0 0
    %2562 = vmatpush1.bf16.msra.mxu0 0
    %2563 = vmatprep.subr.bf16.mxu0 0
    %2564 = vmatpush1.bf16.msra.mxu0 0
    %2565 = vmatprep.subr.bf16.mxu0 0
    %2566 = vmatpush1.bf16.msra.mxu0 0
    %2567 = vmatprep.subr.bf16.mxu0 0
    %2568 = vmatpush1.bf16.msra.mxu0 0
    %2569 = vmatprep.subr.bf16.mxu0 0
    %2570 = vmatpush1.bf16.msra.mxu0 0
    %2571 = vmatprep.subr.bf16.mxu0 0
    %2572 = vmatpush1.bf16.msra.mxu0 0
    %2573 = vmatprep.subr.bf16.mxu0 0
    %2574 = vmatpush1.bf16.msra.mxu0 0
    %2575 = vmatprep.subr.bf16.mxu0 0
    %2576 = vmatpush1.bf16.msra.mxu0 0
    %2577 = vmatprep.mubr.bf16.mxu0 0
    %2578 = vmatmul.mubr.bf16.gmra.mrb[0].mxu0 %v2540
    %v2579 = vpop.f32.mrb[0].mxu0
    %v2580 = vadd.f32 0.0, %v2579
    %v2581 = vpop.f32.mrb[0].mxu0
    %v2582 = vpop.f32.mrb[0].mxu0
    %v2583 = vpop.f32.mrb[0].mxu0
    %2584 = vdwg.mxu0
    %2585 = vrot.lane.b32.xlu0 %v2045, 64
    %v2586 = vpop.permute.xlu0 %2585
    %v2588 = vsel %vm720, %v2530, 0
    %v2591 = vsel %vm1204, %v2586, 0
    %2593 = vmatprep.subr.bf16.mxu0 0
    %2594 = vmatpush1.bf16.msra.mxu0 %v2591
    %2595 = vmatprep.subr.bf16.mxu0 0
    %2596 = vmatpush1.bf16.msra.mxu0 0
    %2597 = vmatprep.subr.bf16.mxu0 0
    %2598 = vmatpush1.bf16.msra.mxu0 0
    %2599 = vmatprep.subr.bf16.mxu0 0
    %2600 = vmatpush1.bf16.msra.mxu0 0
    %2601 = vmatprep.subr.bf16.mxu0 0
    %2602 = vmatpush1.bf16.msra.mxu0 0
    %2603 = vmatprep.subr.bf16.mxu0 0
    %2604 = vmatpush1.bf16.msra.mxu0 0
    %2605 = vmatprep.subr.bf16.mxu0 0
    %2606 = vmatpush1.bf16.msra.mxu0 0
    %2607 = vmatprep.subr.bf16.mxu0 0
    %2608 = vmatpush1.bf16.msra.mxu0 0
    %2609 = vmatprep.subr.bf16.mxu0 0
    %2610 = vmatpush1.bf16.msra.mxu0 0
    %2611 = vmatprep.subr.bf16.mxu0 0
    %2612 = vmatpush1.bf16.msra.mxu0 0
    %2613 = vmatprep.subr.bf16.mxu0 0
    %2614 = vmatpush1.bf16.msra.mxu0 0
    %2615 = vmatprep.subr.bf16.mxu0 0
    %2616 = vmatpush1.bf16.msra.mxu0 0
    %2617 = vmatprep.subr.bf16.mxu0 0
    %2618 = vmatpush1.bf16.msra.mxu0 0
    %2619 = vmatprep.subr.bf16.mxu0 0
    %2620 = vmatpush1.bf16.msra.mxu0 0
    %2621 = vmatprep.subr.bf16.mxu0 0
    %2622 = vmatpush1.bf16.msra.mxu0 0
    %2623 = vmatprep.subr.bf16.mxu0 0
    %2624 = vmatpush1.bf16.msra.mxu0 0
    %2625 = vmatprep.mubr.bf16.mxu0 0
    %2626 = vmatmul.mubr.bf16.gmra.mrb[0].mxu0 %v2588
    %v2627 = vpop.f32.mrb[0].mxu0
    %v2628 = vadd.f32 0.0, %v2627
    %v2629 = vpop.f32.mrb[0].mxu0
    %v2630 = vpop.f32.mrb[0].mxu0
    %v2631 = vpop.f32.mrb[0].mxu0
    %2632 = vdwg.mxu0
    %2633 = vrot.lane.b32.xlu0 %v2047, 64
    %v2634 = vpop.permute.xlu0 %2633
    %v2636 = vsel %vm720, %v2531, 0
    %v2639 = vsel %vm1204, %v2634, 0
    %2641 = vmatprep.subr.bf16.mxu0 0
    %2642 = vmatpush1.bf16.msra.mxu0 %v2639
    %2643 = vmatprep.subr.bf16.mxu0 0
    %2644 = vmatpush1.bf16.msra.mxu0 0
    %2645 = vmatprep.subr.bf16.mxu0 0
    %2646 = vmatpush1.bf16.msra.mxu0 0
    %2647 = vmatprep.subr.bf16.mxu0 0
    %2648 = vmatpush1.bf16.msra.mxu0 0
    %2649 = vmatprep.subr.bf16.mxu0 0
    %2650 = vmatpush1.bf16.msra.mxu0 0
    %2651 = vmatprep.subr.bf16.mxu0 0
    %2652 = vmatpush1.bf16.msra.mxu0 0
    %2653 = vmatprep.subr.bf16.mxu0 0
    %2654 = vmatpush1.bf16.msra.mxu0 0
    %2655 = vmatprep.subr.bf16.mxu0 0
    %2656 = vmatpush1.bf16.msra.mxu0 0
    %2657 = vmatprep.subr.bf16.mxu0 0
    %2658 = vmatpush1.bf16.msra.mxu0 0
    %2659 = vmatprep.subr.bf16.mxu0 0
    %2660 = vmatpush1.bf16.msra.mxu0 0
    %2661 = vmatprep.subr.bf16.mxu0 0
    %2662 = vmatpush1.bf16.msra.mxu0 0
    %2663 = vmatprep.subr.bf16.mxu0 0
    %2664 = vmatpush1.bf16.msra.mxu0 0
    %2665 = vmatprep.subr.bf16.mxu0 0
    %2666 = vmatpush1.bf16.msra.mxu0 0
    %2667 = vmatprep.subr.bf16.mxu0 0
    %2668 = vmatpush1.bf16.msra.mxu0 0
    %2669 = vmatprep.subr.bf16.mxu0 0
    %2670 = vmatpush1.bf16.msra.mxu0 0
    %2671 = vmatprep.subr.bf16.mxu0 0
    %2672 = vmatpush1.bf16.msra.mxu0 0
    %2673 = vmatprep.mubr.bf16.mxu0 0
    %2674 = vmatmul.mubr.bf16.gmra.mrb[0].mxu0 %v2636
    %v2675 = vpop.f32.mrb[0].mxu0
    %v2676 = vadd.f32 0.0, %v2675
    %v2677 = vpop.f32.mrb[0].mxu0
    %v2678 = vpop.f32.mrb[0].mxu0
    %v2679 = vpop.f32.mrb[0].mxu0
    %2680 = vdwg.mxu0
    %2681 = vrot.lane.b32.xlu0 %v2049, 64
    %v2682 = vpop.permute.xlu0 %2681
    %v2684 = vsel %vm720, %v2532, 0
    %v2687 = vsel %vm1204, %v2682, 0
    %2689 = vmatprep.subr.bf16.mxu0 0
    %2690 = vmatpush1.bf16.msra.mxu0 %v2687
    %2691 = vmatprep.subr.bf16.mxu0 0
    %2692 = vmatpush1.bf16.msra.mxu0 0
    %2693 = vmatprep.subr.bf16.mxu0 0
    %2694 = vmatpush1.bf16.msra.mxu0 0
    %2695 = vmatprep.subr.bf16.mxu0 0
    %2696 = vmatpush1.bf16.msra.mxu0 0
    %2697 = vmatprep.subr.bf16.mxu0 0
    %2698 = vmatpush1.bf16.msra.mxu0 0
    %2699 = vmatprep.subr.bf16.mxu0 0
    %2700 = vmatpush1.bf16.msra.mxu0 0
    %2701 = vmatprep.subr.bf16.mxu0 0
    %2702 = vmatpush1.bf16.msra.mxu0 0
    %2703 = vmatprep.subr.bf16.mxu0 0
    %2704 = vmatpush1.bf16.msra.mxu0 0
    %2705 = vmatprep.subr.bf16.mxu0 0
    %2706 = vmatpush1.bf16.msra.mxu0 0
    %2707 = vmatprep.subr.bf16.mxu0 0
    %2708 = vmatpush1.bf16.msra.mxu0 0
    %2709 = vmatprep.subr.bf16.mxu0 0
    %2710 = vmatpush1.bf16.msra.mxu0 0
    %2711 = vmatprep.subr.bf16.mxu0 0
    %2712 = vmatpush1.bf16.msra.mxu0 0
    %2713 = vmatprep.subr.bf16.mxu0 0
    %2714 = vmatpush1.bf16.msra.mxu0 0
    %2715 = vmatprep.subr.bf16.mxu0 0
    %2716 = vmatpush1.bf16.msra.mxu0 0
    %2717 = vmatprep.subr.bf16.mxu0 0
    %2718 = vmatpush1.bf16.msra.mxu0 0
    %2719 = vmatprep.subr.bf16.mxu0 0
    %2720 = vmatpush1.bf16.msra.mxu0 0
    %2721 = vmatprep.mubr.bf16.mxu0 0
    %2722 = vmatmul.mubr.bf16.gmra.mrb[0].mxu0 %v2684
    %v2723 = vpop.f32.mrb[0].mxu0
    %v2724 = vadd.f32 0.0, %v2723
    %v2725 = vpop.f32.mrb[0].mxu0
    %v2726 = vpop.f32.mrb[0].mxu0
    %v2727 = vpop.f32.mrb[0].mxu0
    %2728 = vdwg.mxu0
    %2729 = vrot.lane.b32.xlu0 %v2042, 64
    %v2730 = vpop.permute.xlu0 %2729
    %v2732 = vsel %vm720, %v2533, 0
    %v2735 = vsel %vm1204, %v2730, 0
    %2737 = vmatprep.subr.bf16.mxu0 0
    %2738 = vmatpush1.bf16.msra.mxu0 %v2735
    %2739 = vmatprep.subr.bf16.mxu0 0
    %2740 = vmatpush1.bf16.msra.mxu0 0
    %2741 = vmatprep.subr.bf16.mxu0 0
    %2742 = vmatpush1.bf16.msra.mxu0 0
    %2743 = vmatprep.subr.bf16.mxu0 0
    %2744 = vmatpush1.bf16.msra.mxu0 0
    %2745 = vmatprep.subr.bf16.mxu0 0
    %2746 = vmatpush1.bf16.msra.mxu0 0
    %2747 = vmatprep.subr.bf16.mxu0 0
    %2748 = vmatpush1.bf16.msra.mxu0 0
    %2749 = vmatprep.subr.bf16.mxu0 0
    %2750 = vmatpush1.bf16.msra.mxu0 0
    %2751 = vmatprep.subr.bf16.mxu0 0
    %2752 = vmatpush1.bf16.msra.mxu0 0
    %2753 = vmatprep.subr.bf16.mxu0 0
    %2754 = vmatpush1.bf16.msra.mxu0 0
    %2755 = vmatprep.subr.bf16.mxu0 0
    %2756 = vmatpush1.bf16.msra.mxu0 0
    %2757 = vmatprep.subr.bf16.mxu0 0
    %2758 = vmatpush1.bf16.msra.mxu0 0
    %2759 = vmatprep.subr.bf16.mxu0 0
    %2760 = vmatpush1.bf16.msra.mxu0 0
    %2761 = vmatprep.subr.bf16.mxu0 0
    %2762 = vmatpush1.bf16.msra.mxu0 0
    %2763 = vmatprep.subr.bf16.mxu0 0
    %2764 = vmatpush1.bf16.msra.mxu0 0
    %2765 = vmatprep.subr.bf16.mxu0 0
    %2766 = vmatpush1.bf16.msra.mxu0 0
    %2767 = vmatprep.subr.bf16.mxu0 0
    %2768 = vmatpush1.bf16.msra.mxu0 0
    %2769 = vmatprep.mubr.bf16.mxu0 0
    %2770 = vmatmul.mubr.bf16.gmra.mrb[0].mxu0 %v2732
    %v2771 = vpop.f32.mrb[0].mxu0
    %v2772 = vadd.f32 0.0, %v2771
    %v2773 = vpop.f32.mrb[0].mxu0
    %v2774 = vpop.f32.mrb[0].mxu0
    %v2775 = vpop.f32.mrb[0].mxu0
    %2776 = vdwg.mxu0
    %2777 = vrot.lane.b32.xlu0 %v2052, 64
    %v2778 = vpop.permute.xlu0 %2777
    %v2780 = vsel %vm720, %v2534, 0
    %v2783 = vsel %vm1204, %v2778, 0
    %2785 = vmatprep.subr.bf16.mxu0 0
    %2786 = vmatpush1.bf16.msra.mxu0 %v2783
    %2787 = vmatprep.subr.bf16.mxu0 0
    %2788 = vmatpush1.bf16.msra.mxu0 0
    %2789 = vmatprep.subr.bf16.mxu0 0
    %2790 = vmatpush1.bf16.msra.mxu0 0
    %2791 = vmatprep.subr.bf16.mxu0 0
    %2792 = vmatpush1.bf16.msra.mxu0 0
    %2793 = vmatprep.subr.bf16.mxu0 0
    %2794 = vmatpush1.bf16.msra.mxu0 0
    %2795 = vmatprep.subr.bf16.mxu0 0
    %2796 = vmatpush1.bf16.msra.mxu0 0
    %2797 = vmatprep.subr.bf16.mxu0 0
    %2798 = vmatpush1.bf16.msra.mxu0 0
    %2799 = vmatprep.subr.bf16.mxu0 0
    %2800 = vmatpush1.bf16.msra.mxu0 0
    %2801 = vmatprep.subr.bf16.mxu0 0
    %2802 = vmatpush1.bf16.msra.mxu0 0
    %2803 = vmatprep.subr.bf16.mxu0 0
    %2804 = vmatpush1.bf16.msra.mxu0 0
    %2805 = vmatprep.subr.bf16.mxu0 0
    %2806 = vmatpush1.bf16.msra.mxu0 0
    %2807 = vmatprep.subr.bf16.mxu0 0
    %2808 = vmatpush1.bf16.msra.mxu0 0
    %2809 = vmatprep.subr.bf16.mxu0 0
    %2810 = vmatpush1.bf16.msra.mxu0 0
    %2811 = vmatprep.subr.bf16.mxu0 0
    %2812 = vmatpush1.bf16.msra.mxu0 0
    %2813 = vmatprep.subr.bf16.mxu0 0
    %2814 = vmatpush1.bf16.msra.mxu0 0
    %2815 = vmatprep.subr.bf16.mxu0 0
    %2816 = vmatpush1.bf16.msra.mxu0 0
    %2817 = vmatprep.mubr.bf16.mxu0 0
    %2818 = vmatmul.mubr.bf16.gmra.mrb[0].mxu0 %v2780
    %v2819 = vpop.f32.mrb[0].mxu0
    %v2820 = vadd.f32 0.0, %v2819
    %v2821 = vpop.f32.mrb[0].mxu0
    %v2822 = vpop.f32.mrb[0].mxu0
    %v2823 = vpop.f32.mrb[0].mxu0
    %2824 = vdwg.mxu0
    %2825 = vrot.lane.b32.xlu0 %v2054, 64
    %v2826 = vpop.permute.xlu0 %2825
    %v2828 = vsel %vm720, %v2535, 0
    %v2831 = vsel %vm1204, %v2826, 0
    %2833 = vmatprep.subr.bf16.mxu0 0
    %2834 = vmatpush1.bf16.msra.mxu0 %v2831
    %2835 = vmatprep.subr.bf16.mxu0 0
    %2836 = vmatpush1.bf16.msra.mxu0 0
    %2837 = vmatprep.subr.bf16.mxu0 0
    %2838 = vmatpush1.bf16.msra.mxu0 0
    %2839 = vmatprep.subr.bf16.mxu0 0
    %2840 = vmatpush1.bf16.msra.mxu0 0
    %2841 = vmatprep.subr.bf16.mxu0 0
    %2842 = vmatpush1.bf16.msra.mxu0 0
    %2843 = vmatprep.subr.bf16.mxu0 0
    %2844 = vmatpush1.bf16.msra.mxu0 0
    %2845 = vmatprep.subr.bf16.mxu0 0
    %2846 = vmatpush1.bf16.msra.mxu0 0
    %2847 = vmatprep.subr.bf16.mxu0 0
    %2848 = vmatpush1.bf16.msra.mxu0 0
    %2849 = vmatprep.subr.bf16.mxu0 0
    %2850 = vmatpush1.bf16.msra.mxu0 0
    %2851 = vmatprep.subr.bf16.mxu0 0
    %2852 = vmatpush1.bf16.msra.mxu0 0
    %2853 = vmatprep.subr.bf16.mxu0 0
    %2854 = vmatpush1.bf16.msra.mxu0 0
    %2855 = vmatprep.subr.bf16.mxu0 0
    %2856 = vmatpush1.bf16.msra.mxu0 0
    %2857 = vmatprep.subr.bf16.mxu0 0
    %2858 = vmatpush1.bf16.msra.mxu0 0
    %2859 = vmatprep.subr.bf16.mxu0 0
    %2860 = vmatpush1.bf16.msra.mxu0 0
    %2861 = vmatprep.subr.bf16.mxu0 0
    %2862 = vmatpush1.bf16.msra.mxu0 0
    %2863 = vmatprep.subr.bf16.mxu0 0
    %2864 = vmatpush1.bf16.msra.mxu0 0
    %2865 = vmatprep.mubr.bf16.mxu0 0
    %2866 = vmatmul.mubr.bf16.gmra.mrb[0].mxu0 %v2828
    %v2867 = vpop.f32.mrb[0].mxu0
    %v2868 = vadd.f32 0.0, %v2867
    %v2869 = vpop.f32.mrb[0].mxu0
    %v2870 = vpop.f32.mrb[0].mxu0
    %v2871 = vpop.f32.mrb[0].mxu0
    %2872 = vdwg.mxu0
    %2873 = vrot.lane.b32.xlu0 %v2056, 64
    %v2874 = vpop.permute.xlu0 %2873
    %v2876 = vsel %vm720, %v2536, 0
    %v2879 = vsel %vm1204, %v2874, 0
    %2881 = vmatprep.subr.bf16.mxu0 0
    %2882 = vmatpush1.bf16.msra.mxu0 %v2879
    %2883 = vmatprep.subr.bf16.mxu0 0
    %2884 = vmatpush1.bf16.msra.mxu0 0
    %2885 = vmatprep.subr.bf16.mxu0 0
    %2886 = vmatpush1.bf16.msra.mxu0 0
    %2887 = vmatprep.subr.bf16.mxu0 0
    %2888 = vmatpush1.bf16.msra.mxu0 0
    %2889 = vmatprep.subr.bf16.mxu0 0
    %2890 = vmatpush1.bf16.msra.mxu0 0
    %2891 = vmatprep.subr.bf16.mxu0 0
    %2892 = vmatpush1.bf16.msra.mxu0 0
    %2893 = vmatprep.subr.bf16.mxu0 0
    %2894 = vmatpush1.bf16.msra.mxu0 0
    %2895 = vmatprep.subr.bf16.mxu0 0
    %2896 = vmatpush1.bf16.msra.mxu0 0
    %2897 = vmatprep.subr.bf16.mxu0 0
    %2898 = vmatpush1.bf16.msra.mxu0 0
    %2899 = vmatprep.subr.bf16.mxu0 0
    %2900 = vmatpush1.bf16.msra.mxu0 0
    %2901 = vmatprep.subr.bf16.mxu0 0
    %2902 = vmatpush1.bf16.msra.mxu0 0
    %2903 = vmatprep.subr.bf16.mxu0 0
    %2904 = vmatpush1.bf16.msra.mxu0 0
    %2905 = vmatprep.subr.bf16.mxu0 0
    %2906 = vmatpush1.bf16.msra.mxu0 0
    %2907 = vmatprep.subr.bf16.mxu0 0
    %2908 = vmatpush1.bf16.msra.mxu0 0
    %2909 = vmatprep.subr.bf16.mxu0 0
    %2910 = vmatpush1.bf16.msra.mxu0 0
    %2911 = vmatprep.subr.bf16.mxu0 0
    %2912 = vmatpush1.bf16.msra.mxu0 0
    %2913 = vmatprep.mubr.bf16.mxu0 0
    %2914 = vmatmul.mubr.bf16.gmra.mrb[0].mxu0 %v2876
    %v2915 = vpop.f32.mrb[0].mxu0
    %v2916 = vadd.f32 0.0, %v2915
    %v2917 = vpop.f32.mrb[0].mxu0
    %v2918 = vpop.f32.mrb[0].mxu0
    %v2919 = vpop.f32.mrb[0].mxu0
    %2920 = vdwg.mxu0
    %2922 = vrot.lane.b32.xlu0 %v2628, 8
    %v2923 = vpop.permute.xlu0 %2922
    %2926 = vrot.lane.b32.xlu0 %v2676, 16
    %v2927 = vpop.permute.xlu0 %2926
    %2930 = vrot.lane.b32.xlu0 %v2724, 24
    %v2931 = vpop.permute.xlu0 %2930
    %v2933 = vsel %vm720, %v2580, %v2923
    %v2934 = vsel %vm1597, %v2933, %v2927
    %v2935 = vsel %vm1599, %v2934, %v2931
    %2937 = vrot.lane.b32.xlu0 %v2820, 8
    %v2938 = vpop.permute.xlu0 %2937
    %2941 = vrot.lane.b32.xlu0 %v2868, 16
    %v2942 = vpop.permute.xlu0 %2941
    %2945 = vrot.lane.b32.xlu0 %v2916, 24
    %v2946 = vpop.permute.xlu0 %2945
    %v2948 = vsel %vm720, %v2772, %v2938
    %v2949 = vsel %vm1597, %v2948, %v2942
    %v2950 = vsel %vm1599, %v2949, %v2946
    %s2951 = scalar_lea.vmem %s5, 16
    %v2952 = vld [vmem:[%s2951] sm:$0xf]
    %v2953 = vld [vmem:[%s2951 + $0x4] sm:$0xf]
    %v2954 = vld [vmem:[%s2951 + $0x8] sm:$0xf]
    %v2955 = vld [vmem:[%s2951 + $0xc] sm:$0xf]
    %v2956 = vpack.c.bf16 %v2950, %v2935
    %v2961 = vunpack.c.l.b16 %v2952
    %v2962 = vunpack.c.l.b16 %v2953
    %v2963 = vunpack.c.l.b16 %v2954
    %v2964 = vunpack.c.l.b16 %v2955
    %v2965 = vpack.c.b16 %v2962, %v2961
    %v2966 = vpack.c.b16 %v2964, %v2963
    %v2970 = vsel %vm594, %v2956, 0
    %2972 = vmatprep.subr.bf16.mxu0 0
    %2973 = vmatpush1.bf16.msra.mxu0 %v2965
    %2974 = vmatprep.subr.bf16.mxu0 0
    %2975 = vmatpush1.bf16.msra.mxu0 %v2966
    %2976 = vmatprep.subr.bf16.mxu0 0
    %2977 = vmatpush1.bf16.msra.mxu0 0
    %2978 = vmatprep.subr.bf16.mxu0 0
    %2979 = vmatpush1.bf16.msra.mxu0 0
    %2980 = vmatprep.subr.bf16.mxu0 0
    %2981 = vmatpush1.bf16.msra.mxu0 0
    %2982 = vmatprep.subr.bf16.mxu0 0
    %2983 = vmatpush1.bf16.msra.mxu0 0
    %2984 = vmatprep.subr.bf16.mxu0 0
    %2985 = vmatpush1.bf16.msra.mxu0 0
    %2986 = vmatprep.subr.bf16.mxu0 0
    %2987 = vmatpush1.bf16.msra.mxu0 0
    %2988 = vmatprep.subr.bf16.mxu0 0
    %2989 = vmatpush1.bf16.msra.mxu0 0
    %2990 = vmatprep.subr.bf16.mxu0 0
    %2991 = vmatpush1.bf16.msra.mxu0 0
    %2992 = vmatprep.subr.bf16.mxu0 0
    %2993 = vmatpush1.bf16.msra.mxu0 0
    %2994 = vmatprep.subr.bf16.mxu0 0
    %2995 = vmatpush1.bf16.msra.mxu0 0
    %2996 = vmatprep.subr.bf16.mxu0 0
    %2997 = vmatpush1.bf16.msra.mxu0 0
    %2998 = vmatprep.subr.bf16.mxu0 0
    %2999 = vmatpush1.bf16.msra.mxu0 0
    %3000 = vmatprep.subr.bf16.mxu0 0
    %3001 = vmatpush1.bf16.msra.mxu0 0
    %3002 = vmatprep.subr.bf16.mxu0 0
    %3003 = vmatpush1.bf16.msra.mxu0 0
    %3004 = vmatprep.mubr.bf16.mxu0 0
    %3005 = vmatmul.mubr.bf16.gmra.mrb[0].mxu0 %v2970
    %v3006 = vpop.f32.mrb[0].mxu0
    %v3007 = vadd.f32 0.0, %v3006
    %v3008 = vpop.f32.mrb[0].mxu0
    %v3009 = vpop.f32.mrb[0].mxu0
    %v3010 = vadd.f32 0.0, %v3009
    %v3011 = vpop.f32.mrb[0].mxu0
    %3012 = vdwg.mxu0
    %v3013 = vadd.f32 %v1929, %v3007
    %v3014 = vadd.f32 %v1930, %v3010
    %s3015 = scalar_lea.vmem %s9, 1
    %v3016 = vld [vmem:[%s3015] sm:$0x1]
    %v3018 = vlaneseq
    %v3019 = vshrl.u32 %v3018, 7
    %v3020 = vsub.s32 0, %v3019
    %v3021 = vrot.slane %v3016, %v3020
    %v3023 = vadd.f32 %v3013, %v3021
    %v3024 = vadd.f32 %v3014, %v3021
    %v3025 = vld [vmem:[%s3 + $0x6] sm:$0x1]
    %v3026 = vld [vmem:[%s3 + $0x7] sm:$0x1]
    %v3027 = vsel %vm594, %v3023, 0.0
    %3028 = vadd.xlane.f32.xlu0 %v3027
    %v3029 = vpop.xlane.xlu0 %3028
    %v3030 = vsel %vm594, %v3024, 0.0
    %3031 = vadd.xlane.f32.xlu0 %v3030
    %v3032 = vpop.xlane.xlu0 %3031
    %v3033 = vmul.f32 %v3029, %v601
    %v3034 = vmul.f32 %v3032, %v601
    %v3035 = vsub.f32 %v3023, %v3033
    %v3036 = vsub.f32 %v3024, %v3034
    %v3037 = vmul.f32 %v3035, %v3035
    %v3038 = vmul.f32 %v3036, %v3036
    %v3039 = vsel %vm594, %v3037, 0.0
    %3040 = vadd.xlane.f32.xlu0 %v3039
    %v3041 = vpop.xlane.xlu0 %3040
    %v3042 = vsel %vm594, %v3038, 0.0
    %3043 = vadd.xlane.f32.xlu0 %v3042
    %v3044 = vpop.xlane.xlu0 %3043
    %v3045 = vmul.f32 %v3041, %v601
    %v3046 = vmul.f32 %v3044, %v601
    %v3047 = vadd.f32 %v3045, 1e-06
    %v3048 = vadd.f32 %v3046, 1e-06
    %v3049 = vrsqrt.pop %v3047
    %v3050 = vrsqrt.pop %v3048
    %v3051 = vmul.f32 %v3035, %v3049
    %v3052 = vmul.f32 %v3036, %v3050
    %v3053 = vlaneseq
    %v3054 = vshrl.u32 %v3053, 7
    %v3055 = vsub.s32 0, %v3054
    %v3056 = vrot.slane %v3025, %v3055
    %v3057 = vmul.f32 %v3051, %v3056
    %v3058 = vmul.f32 %v3052, %v3056
    %v3059 = vlaneseq
    %v3060 = vshrl.u32 %v3059, 7
    %v3061 = vsub.s32 0, %v3060
    %v3062 = vrot.slane %v3026, %v3061
    %v3063 = vadd.f32 %v3057, %v3062
    %v3064 = vadd.f32 %v3058, %v3062
    %s3065 = scalar_lea.vmem %s6, 16
    %v3066 = vld [vmem:[%s3065] sm:$0xf]
    %v3067 = vld [vmem:[%s3065 + $0x4] sm:$0xf]
    %v3068 = vld [vmem:[%s3065 + $0x8] sm:$0xf]
    %v3069 = vld [vmem:[%s3065 + $0xc] sm:$0xf]
    %v3070 = vpack.c.bf16 %v3064, %v3063
    %s3071 = scalar_lea.vmem %s10, 1
    %v3072 = vld [vmem:[%s3071] sm:$0x1]
    %v3074 = vlaneseq
    %v3075 = vshrl.u32 %v3074, 7
    %v3076 = vsub.s32 0, %v3075
    %v3077 = vrot.slane %v3072, %v3076
    %v3083 = vunpack.c.l.b16 %v3066
    %v3084 = vunpack.c.l.b16 %v3067
    %v3085 = vunpack.c.l.b16 %v3068
    %v3086 = vunpack.c.l.b16 %v3069
    %v3087 = vpack.c.b16 %v3084, %v3083
    %v3088 = vpack.c.b16 %v3086, %v3085
    %v3092 = vsel %vm594, %v3070, 0
    %3094 = vmatprep.subr.bf16.mxu0 0
    %3095 = vmatpush1.bf16.msra.mxu0 %v3087
    %3096 = vmatprep.subr.bf16.mxu0 0
    %3097 = vmatpush1.bf16.msra.mxu0 %v3088
    %3098 = vmatprep.subr.bf16.mxu0 0
    %3099 = vmatpush1.bf16.msra.mxu0 0
    %3100 = vmatprep.subr.bf16.mxu0 0
    %3101 = vmatpush1.bf16.msra.mxu0 0
    %3102 = vmatprep.subr.bf16.mxu0 0
    %3103 = vmatpush1.bf16.msra.mxu0 0
    %3104 = vmatprep.subr.bf16.mxu0 0
    %3105 = vmatpush1.bf16.msra.mxu0 0
    %3106 = vmatprep.subr.bf16.mxu0 0
    %3107 = vmatpush1.bf16.msra.mxu0 0
    %3108 = vmatprep.subr.bf16.mxu0 0
    %3109 = vmatpush1.bf16.msra.mxu0 0
    %3110 = vmatprep.subr.bf16.mxu0 0
    %3111 = vmatpush1.bf16.msra.mxu0 0
    %3112 = vmatprep.subr.bf16.mxu0 0
    %3113 = vmatpush1.bf16.msra.mxu0 0
    %3114 = vmatprep.subr.bf16.mxu0 0
    %3115 = vmatpush1.bf16.msra.mxu0 0
    %3116 = vmatprep.subr.bf16.mxu0 0
    %3117 = vmatpush1.bf16.msra.mxu0 0
    %3118 = vmatprep.subr.bf16.mxu0 0
    %3119 = vmatpush1.bf16.msra.mxu0 0
    %3120 = vmatprep.subr.bf16.mxu0 0
    %3121 = vmatpush1.bf16.msra.mxu0 0
    %3122 = vmatprep.subr.bf16.mxu0 0
    %3123 = vmatpush1.bf16.msra.mxu0 0
    %3124 = vmatprep.subr.bf16.mxu0 0
    %3125 = vmatpush1.bf16.msra.mxu0 0
    %3126 = vmatprep.mubr.bf16.mxu0 0
    %3127 = vmatmul.mubr.bf16.gmra.mrb[0].mxu0 %v3092
    %v3128 = vpop.f32.mrb[0].mxu0
    %v3129 = vadd.f32 %v3077, %v3128
    %v3130 = vpop.f32.mrb[0].mxu0
    %v3131 = vpop.f32.mrb[0].mxu0
    %v3132 = vadd.f32 %v3077, %v3131
    %v3133 = vpop.f32.mrb[0].mxu0
    %3134 = vdwg.mxu0
    %v3135 = vmul.f32 %v3129, 0.5
    %v3136 = vmul.f32 %v3132, 0.5
    %v3137 = vmul.f32 %v3129, 0.044715
    %v3138 = vmul.f32 %v3132, 0.044715
    %v3139 = vmul.f32 %v3137, %v3129
    %v3140 = vmul.f32 %v3138, %v3132
    %v3141 = vmul.f32 %v3139, %v3129
    %v3142 = vmul.f32 %v3140, %v3132
    %v3143 = vadd.f32 %v3129, %v3141
    %v3144 = vadd.f32 %v3132, %v3142
    %v3145 = vmul.f32 %v3143, 0.7978846
    %v3146 = vmul.f32 %v3144, 0.7978846
    %v3147 = vtanh.pop %v3145
    %v3148 = vtanh.pop %v3146
    %v3149 = vadd.f32 %v3147, 1.0
    %v3150 = vadd.f32 %v3148, 1.0
    %v3151 = vmul.f32 %v3135, %v3149
    %v3152 = vmul.f32 %v3136, %v3150
    %s3153 = scalar_lea.vmem %s7, 64
    %v3154 = vld [vmem:[%s3153] sm:$0xf]
    %v3155 = vld [vmem:[%s3153 + $0x4] sm:$0xf]
    %v3156 = vld [vmem:[%s3153 + $0x8] sm:$0xf]
    %v3157 = vld [vmem:[%s3153 + $0xc] sm:$0xf]
    %v3158 = vld [vmem:[%s3153 + $0x10] sm:$0xf]
    %v3159 = vld [vmem:[%s3153 + $0x14] sm:$0xf]
    %v3160 = vld [vmem:[%s3153 + $0x18] sm:$0xf]
    %v3161 = vld [vmem:[%s3153 + $0x1c] sm:$0xf]
    %v3162 = vld [vmem:[%s3153 + $0x20] sm:$0xf]
    %v3163 = vld [vmem:[%s3153 + $0x24] sm:$0xf]
    %v3164 = vld [vmem:[%s3153 + $0x28] sm:$0xf]
    %v3165 = vld [vmem:[%s3153 + $0x2c] sm:$0xf]
    %v3166 = vld [vmem:[%s3153 + $0x30] sm:$0xf]
    %v3167 = vld [vmem:[%s3153 + $0x34] sm:$0xf]
    %v3168 = vld [vmem:[%s3153 + $0x38] sm:$0xf]
    %v3169 = vld [vmem:[%s3153 + $0x3c] sm:$0xf]
    %v3170 = vpack.c.bf16 %v3152, %v3151
    %v3187 = vunpack.c.l.b16 %v3154
    %v3188 = vunpack.c.l.b16 %v3155
    %v3189 = vunpack.c.l.b16 %v3156
    %v3190 = vunpack.c.l.b16 %v3157
    %v3191 = vunpack.c.l.b16 %v3158
    %v3192 = vunpack.c.l.b16 %v3159
    %v3193 = vunpack.c.l.b16 %v3160
    %v3194 = vunpack.c.l.b16 %v3161
    %v3195 = vunpack.c.l.b16 %v3162
    %v3196 = vunpack.c.l.b16 %v3163
    %v3197 = vunpack.c.l.b16 %v3164
    %v3198 = vunpack.c.l.b16 %v3165
    %v3199 = vunpack.c.l.b16 %v3166
    %v3200 = vunpack.c.l.b16 %v3167
    %v3201 = vunpack.c.l.b16 %v3168
    %v3202 = vunpack.c.l.b16 %v3169
    %v3203 = vpack.c.b16 %v3188, %v3187
    %v3204 = vpack.c.b16 %v3190, %v3189
    %v3205 = vpack.c.b16 %v3192, %v3191
    %v3206 = vpack.c.b16 %v3194, %v3193
    %v3207 = vpack.c.b16 %v3196, %v3195
    %v3208 = vpack.c.b16 %v3198, %v3197
    %v3209 = vpack.c.b16 %v3200, %v3199
    %v3210 = vpack.c.b16 %v3202, %v3201
    %3219 = vmatprep.subr.bf16.mxu0 0
    %3220 = vmatpush1.bf16.msra.mxu0 %v3203
    %3221 = vmatprep.subr.bf16.mxu0 0
    %3222 = vmatpush1.bf16.msra.mxu0 %v3204
    %3223 = vmatprep.subr.bf16.mxu0 0
    %3224 = vmatpush1.bf16.msra.mxu0 %v3205
    %3225 = vmatprep.subr.bf16.mxu0 0
    %3226 = vmatpush1.bf16.msra.mxu0 %v3206
    %3227 = vmatprep.subr.bf16.mxu0 0
    %3228 = vmatpush1.bf16.msra.mxu0 %v3207
    %3229 = vmatprep.subr.bf16.mxu0 0
    %3230 = vmatpush1.bf16.msra.mxu0 %v3208
    %3231 = vmatprep.subr.bf16.mxu0 0
    %3232 = vmatpush1.bf16.msra.mxu0 %v3209
    %3233 = vmatprep.subr.bf16.mxu0 0
    %3234 = vmatpush1.bf16.msra.mxu0 %v3210
    %3235 = vmatprep.subr.bf16.mxu0 0
    %3236 = vmatpush1.bf16.msra.mxu0 0
    %3237 = vmatprep.subr.bf16.mxu0 0
    %3238 = vmatpush1.bf16.msra.mxu0 0
    %3239 = vmatprep.subr.bf16.mxu0 0
    %3240 = vmatpush1.bf16.msra.mxu0 0
    %3241 = vmatprep.subr.bf16.mxu0 0
    %3242 = vmatpush1.bf16.msra.mxu0 0
    %3243 = vmatprep.subr.bf16.mxu0 0
    %3244 = vmatpush1.bf16.msra.mxu0 0
    %3245 = vmatprep.subr.bf16.mxu0 0
    %3246 = vmatpush1.bf16.msra.mxu0 0
    %3247 = vmatprep.subr.bf16.mxu0 0
    %3248 = vmatpush1.bf16.msra.mxu0 0
    %3249 = vmatprep.subr.bf16.mxu0 0
    %3250 = vmatpush1.bf16.msra.mxu0 0
    %3251 = vmatprep.mubr.bf16.mxu0 0
    %3252 = vmatmul.mubr.bf16.gmra.mrb[0].mxu0 %v3170
    %v3253 = vpop.f32.mrb[0].mxu0
    %v3254 = vadd.f32 0.0, %v3253
    %v3255 = vpop.f32.mrb[0].mxu0
    %v3256 = vpop.f32.mrb[0].mxu0
    %v3257 = vadd.f32 0.0, %v3256
    %v3258 = vpop.f32.mrb[0].mxu0
    %3259 = vdwg.mxu0
    %v3260 = vadd.f32 %v3023, %v3254
    %v3261 = vadd.f32 %v3024, %v3257
    %s3262 = scalar_lea.vmem %s11, 1
    %v3263 = vld [vmem:[%s3262] sm:$0x1]
    %v3265 = vlaneseq
    %v3266 = vshrl.u32 %v3265, 7
    %v3267 = vsub.s32 0, %v3266
    %v3268 = vrot.slane %v3263, %v3267
    %v3270 = vadd.f32 %v3260, %v3268
    %v3271 = vadd.f32 %v3261, %v3268
    %v3273 = vrot.slane %v3271, 7
    %vm3275 = vcmask 1040384
    %v3276 = vsel %vm3275, %v3270, %v3273
    %v3277 = vld [vmem:[%s3 + $0x8] sm:$0x1]
    %v3278 = vld [vmem:[%s3 + $0x9] sm:$0x1]
    %vm3279 = vcmask 254976
    %v3280 = vsel %vm3279, %v3276, 0.0
    %3281 = vadd.xlane.f32.xlu0 %v3280
    %v3282 = vpop.xlane.xlu0 %3281
    %v3283 = vmul.f32 %v3282, %v601
    %v3284 = vsub.f32 %v3276, %v3283
    %v3285 = vmul.f32 %v3284, %v3284
    %v3286 = vsel %vm3279, %v3285, 0.0
    %3287 = vadd.xlane.f32.xlu0 %v3286
    %v3288 = vpop.xlane.xlu0 %3287
    %v3289 = vmul.f32 %v3288, %v601
    %v3290 = vadd.f32 %v3289, 1e-06
    %v3291 = vrsqrt.pop %v3290
    %v3292 = vmul.f32 %v3284, %v3291
    %v3293 = vlaneseq
    %v3294 = vshrl.u32 %v3293, 7
    %v3295 = vsub.s32 0, %v3294
    %v3296 = vrot.slane %v3277, %v3295
    %v3297 = vmul.f32 %v3292, %v3296
    %v3298 = vlaneseq
    %v3299 = vshrl.u32 %v3298, 7
    %v3300 = vsub.s32 0, %v3299
    %v3301 = vrot.slane %v3278, %v3300
    %v3302 = vadd.f32 %v3297, %v3301
    %3303 = vst.msk [vmem:[#allocation2] sm:$0x3] %vm3279, %v3302
    // Predicated region
    $region50: #{cached_vision_model_forward.1} parent=1 // pred_check
      _
    $region51: #{cached_vision_model_forward.1} parent=1 // pred_check_branch
      %3305 = sbr.rel (0) target = $region53
    $region52: #{cached_vision_model_forward.1} parent=1 // pred_region
      %s3307 = ssub.s32 32, 32
      %3308 = vsyncadd [#allocation3], %s3307
      %s3310 = sshll.u32 [#allocation2], 4
      %s3311 = int_to_ptr.vmem [resolvable:$true] %s3310
      %3313 = dma.vmem_to_hbm [thread:$0]  %s3311, 32, %s12, [#allocation3]
    $region53: #{cached_vision_model_forward.1} parent=1 // pred_fallthru
      _
    // Predicated region
    $region54: #{cached_vision_model_forward.1} parent=1 // pred_check
      _
    $region55: #{cached_vision_model_forward.1} parent=1 // pred_check_branch
      %3315 = sbr.rel (0) target = $region57
    $region56: #{cached_vision_model_forward.1} parent=1 // pred_region
      %3316 = dma.done [#allocation3], 32
    $region57: #{cached_vision_model_forward.1} parent=1 // pred_fallthru
      _
    %3317 = vsyncpa [#allocation3], 1

</llo_original>
